<compile_context>
chip_gen: v7x
topology: tpu7x:2x2x1
jax: 0.10.0
libtpu: 0.0.40
codegen_flags: <defaults>
</compile_context>

<pallas_src>
import numpy as np
import jax
import jax.numpy as jnp
from jax import lax
from jax.experimental import pallas as pl
from jax.experimental.pallas import tpu as pltpu

BN_EPS = 1e-5


# ----------------------------- Pallas kernel ------------------------------------

def make_fused_kernel(layer_has_up, net_scales, blk_scales, k, L, NL):
    """layer_has_up: tuple[bool]; net/blk_scales: tuple[float]; k: kernel size; NL = N*L."""
    pad = k // 2
    inv_nl = 1.0 / float(NL)
    depth = len(layer_has_up)
    n_pref = depth - 1            # residuals consumed by layers 1..depth-1 (manual DMA)

    def kernel(*refs):
        x_ref = refs[0]
        res0_ref = refs[1]
        res_hbm = refs[2:2 + n_pref]
        p = 2 + n_pref
        layer_refs = []
        for has_up in layer_has_up:
            n = 6 if has_up else 4
            layer_refs.append(refs[p:p + n])
            p += n
        out_ref = refs[p]
        p += 1
        res_bufs = refs[p:p + n_pref]
        sem = refs[p + n_pref] if n_pref > 0 else None

        # Kick off residual DMAs for later layers now; they overlap layer-0 compute.
        for i in range(n_pref):
            pltpu.make_async_copy(res_hbm[i], res_bufs[i], sem.at[i]).start()

        # Static per-sample boundary masks for the conv taps (lane index = n*L + l).
        pos = lax.broadcasted_iota(jnp.int32, (1, NL), 1) % L
        masks = {}
        for j in range(k):
            off = pad - j
            if off != 0 and off not in masks:
                masks[off] = jnp.logical_and(pos + off >= 0, pos + off < L).astype(jnp.float32)

        def conv(h_bf, w_ref):
            # ConvTranspose1d(stride=1, padding=pad):
            #   out[co, t] = sum_{j, ci} W[ci, co, j] * h[ci, t + pad - j]
            # k bf16 matmuls on the un-shifted activation; per-tap shift applied to the
            # (c_out, NL) output (roll + boundary mask) and accumulated in f32.
            acc = None
            for j in range(k):
                off = pad - j
                y = jnp.dot(w_ref[j], h_bf, preferred_element_type=jnp.float32)
                if off != 0:
                    y = pltpu.roll(y, shift=(-off) % NL, axis=1) * masks[off]
                acc = y if acc is None else acc + y
            return acc

        def bn(h, gb_ref):
            # training-mode BatchNorm1d: stats over (N, L) == lane axis, biased variance.
            # Two-pass (centered) variance; hc reused by the normalize.
            gb = gb_ref[...]
            g = gb[:, 0:1]
            b = gb[:, 1:2]
            mean = jnp.sum(h, axis=1, keepdims=True) * inv_nl
            hc = h - mean
            var = jnp.sum(hc * hc, axis=1, keepdims=True) * inv_nl
            return hc * (lax.rsqrt(var + BN_EPS) * g) + b

        cur = x_ref[...]
        for i, has_up in enumerate(layer_has_up):
            if has_up:
                w1, gb1, w2, gb2, wup, gbup = layer_refs[i]
            else:
                w1, gb1, w2, gb2 = layer_refs[i]
                wup = gbup = None

            if i == 0:
                res = res0_ref[...].astype(jnp.float32)
            else:
                pltpu.make_async_copy(res_hbm[i - 1], res_bufs[i - 1], sem.at[i - 1]).wait()
                res = res_bufs[i - 1][...].astype(jnp.float32)
            if net_scales[i] != 1.0:                 # specialized out when statically 1.0
                res = res * net_scales[i]
            x = cur + res                            # symmetric (encoder) residual
            x_bf = x.astype(jnp.bfloat16)            # one bf16 cast, reused by convt1 + wup

            h = jnp.maximum(bn(conv(x_bf, w1), gb1), 0.0)     # convt1 + bn1 + ReLU
            # attention: nn.Identity() (attn_on == 0); dropout p=0 -> identity
            h = bn(conv(h.astype(jnp.bfloat16), w2), gb2)     # convt2 + bn2

            if has_up:                                        # 1x1 ConvTranspose1d + BN skip
                rp = bn(jnp.dot(wup[...], x_bf, preferred_element_type=jnp.float32), gbup)
            else:
                rp = x
            if blk_scales[i] != 1.0:
                rp = rp * blk_scales[i]
            cur = jnp.maximum(h + rp, 0.0)                    # forward residual + final ReLU

        out_ref[...] = cur

    return kernel


# ----------------------------- wrapper -------------------------------------------

def attn_resnet1dt_forward(x, residuals, layer_params, k):
    """x: (N, C0, L); residuals[-1-i]: (N, channels[i], L) (or 4-D, mean over dim 2)."""
    N, _, L = x.shape
    NL = N * L
    depth = len(layer_params)

    def to_kernel_layout(a, dtype):  # (N, C, L) -> (C, N*L)
        return jnp.transpose(a, (1, 0, 2)).reshape(a.shape[1], NL).astype(dtype)
    # TODO(synk): at production sizes these NCL<->(C,N*L) relayouts should be folded into the
    # surrounding model (persistent (C, N*L) activation layout) to avoid extra HBM passes.

    res_list = []
    for i in range(depth):
        r = residuals[-1 - i]
        if r.ndim > 3:
            r = jnp.mean(r, axis=2)                  # matches torch.mean(res, dim=2)
        res_list.append(to_kernel_layout(r, jnp.bfloat16))   # bf16: halves residual HBM reads

    inputs = [to_kernel_layout(x, jnp.float32)] + res_list

    layer_has_up, net_scales, blk_scales = [], [], []
    flops = 0
    transcendentals = 0
    for p in layer_params:
        c_in = p["w1_taps"].shape[1]
        c_out = p["w2_taps"].shape[1]
        has_up = p["wup"] is not None
        layer_has_up.append(has_up)
        net_scales.append(float(p["net_scale"]))
        blk_scales.append(float(p["blk_scale"]))
        inputs += [p["w1_taps"], p["gb1"], p["w2_taps"], p["gb2"]]
        if has_up:
            inputs += [p["wup"], p["gbup"]]
        flops += 2 * k * c_in * c_in * NL            # convt1
        flops += 2 * k * c_in * c_out * NL           # convt2
        transcendentals += c_in + c_out              # rsqrt per BN channel
        if has_up:
            flops += 2 * c_in * c_out * NL
            transcendentals += c_out

    c_last = layer_params[-1]["w2_taps"].shape[1]
    bytes_accessed = sum(int(np.prod(a.shape)) * a.dtype.itemsize for a in inputs)
    bytes_accessed += c_last * NL * 4

    n_pref = depth - 1
    in_specs = (
        [pl.BlockSpec(memory_space=pltpu.MemorySpace.VMEM)] * 2          # x, res0
        + [pl.BlockSpec(memory_space=pl.ANY)] * n_pref                   # res1.. stay in HBM
        + [pl.BlockSpec(memory_space=pltpu.MemorySpace.VMEM)] * (len(inputs) - 2 - n_pref))

    scratch_shapes = [pltpu.VMEM(res_list[1 + i].shape, jnp.bfloat16) for i in range(n_pref)]
    if n_pref:
        scratch_shapes.append(pltpu.SemaphoreType.DMA((n_pref,)))

    c_max = max(p["w1_taps"].shape[1] for p in layer_params)
    working_set = bytes_accessed + 8 * c_max * NL * 4
    vmem_limit = int(min(64 * 2**20, max(32 * 2**20, 2 * working_set)))

    # TODO(synk): for very large N*L this fused kernel would need an NL-tiled grid with a
    # cross-tile two-pass BatchNorm (per-channel sum/sumsq partials) and 'parallel'
    # dimension_semantics to use v7x's second TensorCore; at this model's channel widths
    # whole-array VMEM residency avoids 8 extra full passes for global BN statistics.
    out = pl.pallas_call(
        make_fused_kernel(tuple(layer_has_up), tuple(net_scales), tuple(blk_scales), k, L, NL),
        out_shape=jax.ShapeDtypeStruct((c_last, NL), jnp.float32),
        in_specs=in_specs,
        out_specs=pl.BlockSpec(memory_space=pltpu.MemorySpace.VMEM),
        scratch_shapes=scratch_shapes,
        compiler_params=pltpu.CompilerParams(vmem_limit_bytes=vmem_limit),
        cost_estimate=pl.CostEstimate(flops=flops, transcendentals=transcendentals,
                                      bytes_accessed=bytes_accessed),
    )(*inputs)
    return jnp.transpose(out.reshape(c_last, N, L), (1, 0, 2))


# ----------------------------- parameters -----------------------------------------

def init_params(key, channels, depth, k):
    def q(w):  # weights exactly representable in bf16 (kernel matmuls run in bf16)
        return jnp.asarray(w, jnp.bfloat16).astype(jnp.float32)

    layer_params = []
    for i in range(depth):
        c_in, c_out = channels[i], channels[i + 1]
        keys = jax.random.split(key, 8)
        key = keys[0]
        # torch-shaped ConvTranspose1d weights: (in_channels, out_channels, kernel)
        W1 = q(0.3 * jax.random.normal(keys[1], (c_in, c_in, k), jnp.float32))
        W2 = q(0.3 * jax.random.normal(keys[2], (c_in, c_out, k), jnp.float32))
        g1 = 1.0 + 0.1 * jax.random.normal(keys[3], (c_in,), jnp.float32)
        b1 = 0.1 * jax.random.normal(keys[4], (c_in,), jnp.float32)
        g2 = 1.0 + 0.1 * jax.random.normal(keys[5], (c_out,), jnp.float32)
        b2 = 0.1 * jax.random.normal(keys[6], (c_out,), jnp.float32)
        has_up = (c_in != c_out)   # strides are all 1
        if has_up:
            ku = jax.random.split(keys[7], 3)
            Wup = q(0.3 * jax.random.normal(ku[0], (c_in, c_out, 1), jnp.float32))
            gu = 1.0 + 0.1 * jax.random.normal(ku[1], (c_out,), jnp.float32)
            bu = 0.1 * jax.random.normal(ku[2], (c_out,), jnp.float32)
        else:
            Wup = gu = bu = None
        layer_params.append(dict(
            k=k,
            # torch-form f32 weights kept for the independent NumPy reference
            W1=W1, W2=W2, Wup_t=Wup,
            g1raw=g1, b1raw=b1, g2raw=g2, b2raw=b2, guraw=gu, buraw=bu,
            net_scale=1.0, blk_scale=1.0,
            # kernel-form weights, per-tap slabs: w_taps[j, co, ci] = W[ci, co, j], bf16
            w1_taps=jnp.transpose(W1, (2, 1, 0)).astype(jnp.bfloat16),
            w2_taps=jnp.transpose(W2, (2, 1, 0)).astype(jnp.bfloat16),
            wup=(jnp.transpose(Wup[:, :, 0]).astype(jnp.bfloat16) if has_up else None),
            # gamma/beta consolidated per BN: (c, 2) with [:,0]=gamma, [:,1]=beta
            gb1=jnp.stack([g1, b1], axis=1),
            gb2=jnp.stack([g2, b2], axis=1),
            gbup=(jnp.stack([gu, bu], axis=1) if has_up else None),
        ))
    return layer_params


# ----------------------------- NumPy reference (for verification) -----------------

def convT1d_np(x, w, pad):
    """Direct scatter-form ConvTranspose1d, stride=1. x:(N,Cin,L), w:(Cin,Cout,K)."""
    N, Cin, L = x.shape
    _, Cout, K = w.shape
    yfull = np.zeros((N, Cout, L - 1 + K), dtype=np.float64)
    for t in range(L):
        for j in range(K):
            yfull[:, :, t + j] += x[:, :, t] @ w[:, :, j]
    Lout = L - 1 + K - 2 * pad
    return yfull[:, :, pad:pad + Lout]


def bn_np(h, g, b, eps=BN_EPS):
    mean = h.mean(axis=(0, 2), keepdims=True)
    var = ((h - mean) ** 2).mean(axis=(0, 2), keepdims=True)
    g = np.asarray(g, np.float64).reshape(1, -1, 1)
    b = np.asarray(b, np.float64).reshape(1, -1, 1)
    return (h - mean) / np.sqrt(var + eps) * g + b


def block_ref(x, res, p):
    x = x + res * p["net_scale"]
    h = convT1d_np(x, np.asarray(p["W1"], np.float64), p["k"] // 2)
    h = np.maximum(bn_np(h, p["g1raw"], p["b1raw"]), 0.0)
    h = convT1d_np(h, np.asarray(p["W2"], np.float64), p["k"] // 2)
    h = bn_np(h, p["g2raw"], p["b2raw"])
    if p["Wup_t"] is not None:
        rp = bn_np(convT1d_np(x, np.asarray(p["Wup_t"], np.float64), 0),
                   p["guraw"], p["buraw"])
    else:
        rp = x
    return np.maximum(h + rp * p["blk_scale"], 0.0)


def model_ref(x, residuals, layer_params):
    for i, p in enumerate(layer_params):
        res = residuals[-1 - i]
        if res.ndim > x.ndim:
            res = res.mean(axis=2)
        x = block_ref(x, res, p)
    return x


# ----------------------------- main -----------------------------------------------

if __name__ == "__main__":
    N, L = 2, 128                # N*L = 256: fills a full 256-wide MXU pass on v6e/v7x
    depth = 4
    channels = [32, 16, 8, 8, 4]  # scaled-down version of [512, 256, 128, 64, 1]
    k = 3

    key = jax.random.PRNGKey(0)
    kx, kr, kp = jax.random.split(key, 3)
    x = jax.random.normal(kx, (N, channels[0], L), jnp.float32)
    rkeys = jax.random.split(kr, depth)
    residuals = [None] * depth
    for i in range(depth):
        # residuals[-1-i] is consumed by layer i -> channels[i]; the kernel streams residuals
        # as bf16, so round-trip here so the f64 reference sees bit-identical inputs.
        r = jax.random.normal(rkeys[i], (N, channels[i], L), jnp.float32)
        residuals[depth - 1 - i] = r.astype(jnp.bfloat16).astype(jnp.float32)

    layer_params = init_params(kp, channels, depth, k)

    fwd = jax.jit(lambda xx, rr: attn_resnet1dt_forward(xx, rr, layer_params, k))
    out = jax.block_until_ready(fwd(x, residuals))
    assert out.shape == (N, channels[-1], L)

    ref = model_ref(np.asarray(x, np.float64),
                    [np.asarray(r, np.float64) for r in residuals],
                    layer_params)
    # bf16 MXU matmuls / bf16 residual streaming (f32 accumulation) -> loose-ish tolerance.
    np.testing.assert_allclose(np.asarray(out), ref, rtol=2e-2, atol=5e-2)

    # TODO(synk): AttentionBlock / dropout paths are not exercised (attn_on=[0,...],
    # dropout=0.0 in the default config), so they are intentionally omitted.
    print("KERNEL_OK")
</pallas_src>

<mosaic_0001>
module attributes {stable_mosaic.version = 11 : i64} {
  func.func @kernel(%arg0: memref<32x256xf32, #tpu.memory_space<vmem>>, %arg1: memref<32x256xbf16, #tpu.memory_space<vmem>>, %arg2: memref<16x256xbf16, #tpu.memory_space<any>>, %arg3: memref<8x256xbf16, #tpu.memory_space<any>>, %arg4: memref<8x256xbf16, #tpu.memory_space<any>>, %arg5: memref<3x32x32xbf16, #tpu.memory_space<vmem>>, %arg6: memref<32x2xf32, #tpu.memory_space<vmem>>, %arg7: memref<3x16x32xbf16, #tpu.memory_space<vmem>>, %arg8: memref<16x2xf32, #tpu.memory_space<vmem>>, %arg9: memref<16x32xbf16, #tpu.memory_space<vmem>>, %arg10: memref<16x2xf32, #tpu.memory_space<vmem>>, %arg11: memref<3x16x16xbf16, #tpu.memory_space<vmem>>, %arg12: memref<16x2xf32, #tpu.memory_space<vmem>>, %arg13: memref<3x8x16xbf16, #tpu.memory_space<vmem>>, %arg14: memref<8x2xf32, #tpu.memory_space<vmem>>, %arg15: memref<8x16xbf16, #tpu.memory_space<vmem>>, %arg16: memref<8x2xf32, #tpu.memory_space<vmem>>, %arg17: memref<3x8x8xbf16, #tpu.memory_space<vmem>>, %arg18: memref<8x2xf32, #tpu.memory_space<vmem>>, %arg19: memref<3x8x8xbf16, #tpu.memory_space<vmem>>, %arg20: memref<8x2xf32, #tpu.memory_space<vmem>>, %arg21: memref<3x8x8xbf16, #tpu.memory_space<vmem>>, %arg22: memref<8x2xf32, #tpu.memory_space<vmem>>, %arg23: memref<3x4x8xbf16, #tpu.memory_space<vmem>>, %arg24: memref<4x2xf32, #tpu.memory_space<vmem>>, %arg25: memref<4x8xbf16, #tpu.memory_space<vmem>>, %arg26: memref<4x2xf32, #tpu.memory_space<vmem>>, %arg27: memref<4x256xf32, #tpu.memory_space<vmem>>, %arg28: memref<16x256xbf16, #tpu.memory_space<vmem>>, %arg29: memref<8x256xbf16, #tpu.memory_space<vmem>>, %arg30: memref<8x256xbf16, #tpu.memory_space<vmem>>, %arg31: memref<3x!tpu.dma_semaphore, #tpu.memory_space<semaphore_mem>>) attributes {dimension_semantics = [], scalar_prefetch = 0 : i64, scratch_operands = 4 : i64, tpu.core_type = #tpu.core_type<tc>} {
    %c0_i32 = arith.constant 0 : i32
    %0 = tpu.memref_slice %arg31[%c0_i32] : memref<3x!tpu.dma_semaphore, #tpu.memory_space<semaphore_mem>> -> memref<1x!tpu.dma_semaphore, #tpu.memory_space<semaphore_mem>>
    %1 = tpu.memref_squeeze %0 : memref<1x!tpu.dma_semaphore, #tpu.memory_space<semaphore_mem>> -> memref<!tpu.dma_semaphore, #tpu.memory_space<semaphore_mem>>
    tpu.enqueue_dma source(%arg2 : memref<16x256xbf16, #tpu.memory_space<any>>) target(%arg28 : memref<16x256xbf16, #tpu.memory_space<vmem>>) target_semaphore(%1 : memref<!tpu.dma_semaphore, #tpu.memory_space<semaphore_mem>>)
    %c1_i32 = arith.constant 1 : i32
    %2 = tpu.memref_slice %arg31[%c1_i32] : memref<3x!tpu.dma_semaphore, #tpu.memory_space<semaphore_mem>> -> memref<1x!tpu.dma_semaphore, #tpu.memory_space<semaphore_mem>>
    %3 = tpu.memref_squeeze %2 : memref<1x!tpu.dma_semaphore, #tpu.memory_space<semaphore_mem>> -> memref<!tpu.dma_semaphore, #tpu.memory_space<semaphore_mem>>
    tpu.enqueue_dma source(%arg3 : memref<8x256xbf16, #tpu.memory_space<any>>) target(%arg29 : memref<8x256xbf16, #tpu.memory_space<vmem>>) target_semaphore(%3 : memref<!tpu.dma_semaphore, #tpu.memory_space<semaphore_mem>>)
    %c2_i32 = arith.constant 2 : i32
    %4 = tpu.memref_slice %arg31[%c2_i32] : memref<3x!tpu.dma_semaphore, #tpu.memory_space<semaphore_mem>> -> memref<1x!tpu.dma_semaphore, #tpu.memory_space<semaphore_mem>>
    %5 = tpu.memref_squeeze %4 : memref<1x!tpu.dma_semaphore, #tpu.memory_space<semaphore_mem>> -> memref<!tpu.dma_semaphore, #tpu.memory_space<semaphore_mem>>
    tpu.enqueue_dma source(%arg4 : memref<8x256xbf16, #tpu.memory_space<any>>) target(%arg30 : memref<8x256xbf16, #tpu.memory_space<vmem>>) target_semaphore(%5 : memref<!tpu.dma_semaphore, #tpu.memory_space<semaphore_mem>>)
    %6 = tpu.iota {dimensions = array<i32: 1>} : vector<1x256xi32>
    %c128_i32 = arith.constant 128 : i32
    %c0_i32_0 = arith.constant 0 : i32
    %7 = arith.cmpi eq, %c128_i32, %c0_i32_0 : i32
    %c1_i32_1 = arith.constant 1 : i32
    %8 = arith.select %7, %c1_i32_1, %c128_i32 : i32
    %9 = vector.broadcast %8 : i32 to vector<1x256xi32>
    %10 = arith.remsi %6, %9 : vector<1x256xi32>
    %c0_i32_2 = arith.constant 0 : i32
    %11 = vector.broadcast %c0_i32_2 : i32 to vector<1x256xi32>
    %12 = arith.cmpi ne, %10, %11 : vector<1x256xi32>
    %c0_i32_3 = arith.constant 0 : i32
    %13 = vector.broadcast %c0_i32_3 : i32 to vector<1x256xi32>
    %14 = arith.cmpi slt, %10, %13 : vector<1x256xi32>
    %c0_i32_4 = arith.constant 0 : i32
    %15 = arith.cmpi slt, %8, %c0_i32_4 : i32
    %16 = vector.broadcast %15 : i1 to vector<1x256xi1>
    %17 = vector.broadcast %16 : vector<1x256xi1> to vector<1x256xi1>
    %18 = arith.xori %14, %17 : vector<1x256xi1>
    %19 = arith.andi %18, %12 : vector<1x256xi1>
    %20 = vector.broadcast %8 : i32 to vector<1x256xi32>
    %21 = arith.addi %10, %20 : vector<1x256xi32>
    %22 = arith.select %19, %21, %10 : vector<1x256xi1>, vector<1x256xi32>
    %c1_i32_5 = arith.constant 1 : i32
    %23 = vector.broadcast %c1_i32_5 : i32 to vector<1x256xi32>
    %24 = arith.addi %22, %23 : vector<1x256xi32>
    %c0_i32_6 = arith.constant 0 : i32
    %25 = vector.broadcast %c0_i32_6 : i32 to vector<1x256xi32>
    %26 = arith.cmpi sge, %24, %25 : vector<1x256xi32>
    %c1_i32_7 = arith.constant 1 : i32
    %27 = vector.broadcast %c1_i32_7 : i32 to vector<1x256xi32>
    %28 = arith.addi %22, %27 : vector<1x256xi32>
    %c128_i32_8 = arith.constant 128 : i32
    %29 = vector.broadcast %c128_i32_8 : i32 to vector<1x256xi32>
    %30 = arith.cmpi slt, %28, %29 : vector<1x256xi32>
    %31 = arith.andi %26, %30 : vector<1x256xi1>
    %32 = arith.extui %31 : vector<1x256xi1> to vector<1x256xi32>
    %33 = arith.sitofp %32 : vector<1x256xi32> to vector<1x256xf32>
    %c-1_i32 = arith.constant -1 : i32
    %34 = vector.broadcast %c-1_i32 : i32 to vector<1x256xi32>
    %35 = arith.addi %22, %34 : vector<1x256xi32>
    %c0_i32_9 = arith.constant 0 : i32
    %36 = vector.broadcast %c0_i32_9 : i32 to vector<1x256xi32>
    %37 = arith.cmpi sge, %35, %36 : vector<1x256xi32>
    %c-1_i32_10 = arith.constant -1 : i32
    %38 = vector.broadcast %c-1_i32_10 : i32 to vector<1x256xi32>
    %39 = arith.addi %22, %38 : vector<1x256xi32>
    %c128_i32_11 = arith.constant 128 : i32
    %40 = vector.broadcast %c128_i32_11 : i32 to vector<1x256xi32>
    %41 = arith.cmpi slt, %39, %40 : vector<1x256xi32>
    %42 = arith.andi %37, %41 : vector<1x256xi1>
    %43 = arith.extui %42 : vector<1x256xi1> to vector<1x256xi32>
    %44 = arith.sitofp %43 : vector<1x256xi32> to vector<1x256xf32>
    %c0 = arith.constant 0 : index
    %c0_12 = arith.constant 0 : index
    %45 = vector.load %arg0[%c0, %c0_12] : memref<32x256xf32, #tpu.memory_space<vmem>>, vector<32x256xf32>
    %c0_13 = arith.constant 0 : index
    %c0_14 = arith.constant 0 : index
    %46 = vector.load %arg1[%c0_13, %c0_14] : memref<32x256xbf16, #tpu.memory_space<vmem>>, vector<32x256xbf16>
    %47 = arith.extf %46 : vector<32x256xbf16> to vector<32x256xf32>
    %48 = arith.addf %45, %47 : vector<32x256xf32>
    %49 = arith.truncf %48 : vector<32x256xf32> to vector<32x256xbf16>
    %c0_15 = arith.constant 0 : index
    %c0_16 = arith.constant 0 : index
    %c0_17 = arith.constant 0 : index
    %50 = vector.load %arg5[%c0_15, %c0_16, %c0_17] : memref<3x32x32xbf16, #tpu.memory_space<vmem>>, vector<1x32x32xbf16>
    %51 = vector.shape_cast %50 : vector<1x32x32xbf16> to vector<32x32xbf16>
    %cst = arith.constant dense<0.000000e+00> : vector<32x256xf32>
    %52 = tpu.matmul %51, %49, %cst {dimension_numbers = #tpu.dot_dimension_numbers<[1], [0], [0], [1], [0, 0, 1, 1], [], []>} : vector<32x32xbf16>, vector<32x256xbf16>, vector<32x256xf32> -> vector<32x256xf32>
    %c255_i32 = arith.constant 255 : i32
    %53 = tpu.dynamic_rotate %52 by %c255_i32 dim 1 : vector<32x256xf32>, i32 -> vector<32x256xf32>
    %54 = vector.broadcast %33 : vector<1x256xf32> to vector<32x256xf32>
    %55 = arith.mulf %53, %54 : vector<32x256xf32>
    %c1 = arith.constant 1 : index
    %c0_18 = arith.constant 0 : index
    %c0_19 = arith.constant 0 : index
    %56 = vector.load %arg5[%c1, %c0_18, %c0_19] : memref<3x32x32xbf16, #tpu.memory_space<vmem>>, vector<1x32x32xbf16>
    %57 = vector.shape_cast %56 : vector<1x32x32xbf16> to vector<32x32xbf16>
    %cst_20 = arith.constant dense<0.000000e+00> : vector<32x256xf32>
    %58 = tpu.matmul %57, %49, %cst_20 {dimension_numbers = #tpu.dot_dimension_numbers<[1], [0], [0], [1], [0, 0, 1, 1], [], []>} : vector<32x32xbf16>, vector<32x256xbf16>, vector<32x256xf32> -> vector<32x256xf32>
    %59 = arith.addf %55, %58 : vector<32x256xf32>
    %c2 = arith.constant 2 : index
    %c0_21 = arith.constant 0 : index
    %c0_22 = arith.constant 0 : index
    %60 = vector.load %arg5[%c2, %c0_21, %c0_22] : memref<3x32x32xbf16, #tpu.memory_space<vmem>>, vector<1x32x32xbf16>
    %61 = vector.shape_cast %60 : vector<1x32x32xbf16> to vector<32x32xbf16>
    %cst_23 = arith.constant dense<0.000000e+00> : vector<32x256xf32>
    %62 = tpu.matmul %61, %49, %cst_23 {dimension_numbers = #tpu.dot_dimension_numbers<[1], [0], [0], [1], [0, 0, 1, 1], [], []>} : vector<32x32xbf16>, vector<32x256xbf16>, vector<32x256xf32> -> vector<32x256xf32>
    %c1_i32_24 = arith.constant 1 : i32
    %63 = tpu.dynamic_rotate %62 by %c1_i32_24 dim 1 : vector<32x256xf32>, i32 -> vector<32x256xf32>
    %64 = vector.broadcast %44 : vector<1x256xf32> to vector<32x256xf32>
    %65 = arith.mulf %63, %64 : vector<32x256xf32>
    %66 = arith.addf %59, %65 : vector<32x256xf32>
    %c0_25 = arith.constant 0 : index
    %c0_26 = arith.constant 0 : index
    %67 = vector.load %arg6[%c0_25, %c0_26] : memref<32x2xf32, #tpu.memory_space<vmem>>, vector<32x2xf32>
    %68 = vector.extract_strided_slice %67 {offsets = [0, 0], sizes = [32, 1], strides = [1, 1]} : vector<32x2xf32> to vector<32x1xf32>
    %69 = vector.extract_strided_slice %67 {offsets = [0, 1], sizes = [32, 1], strides = [1, 1]} : vector<32x2xf32> to vector<32x1xf32>
    %cst_27 = arith.constant dense<0.000000e+00> : vector<32xf32>
    %70 = vector.multi_reduction <add>, %66, %cst_27 [1] : vector<32x256xf32> to vector<32xf32>
    %71 = vector.shape_cast %70 : vector<32xf32> to vector<32x1xf32>
    %cst_28 = arith.constant 3.906250e-03 : f32
    %72 = vector.broadcast %cst_28 : f32 to vector<32x1xf32>
    %73 = arith.mulf %71, %72 : vector<32x1xf32>
    %74 = vector.broadcast %73 : vector<32x1xf32> to vector<32x256xf32>
    %75 = arith.subf %66, %74 : vector<32x256xf32>
    %76 = arith.mulf %75, %75 : vector<32x256xf32>
    %cst_29 = arith.constant dense<0.000000e+00> : vector<32xf32>
    %77 = vector.multi_reduction <add>, %76, %cst_29 [1] : vector<32x256xf32> to vector<32xf32>
    %78 = vector.shape_cast %77 : vector<32xf32> to vector<32x1xf32>
    %cst_30 = arith.constant 3.906250e-03 : f32
    %79 = vector.broadcast %cst_30 : f32 to vector<32x1xf32>
    %80 = arith.mulf %78, %79 : vector<32x1xf32>
    %cst_31 = arith.constant 9.99999974E-6 : f32
    %81 = vector.broadcast %cst_31 : f32 to vector<32x1xf32>
    %82 = arith.addf %80, %81 : vector<32x1xf32>
    %83 = math.rsqrt %82 : vector<32x1xf32>
    %84 = arith.mulf %83, %68 : vector<32x1xf32>
    %85 = vector.broadcast %84 : vector<32x1xf32> to vector<32x256xf32>
    %86 = arith.mulf %75, %85 : vector<32x256xf32>
    %87 = vector.broadcast %69 : vector<32x1xf32> to vector<32x256xf32>
    %88 = arith.addf %86, %87 : vector<32x256xf32>
    %cst_32 = arith.constant 0.000000e+00 : f32
    %89 = vector.broadcast %cst_32 : f32 to vector<32x256xf32>
    %90 = arith.maximumf %88, %89 : vector<32x256xf32>
    %91 = arith.truncf %90 : vector<32x256xf32> to vector<32x256xbf16>
    %c0_33 = arith.constant 0 : index
    %c0_34 = arith.constant 0 : index
    %c0_35 = arith.constant 0 : index
    %92 = vector.load %arg7[%c0_33, %c0_34, %c0_35] : memref<3x16x32xbf16, #tpu.memory_space<vmem>>, vector<1x16x32xbf16>
    %93 = vector.shape_cast %92 : vector<1x16x32xbf16> to vector<16x32xbf16>
    %cst_36 = arith.constant dense<0.000000e+00> : vector<16x256xf32>
    %94 = tpu.matmul %93, %91, %cst_36 {dimension_numbers = #tpu.dot_dimension_numbers<[1], [0], [0], [1], [0, 0, 1, 1], [], []>} : vector<16x32xbf16>, vector<32x256xbf16>, vector<16x256xf32> -> vector<16x256xf32>
    %c255_i32_37 = arith.constant 255 : i32
    %95 = tpu.dynamic_rotate %94 by %c255_i32_37 dim 1 : vector<16x256xf32>, i32 -> vector<16x256xf32>
    %96 = vector.broadcast %33 : vector<1x256xf32> to vector<16x256xf32>
    %97 = arith.mulf %95, %96 : vector<16x256xf32>
    %c1_38 = arith.constant 1 : index
    %c0_39 = arith.constant 0 : index
    %c0_40 = arith.constant 0 : index
    %98 = vector.load %arg7[%c1_38, %c0_39, %c0_40] : memref<3x16x32xbf16, #tpu.memory_space<vmem>>, vector<1x16x32xbf16>
    %99 = vector.shape_cast %98 : vector<1x16x32xbf16> to vector<16x32xbf16>
    %cst_41 = arith.constant dense<0.000000e+00> : vector<16x256xf32>
    %100 = tpu.matmul %99, %91, %cst_41 {dimension_numbers = #tpu.dot_dimension_numbers<[1], [0], [0], [1], [0, 0, 1, 1], [], []>} : vector<16x32xbf16>, vector<32x256xbf16>, vector<16x256xf32> -> vector<16x256xf32>
    %101 = arith.addf %97, %100 : vector<16x256xf32>
    %c2_42 = arith.constant 2 : index
    %c0_43 = arith.constant 0 : index
    %c0_44 = arith.constant 0 : index
    %102 = vector.load %arg7[%c2_42, %c0_43, %c0_44] : memref<3x16x32xbf16, #tpu.memory_space<vmem>>, vector<1x16x32xbf16>
    %103 = vector.shape_cast %102 : vector<1x16x32xbf16> to vector<16x32xbf16>
    %cst_45 = arith.constant dense<0.000000e+00> : vector<16x256xf32>
    %104 = tpu.matmul %103, %91, %cst_45 {dimension_numbers = #tpu.dot_dimension_numbers<[1], [0], [0], [1], [0, 0, 1, 1], [], []>} : vector<16x32xbf16>, vector<32x256xbf16>, vector<16x256xf32> -> vector<16x256xf32>
    %c1_i32_46 = arith.constant 1 : i32
    %105 = tpu.dynamic_rotate %104 by %c1_i32_46 dim 1 : vector<16x256xf32>, i32 -> vector<16x256xf32>
    %106 = vector.broadcast %44 : vector<1x256xf32> to vector<16x256xf32>
    %107 = arith.mulf %105, %106 : vector<16x256xf32>
    %108 = arith.addf %101, %107 : vector<16x256xf32>
    %c0_47 = arith.constant 0 : index
    %c0_48 = arith.constant 0 : index
    %109 = vector.load %arg8[%c0_47, %c0_48] : memref<16x2xf32, #tpu.memory_space<vmem>>, vector<16x2xf32>
    %110 = vector.extract_strided_slice %109 {offsets = [0, 0], sizes = [16, 1], strides = [1, 1]} : vector<16x2xf32> to vector<16x1xf32>
    %111 = vector.extract_strided_slice %109 {offsets = [0, 1], sizes = [16, 1], strides = [1, 1]} : vector<16x2xf32> to vector<16x1xf32>
    %cst_49 = arith.constant dense<0.000000e+00> : vector<16xf32>
    %112 = vector.multi_reduction <add>, %108, %cst_49 [1] : vector<16x256xf32> to vector<16xf32>
    %113 = vector.shape_cast %112 : vector<16xf32> to vector<16x1xf32>
    %cst_50 = arith.constant 3.906250e-03 : f32
    %114 = vector.broadcast %cst_50 : f32 to vector<16x1xf32>
    %115 = arith.mulf %113, %114 : vector<16x1xf32>
    %116 = vector.broadcast %115 : vector<16x1xf32> to vector<16x256xf32>
    %117 = arith.subf %108, %116 : vector<16x256xf32>
    %118 = arith.mulf %117, %117 : vector<16x256xf32>
    %cst_51 = arith.constant dense<0.000000e+00> : vector<16xf32>
    %119 = vector.multi_reduction <add>, %118, %cst_51 [1] : vector<16x256xf32> to vector<16xf32>
    %120 = vector.shape_cast %119 : vector<16xf32> to vector<16x1xf32>
    %cst_52 = arith.constant 3.906250e-03 : f32
    %121 = vector.broadcast %cst_52 : f32 to vector<16x1xf32>
    %122 = arith.mulf %120, %121 : vector<16x1xf32>
    %cst_53 = arith.constant 9.99999974E-6 : f32
    %123 = vector.broadcast %cst_53 : f32 to vector<16x1xf32>
    %124 = arith.addf %122, %123 : vector<16x1xf32>
    %125 = math.rsqrt %124 : vector<16x1xf32>
    %126 = arith.mulf %125, %110 : vector<16x1xf32>
    %127 = vector.broadcast %126 : vector<16x1xf32> to vector<16x256xf32>
    %128 = arith.mulf %117, %127 : vector<16x256xf32>
    %129 = vector.broadcast %111 : vector<16x1xf32> to vector<16x256xf32>
    %130 = arith.addf %128, %129 : vector<16x256xf32>
    %c0_54 = arith.constant 0 : index
    %c0_55 = arith.constant 0 : index
    %131 = vector.load %arg9[%c0_54, %c0_55] : memref<16x32xbf16, #tpu.memory_space<vmem>>, vector<16x32xbf16>
    %cst_56 = arith.constant dense<0.000000e+00> : vector<16x256xf32>
    %132 = tpu.matmul %131, %49, %cst_56 {dimension_numbers = #tpu.dot_dimension_numbers<[1], [0], [0], [1], [0, 0, 1, 1], [], []>} : vector<16x32xbf16>, vector<32x256xbf16>, vector<16x256xf32> -> vector<16x256xf32>
    %c0_57 = arith.constant 0 : index
    %c0_58 = arith.constant 0 : index
    %133 = vector.load %arg10[%c0_57, %c0_58] : memref<16x2xf32, #tpu.memory_space<vmem>>, vector<16x2xf32>
    %134 = vector.extract_strided_slice %133 {offsets = [0, 0], sizes = [16, 1], strides = [1, 1]} : vector<16x2xf32> to vector<16x1xf32>
    %135 = vector.extract_strided_slice %133 {offsets = [0, 1], sizes = [16, 1], strides = [1, 1]} : vector<16x2xf32> to vector<16x1xf32>
    %cst_59 = arith.constant dense<0.000000e+00> : vector<16xf32>
    %136 = vector.multi_reduction <add>, %132, %cst_59 [1] : vector<16x256xf32> to vector<16xf32>
    %137 = vector.shape_cast %136 : vector<16xf32> to vector<16x1xf32>
    %cst_60 = arith.constant 3.906250e-03 : f32
    %138 = vector.broadcast %cst_60 : f32 to vector<16x1xf32>
    %139 = arith.mulf %137, %138 : vector<16x1xf32>
    %140 = vector.broadcast %139 : vector<16x1xf32> to vector<16x256xf32>
    %141 = arith.subf %132, %140 : vector<16x256xf32>
    %142 = arith.mulf %141, %141 : vector<16x256xf32>
    %cst_61 = arith.constant dense<0.000000e+00> : vector<16xf32>
    %143 = vector.multi_reduction <add>, %142, %cst_61 [1] : vector<16x256xf32> to vector<16xf32>
    %144 = vector.shape_cast %143 : vector<16xf32> to vector<16x1xf32>
    %cst_62 = arith.constant 3.906250e-03 : f32
    %145 = vector.broadcast %cst_62 : f32 to vector<16x1xf32>
    %146 = arith.mulf %144, %145 : vector<16x1xf32>
    %cst_63 = arith.constant 9.99999974E-6 : f32
    %147 = vector.broadcast %cst_63 : f32 to vector<16x1xf32>
    %148 = arith.addf %146, %147 : vector<16x1xf32>
    %149 = math.rsqrt %148 : vector<16x1xf32>
    %150 = arith.mulf %149, %134 : vector<16x1xf32>
    %151 = vector.broadcast %150 : vector<16x1xf32> to vector<16x256xf32>
    %152 = arith.mulf %141, %151 : vector<16x256xf32>
    %153 = vector.broadcast %135 : vector<16x1xf32> to vector<16x256xf32>
    %154 = arith.addf %152, %153 : vector<16x256xf32>
    %155 = arith.addf %130, %154 : vector<16x256xf32>
    %cst_64 = arith.constant 0.000000e+00 : f32
    %156 = vector.broadcast %cst_64 : f32 to vector<16x256xf32>
    %157 = arith.maximumf %155, %156 : vector<16x256xf32>
    %c0_i32_65 = arith.constant 0 : i32
    %158 = tpu.memref_slice %arg31[%c0_i32_65] : memref<3x!tpu.dma_semaphore, #tpu.memory_space<semaphore_mem>> -> memref<1x!tpu.dma_semaphore, #tpu.memory_space<semaphore_mem>>
    %159 = tpu.memref_squeeze %158 : memref<1x!tpu.dma_semaphore, #tpu.memory_space<semaphore_mem>> -> memref<!tpu.dma_semaphore, #tpu.memory_space<semaphore_mem>>
    tpu.wait_dma2 semaphore(%159 : memref<!tpu.dma_semaphore, #tpu.memory_space<semaphore_mem>>) src(%arg2 : memref<16x256xbf16, #tpu.memory_space<any>>) dst(%arg28 : memref<16x256xbf16, #tpu.memory_space<vmem>>)
    %c0_66 = arith.constant 0 : index
    %c0_67 = arith.constant 0 : index
    %160 = vector.load %arg28[%c0_66, %c0_67] : memref<16x256xbf16, #tpu.memory_space<vmem>>, vector<16x256xbf16>
    %161 = arith.extf %160 : vector<16x256xbf16> to vector<16x256xf32>
    %162 = arith.addf %157, %161 : vector<16x256xf32>
    %163 = arith.truncf %162 : vector<16x256xf32> to vector<16x256xbf16>
    %c0_68 = arith.constant 0 : index
    %c0_69 = arith.constant 0 : index
    %c0_70 = arith.constant 0 : index
    %164 = vector.load %arg11[%c0_68, %c0_69, %c0_70] : memref<3x16x16xbf16, #tpu.memory_space<vmem>>, vector<1x16x16xbf16>
    %165 = vector.shape_cast %164 : vector<1x16x16xbf16> to vector<16x16xbf16>
    %cst_71 = arith.constant dense<0.000000e+00> : vector<16x256xf32>
    %166 = tpu.matmul %165, %163, %cst_71 {dimension_numbers = #tpu.dot_dimension_numbers<[1], [0], [0], [1], [0, 0, 1, 1], [], []>} : vector<16x16xbf16>, vector<16x256xbf16>, vector<16x256xf32> -> vector<16x256xf32>
    %c255_i32_72 = arith.constant 255 : i32
    %167 = tpu.dynamic_rotate %166 by %c255_i32_72 dim 1 : vector<16x256xf32>, i32 -> vector<16x256xf32>
    %168 = vector.broadcast %33 : vector<1x256xf32> to vector<16x256xf32>
    %169 = arith.mulf %167, %168 : vector<16x256xf32>
    %c1_73 = arith.constant 1 : index
    %c0_74 = arith.constant 0 : index
    %c0_75 = arith.constant 0 : index
    %170 = vector.load %arg11[%c1_73, %c0_74, %c0_75] : memref<3x16x16xbf16, #tpu.memory_space<vmem>>, vector<1x16x16xbf16>
    %171 = vector.shape_cast %170 : vector<1x16x16xbf16> to vector<16x16xbf16>
    %cst_76 = arith.constant dense<0.000000e+00> : vector<16x256xf32>
    %172 = tpu.matmul %171, %163, %cst_76 {dimension_numbers = #tpu.dot_dimension_numbers<[1], [0], [0], [1], [0, 0, 1, 1], [], []>} : vector<16x16xbf16>, vector<16x256xbf16>, vector<16x256xf32> -> vector<16x256xf32>
    %173 = arith.addf %169, %172 : vector<16x256xf32>
    %c2_77 = arith.constant 2 : index
    %c0_78 = arith.constant 0 : index
    %c0_79 = arith.constant 0 : index
    %174 = vector.load %arg11[%c2_77, %c0_78, %c0_79] : memref<3x16x16xbf16, #tpu.memory_space<vmem>>, vector<1x16x16xbf16>
    %175 = vector.shape_cast %174 : vector<1x16x16xbf16> to vector<16x16xbf16>
    %cst_80 = arith.constant dense<0.000000e+00> : vector<16x256xf32>
    %176 = tpu.matmul %175, %163, %cst_80 {dimension_numbers = #tpu.dot_dimension_numbers<[1], [0], [0], [1], [0, 0, 1, 1], [], []>} : vector<16x16xbf16>, vector<16x256xbf16>, vector<16x256xf32> -> vector<16x256xf32>
    %c1_i32_81 = arith.constant 1 : i32
    %177 = tpu.dynamic_rotate %176 by %c1_i32_81 dim 1 : vector<16x256xf32>, i32 -> vector<16x256xf32>
    %178 = vector.broadcast %44 : vector<1x256xf32> to vector<16x256xf32>
    %179 = arith.mulf %177, %178 : vector<16x256xf32>
    %180 = arith.addf %173, %179 : vector<16x256xf32>
    %c0_82 = arith.constant 0 : index
    %c0_83 = arith.constant 0 : index
    %181 = vector.load %arg12[%c0_82, %c0_83] : memref<16x2xf32, #tpu.memory_space<vmem>>, vector<16x2xf32>
    %182 = vector.extract_strided_slice %181 {offsets = [0, 0], sizes = [16, 1], strides = [1, 1]} : vector<16x2xf32> to vector<16x1xf32>
    %183 = vector.extract_strided_slice %181 {offsets = [0, 1], sizes = [16, 1], strides = [1, 1]} : vector<16x2xf32> to vector<16x1xf32>
    %cst_84 = arith.constant dense<0.000000e+00> : vector<16xf32>
    %184 = vector.multi_reduction <add>, %180, %cst_84 [1] : vector<16x256xf32> to vector<16xf32>
    %185 = vector.shape_cast %184 : vector<16xf32> to vector<16x1xf32>
    %cst_85 = arith.constant 3.906250e-03 : f32
    %186 = vector.broadcast %cst_85 : f32 to vector<16x1xf32>
    %187 = arith.mulf %185, %186 : vector<16x1xf32>
    %188 = vector.broadcast %187 : vector<16x1xf32> to vector<16x256xf32>
    %189 = arith.subf %180, %188 : vector<16x256xf32>
    %190 = arith.mulf %189, %189 : vector<16x256xf32>
    %cst_86 = arith.constant dense<0.000000e+00> : vector<16xf32>
    %191 = vector.multi_reduction <add>, %190, %cst_86 [1] : vector<16x256xf32> to vector<16xf32>
    %192 = vector.shape_cast %191 : vector<16xf32> to vector<16x1xf32>
    %cst_87 = arith.constant 3.906250e-03 : f32
    %193 = vector.broadcast %cst_87 : f32 to vector<16x1xf32>
    %194 = arith.mulf %192, %193 : vector<16x1xf32>
    %cst_88 = arith.constant 9.99999974E-6 : f32
    %195 = vector.broadcast %cst_88 : f32 to vector<16x1xf32>
    %196 = arith.addf %194, %195 : vector<16x1xf32>
    %197 = math.rsqrt %196 : vector<16x1xf32>
    %198 = arith.mulf %197, %182 : vector<16x1xf32>
    %199 = vector.broadcast %198 : vector<16x1xf32> to vector<16x256xf32>
    %200 = arith.mulf %189, %199 : vector<16x256xf32>
    %201 = vector.broadcast %183 : vector<16x1xf32> to vector<16x256xf32>
    %202 = arith.addf %200, %201 : vector<16x256xf32>
    %cst_89 = arith.constant 0.000000e+00 : f32
    %203 = vector.broadcast %cst_89 : f32 to vector<16x256xf32>
    %204 = arith.maximumf %202, %203 : vector<16x256xf32>
    %205 = arith.truncf %204 : vector<16x256xf32> to vector<16x256xbf16>
    %c0_90 = arith.constant 0 : index
    %c0_91 = arith.constant 0 : index
    %c0_92 = arith.constant 0 : index
    %206 = vector.load %arg13[%c0_90, %c0_91, %c0_92] : memref<3x8x16xbf16, #tpu.memory_space<vmem>>, vector<1x8x16xbf16>
    %207 = vector.shape_cast %206 : vector<1x8x16xbf16> to vector<8x16xbf16>
    %cst_93 = arith.constant dense<0.000000e+00> : vector<8x256xf32>
    %208 = tpu.matmul %207, %205, %cst_93 {dimension_numbers = #tpu.dot_dimension_numbers<[1], [0], [0], [1], [0, 0, 1, 1], [], []>} : vector<8x16xbf16>, vector<16x256xbf16>, vector<8x256xf32> -> vector<8x256xf32>
    %c255_i32_94 = arith.constant 255 : i32
    %209 = tpu.dynamic_rotate %208 by %c255_i32_94 dim 1 : vector<8x256xf32>, i32 -> vector<8x256xf32>
    %210 = vector.broadcast %33 : vector<1x256xf32> to vector<8x256xf32>
    %211 = arith.mulf %209, %210 : vector<8x256xf32>
    %c1_95 = arith.constant 1 : index
    %c0_96 = arith.constant 0 : index
    %c0_97 = arith.constant 0 : index
    %212 = vector.load %arg13[%c1_95, %c0_96, %c0_97] : memref<3x8x16xbf16, #tpu.memory_space<vmem>>, vector<1x8x16xbf16>
    %213 = vector.shape_cast %212 : vector<1x8x16xbf16> to vector<8x16xbf16>
    %cst_98 = arith.constant dense<0.000000e+00> : vector<8x256xf32>
    %214 = tpu.matmul %213, %205, %cst_98 {dimension_numbers = #tpu.dot_dimension_numbers<[1], [0], [0], [1], [0, 0, 1, 1], [], []>} : vector<8x16xbf16>, vector<16x256xbf16>, vector<8x256xf32> -> vector<8x256xf32>
    %215 = arith.addf %211, %214 : vector<8x256xf32>
    %c2_99 = arith.constant 2 : index
    %c0_100 = arith.constant 0 : index
    %c0_101 = arith.constant 0 : index
    %216 = vector.load %arg13[%c2_99, %c0_100, %c0_101] : memref<3x8x16xbf16, #tpu.memory_space<vmem>>, vector<1x8x16xbf16>
    %217 = vector.shape_cast %216 : vector<1x8x16xbf16> to vector<8x16xbf16>
    %cst_102 = arith.constant dense<0.000000e+00> : vector<8x256xf32>
    %218 = tpu.matmul %217, %205, %cst_102 {dimension_numbers = #tpu.dot_dimension_numbers<[1], [0], [0], [1], [0, 0, 1, 1], [], []>} : vector<8x16xbf16>, vector<16x256xbf16>, vector<8x256xf32> -> vector<8x256xf32>
    %c1_i32_103 = arith.constant 1 : i32
    %219 = tpu.dynamic_rotate %218 by %c1_i32_103 dim 1 : vector<8x256xf32>, i32 -> vector<8x256xf32>
    %220 = vector.broadcast %44 : vector<1x256xf32> to vector<8x256xf32>
    %221 = arith.mulf %219, %220 : vector<8x256xf32>
    %222 = arith.addf %215, %221 : vector<8x256xf32>
    %c0_104 = arith.constant 0 : index
    %c0_105 = arith.constant 0 : index
    %223 = vector.load %arg14[%c0_104, %c0_105] : memref<8x2xf32, #tpu.memory_space<vmem>>, vector<8x2xf32>
    %224 = vector.extract_strided_slice %223 {offsets = [0, 0], sizes = [8, 1], strides = [1, 1]} : vector<8x2xf32> to vector<8x1xf32>
    %225 = vector.extract_strided_slice %223 {offsets = [0, 1], sizes = [8, 1], strides = [1, 1]} : vector<8x2xf32> to vector<8x1xf32>
    %cst_106 = arith.constant dense<0.000000e+00> : vector<8xf32>
    %226 = vector.multi_reduction <add>, %222, %cst_106 [1] : vector<8x256xf32> to vector<8xf32>
    %227 = vector.shape_cast %226 : vector<8xf32> to vector<8x1xf32>
    %cst_107 = arith.constant 3.906250e-03 : f32
    %228 = vector.broadcast %cst_107 : f32 to vector<8x1xf32>
    %229 = arith.mulf %227, %228 : vector<8x1xf32>
    %230 = vector.broadcast %229 : vector<8x1xf32> to vector<8x256xf32>
    %231 = arith.subf %222, %230 : vector<8x256xf32>
    %232 = arith.mulf %231, %231 : vector<8x256xf32>
    %cst_108 = arith.constant dense<0.000000e+00> : vector<8xf32>
    %233 = vector.multi_reduction <add>, %232, %cst_108 [1] : vector<8x256xf32> to vector<8xf32>
    %234 = vector.shape_cast %233 : vector<8xf32> to vector<8x1xf32>
    %cst_109 = arith.constant 3.906250e-03 : f32
    %235 = vector.broadcast %cst_109 : f32 to vector<8x1xf32>
    %236 = arith.mulf %234, %235 : vector<8x1xf32>
    %cst_110 = arith.constant 9.99999974E-6 : f32
    %237 = vector.broadcast %cst_110 : f32 to vector<8x1xf32>
    %238 = arith.addf %236, %237 : vector<8x1xf32>
    %239 = math.rsqrt %238 : vector<8x1xf32>
    %240 = arith.mulf %239, %224 : vector<8x1xf32>
    %241 = vector.broadcast %240 : vector<8x1xf32> to vector<8x256xf32>
    %242 = arith.mulf %231, %241 : vector<8x256xf32>
    %243 = vector.broadcast %225 : vector<8x1xf32> to vector<8x256xf32>
    %244 = arith.addf %242, %243 : vector<8x256xf32>
    %c0_111 = arith.constant 0 : index
    %c0_112 = arith.constant 0 : index
    %245 = vector.load %arg15[%c0_111, %c0_112] : memref<8x16xbf16, #tpu.memory_space<vmem>>, vector<8x16xbf16>
    %cst_113 = arith.constant dense<0.000000e+00> : vector<8x256xf32>
    %246 = tpu.matmul %245, %163, %cst_113 {dimension_numbers = #tpu.dot_dimension_numbers<[1], [0], [0], [1], [0, 0, 1, 1], [], []>} : vector<8x16xbf16>, vector<16x256xbf16>, vector<8x256xf32> -> vector<8x256xf32>
    %c0_114 = arith.constant 0 : index
    %c0_115 = arith.constant 0 : index
    %247 = vector.load %arg16[%c0_114, %c0_115] : memref<8x2xf32, #tpu.memory_space<vmem>>, vector<8x2xf32>
    %248 = vector.extract_strided_slice %247 {offsets = [0, 0], sizes = [8, 1], strides = [1, 1]} : vector<8x2xf32> to vector<8x1xf32>
    %249 = vector.extract_strided_slice %247 {offsets = [0, 1], sizes = [8, 1], strides = [1, 1]} : vector<8x2xf32> to vector<8x1xf32>
    %cst_116 = arith.constant dense<0.000000e+00> : vector<8xf32>
    %250 = vector.multi_reduction <add>, %246, %cst_116 [1] : vector<8x256xf32> to vector<8xf32>
    %251 = vector.shape_cast %250 : vector<8xf32> to vector<8x1xf32>
    %cst_117 = arith.constant 3.906250e-03 : f32
    %252 = vector.broadcast %cst_117 : f32 to vector<8x1xf32>
    %253 = arith.mulf %251, %252 : vector<8x1xf32>
    %254 = vector.broadcast %253 : vector<8x1xf32> to vector<8x256xf32>
    %255 = arith.subf %246, %254 : vector<8x256xf32>
    %256 = arith.mulf %255, %255 : vector<8x256xf32>
    %cst_118 = arith.constant dense<0.000000e+00> : vector<8xf32>
    %257 = vector.multi_reduction <add>, %256, %cst_118 [1] : vector<8x256xf32> to vector<8xf32>
    %258 = vector.shape_cast %257 : vector<8xf32> to vector<8x1xf32>
    %cst_119 = arith.constant 3.906250e-03 : f32
    %259 = vector.broadcast %cst_119 : f32 to vector<8x1xf32>
    %260 = arith.mulf %258, %259 : vector<8x1xf32>
    %cst_120 = arith.constant 9.99999974E-6 : f32
    %261 = vector.broadcast %cst_120 : f32 to vector<8x1xf32>
    %262 = arith.addf %260, %261 : vector<8x1xf32>
    %263 = math.rsqrt %262 : vector<8x1xf32>
    %264 = arith.mulf %263, %248 : vector<8x1xf32>
    %265 = vector.broadcast %264 : vector<8x1xf32> to vector<8x256xf32>
    %266 = arith.mulf %255, %265 : vector<8x256xf32>
    %267 = vector.broadcast %249 : vector<8x1xf32> to vector<8x256xf32>
    %268 = arith.addf %266, %267 : vector<8x256xf32>
    %269 = arith.addf %244, %268 : vector<8x256xf32>
    %cst_121 = arith.constant 0.000000e+00 : f32
    %270 = vector.broadcast %cst_121 : f32 to vector<8x256xf32>
    %271 = arith.maximumf %269, %270 : vector<8x256xf32>
    %c1_i32_122 = arith.constant 1 : i32
    %272 = tpu.memref_slice %arg31[%c1_i32_122] : memref<3x!tpu.dma_semaphore, #tpu.memory_space<semaphore_mem>> -> memref<1x!tpu.dma_semaphore, #tpu.memory_space<semaphore_mem>>
    %273 = tpu.memref_squeeze %272 : memref<1x!tpu.dma_semaphore, #tpu.memory_space<semaphore_mem>> -> memref<!tpu.dma_semaphore, #tpu.memory_space<semaphore_mem>>
    tpu.wait_dma2 semaphore(%273 : memref<!tpu.dma_semaphore, #tpu.memory_space<semaphore_mem>>) src(%arg3 : memref<8x256xbf16, #tpu.memory_space<any>>) dst(%arg29 : memref<8x256xbf16, #tpu.memory_space<vmem>>)
    %c0_123 = arith.constant 0 : index
    %c0_124 = arith.constant 0 : index
    %274 = vector.load %arg29[%c0_123, %c0_124] : memref<8x256xbf16, #tpu.memory_space<vmem>>, vector<8x256xbf16>
    %275 = arith.extf %274 : vector<8x256xbf16> to vector<8x256xf32>
    %276 = arith.addf %271, %275 : vector<8x256xf32>
    %277 = arith.truncf %276 : vector<8x256xf32> to vector<8x256xbf16>
    %c0_125 = arith.constant 0 : index
    %c0_126 = arith.constant 0 : index
    %c0_127 = arith.constant 0 : index
    %278 = vector.load %arg17[%c0_125, %c0_126, %c0_127] : memref<3x8x8xbf16, #tpu.memory_space<vmem>>, vector<1x8x8xbf16>
    %279 = vector.shape_cast %278 : vector<1x8x8xbf16> to vector<8x8xbf16>
    %cst_128 = arith.constant dense<0.000000e+00> : vector<8x256xf32>
    %280 = tpu.matmul %279, %277, %cst_128 {dimension_numbers = #tpu.dot_dimension_numbers<[1], [0], [0], [1], [0, 0, 1, 1], [], []>} : vector<8x8xbf16>, vector<8x256xbf16>, vector<8x256xf32> -> vector<8x256xf32>
    %c255_i32_129 = arith.constant 255 : i32
    %281 = tpu.dynamic_rotate %280 by %c255_i32_129 dim 1 : vector<8x256xf32>, i32 -> vector<8x256xf32>
    %282 = vector.broadcast %33 : vector<1x256xf32> to vector<8x256xf32>
    %283 = arith.mulf %281, %282 : vector<8x256xf32>
    %c1_130 = arith.constant 1 : index
    %c0_131 = arith.constant 0 : index
    %c0_132 = arith.constant 0 : index
    %284 = vector.load %arg17[%c1_130, %c0_131, %c0_132] : memref<3x8x8xbf16, #tpu.memory_space<vmem>>, vector<1x8x8xbf16>
    %285 = vector.shape_cast %284 : vector<1x8x8xbf16> to vector<8x8xbf16>
    %cst_133 = arith.constant dense<0.000000e+00> : vector<8x256xf32>
    %286 = tpu.matmul %285, %277, %cst_133 {dimension_numbers = #tpu.dot_dimension_numbers<[1], [0], [0], [1], [0, 0, 1, 1], [], []>} : vector<8x8xbf16>, vector<8x256xbf16>, vector<8x256xf32> -> vector<8x256xf32>
    %287 = arith.addf %283, %286 : vector<8x256xf32>
    %c2_134 = arith.constant 2 : index
    %c0_135 = arith.constant 0 : index
    %c0_136 = arith.constant 0 : index
    %288 = vector.load %arg17[%c2_134, %c0_135, %c0_136] : memref<3x8x8xbf16, #tpu.memory_space<vmem>>, vector<1x8x8xbf16>
    %289 = vector.shape_cast %288 : vector<1x8x8xbf16> to vector<8x8xbf16>
    %cst_137 = arith.constant dense<0.000000e+00> : vector<8x256xf32>
    %290 = tpu.matmul %289, %277, %cst_137 {dimension_numbers = #tpu.dot_dimension_numbers<[1], [0], [0], [1], [0, 0, 1, 1], [], []>} : vector<8x8xbf16>, vector<8x256xbf16>, vector<8x256xf32> -> vector<8x256xf32>
    %c1_i32_138 = arith.constant 1 : i32
    %291 = tpu.dynamic_rotate %290 by %c1_i32_138 dim 1 : vector<8x256xf32>, i32 -> vector<8x256xf32>
    %292 = vector.broadcast %44 : vector<1x256xf32> to vector<8x256xf32>
    %293 = arith.mulf %291, %292 : vector<8x256xf32>
    %294 = arith.addf %287, %293 : vector<8x256xf32>
    %c0_139 = arith.constant 0 : index
    %c0_140 = arith.constant 0 : index
    %295 = vector.load %arg18[%c0_139, %c0_140] : memref<8x2xf32, #tpu.memory_space<vmem>>, vector<8x2xf32>
    %296 = vector.extract_strided_slice %295 {offsets = [0, 0], sizes = [8, 1], strides = [1, 1]} : vector<8x2xf32> to vector<8x1xf32>
    %297 = vector.extract_strided_slice %295 {offsets = [0, 1], sizes = [8, 1], strides = [1, 1]} : vector<8x2xf32> to vector<8x1xf32>
    %cst_141 = arith.constant dense<0.000000e+00> : vector<8xf32>
    %298 = vector.multi_reduction <add>, %294, %cst_141 [1] : vector<8x256xf32> to vector<8xf32>
    %299 = vector.shape_cast %298 : vector<8xf32> to vector<8x1xf32>
    %cst_142 = arith.constant 3.906250e-03 : f32
    %300 = vector.broadcast %cst_142 : f32 to vector<8x1xf32>
    %301 = arith.mulf %299, %300 : vector<8x1xf32>
    %302 = vector.broadcast %301 : vector<8x1xf32> to vector<8x256xf32>
    %303 = arith.subf %294, %302 : vector<8x256xf32>
    %304 = arith.mulf %303, %303 : vector<8x256xf32>
    %cst_143 = arith.constant dense<0.000000e+00> : vector<8xf32>
    %305 = vector.multi_reduction <add>, %304, %cst_143 [1] : vector<8x256xf32> to vector<8xf32>
    %306 = vector.shape_cast %305 : vector<8xf32> to vector<8x1xf32>
    %cst_144 = arith.constant 3.906250e-03 : f32
    %307 = vector.broadcast %cst_144 : f32 to vector<8x1xf32>
    %308 = arith.mulf %306, %307 : vector<8x1xf32>
    %cst_145 = arith.constant 9.99999974E-6 : f32
    %309 = vector.broadcast %cst_145 : f32 to vector<8x1xf32>
    %310 = arith.addf %308, %309 : vector<8x1xf32>
    %311 = math.rsqrt %310 : vector<8x1xf32>
    %312 = arith.mulf %311, %296 : vector<8x1xf32>
    %313 = vector.broadcast %312 : vector<8x1xf32> to vector<8x256xf32>
    %314 = arith.mulf %303, %313 : vector<8x256xf32>
    %315 = vector.broadcast %297 : vector<8x1xf32> to vector<8x256xf32>
    %316 = arith.addf %314, %315 : vector<8x256xf32>
    %cst_146 = arith.constant 0.000000e+00 : f32
    %317 = vector.broadcast %cst_146 : f32 to vector<8x256xf32>
    %318 = arith.maximumf %316, %317 : vector<8x256xf32>
    %319 = arith.truncf %318 : vector<8x256xf32> to vector<8x256xbf16>
    %c0_147 = arith.constant 0 : index
    %c0_148 = arith.constant 0 : index
    %c0_149 = arith.constant 0 : index
    %320 = vector.load %arg19[%c0_147, %c0_148, %c0_149] : memref<3x8x8xbf16, #tpu.memory_space<vmem>>, vector<1x8x8xbf16>
    %321 = vector.shape_cast %320 : vector<1x8x8xbf16> to vector<8x8xbf16>
    %cst_150 = arith.constant dense<0.000000e+00> : vector<8x256xf32>
    %322 = tpu.matmul %321, %319, %cst_150 {dimension_numbers = #tpu.dot_dimension_numbers<[1], [0], [0], [1], [0, 0, 1, 1], [], []>} : vector<8x8xbf16>, vector<8x256xbf16>, vector<8x256xf32> -> vector<8x256xf32>
    %c255_i32_151 = arith.constant 255 : i32
    %323 = tpu.dynamic_rotate %322 by %c255_i32_151 dim 1 : vector<8x256xf32>, i32 -> vector<8x256xf32>
    %324 = vector.broadcast %33 : vector<1x256xf32> to vector<8x256xf32>
    %325 = arith.mulf %323, %324 : vector<8x256xf32>
    %c1_152 = arith.constant 1 : index
    %c0_153 = arith.constant 0 : index
    %c0_154 = arith.constant 0 : index
    %326 = vector.load %arg19[%c1_152, %c0_153, %c0_154] : memref<3x8x8xbf16, #tpu.memory_space<vmem>>, vector<1x8x8xbf16>
    %327 = vector.shape_cast %326 : vector<1x8x8xbf16> to vector<8x8xbf16>
    %cst_155 = arith.constant dense<0.000000e+00> : vector<8x256xf32>
    %328 = tpu.matmul %327, %319, %cst_155 {dimension_numbers = #tpu.dot_dimension_numbers<[1], [0], [0], [1], [0, 0, 1, 1], [], []>} : vector<8x8xbf16>, vector<8x256xbf16>, vector<8x256xf32> -> vector<8x256xf32>
    %329 = arith.addf %325, %328 : vector<8x256xf32>
    %c2_156 = arith.constant 2 : index
    %c0_157 = arith.constant 0 : index
    %c0_158 = arith.constant 0 : index
    %330 = vector.load %arg19[%c2_156, %c0_157, %c0_158] : memref<3x8x8xbf16, #tpu.memory_space<vmem>>, vector<1x8x8xbf16>
    %331 = vector.shape_cast %330 : vector<1x8x8xbf16> to vector<8x8xbf16>
    %cst_159 = arith.constant dense<0.000000e+00> : vector<8x256xf32>
    %332 = tpu.matmul %331, %319, %cst_159 {dimension_numbers = #tpu.dot_dimension_numbers<[1], [0], [0], [1], [0, 0, 1, 1], [], []>} : vector<8x8xbf16>, vector<8x256xbf16>, vector<8x256xf32> -> vector<8x256xf32>
    %c1_i32_160 = arith.constant 1 : i32
    %333 = tpu.dynamic_rotate %332 by %c1_i32_160 dim 1 : vector<8x256xf32>, i32 -> vector<8x256xf32>
    %334 = vector.broadcast %44 : vector<1x256xf32> to vector<8x256xf32>
    %335 = arith.mulf %333, %334 : vector<8x256xf32>
    %336 = arith.addf %329, %335 : vector<8x256xf32>
    %c0_161 = arith.constant 0 : index
    %c0_162 = arith.constant 0 : index
    %337 = vector.load %arg20[%c0_161, %c0_162] : memref<8x2xf32, #tpu.memory_space<vmem>>, vector<8x2xf32>
    %338 = vector.extract_strided_slice %337 {offsets = [0, 0], sizes = [8, 1], strides = [1, 1]} : vector<8x2xf32> to vector<8x1xf32>
    %339 = vector.extract_strided_slice %337 {offsets = [0, 1], sizes = [8, 1], strides = [1, 1]} : vector<8x2xf32> to vector<8x1xf32>
    %cst_163 = arith.constant dense<0.000000e+00> : vector<8xf32>
    %340 = vector.multi_reduction <add>, %336, %cst_163 [1] : vector<8x256xf32> to vector<8xf32>
    %341 = vector.shape_cast %340 : vector<8xf32> to vector<8x1xf32>
    %cst_164 = arith.constant 3.906250e-03 : f32
    %342 = vector.broadcast %cst_164 : f32 to vector<8x1xf32>
    %343 = arith.mulf %341, %342 : vector<8x1xf32>
    %344 = vector.broadcast %343 : vector<8x1xf32> to vector<8x256xf32>
    %345 = arith.subf %336, %344 : vector<8x256xf32>
    %346 = arith.mulf %345, %345 : vector<8x256xf32>
    %cst_165 = arith.constant dense<0.000000e+00> : vector<8xf32>
    %347 = vector.multi_reduction <add>, %346, %cst_165 [1] : vector<8x256xf32> to vector<8xf32>
    %348 = vector.shape_cast %347 : vector<8xf32> to vector<8x1xf32>
    %cst_166 = arith.constant 3.906250e-03 : f32
    %349 = vector.broadcast %cst_166 : f32 to vector<8x1xf32>
    %350 = arith.mulf %348, %349 : vector<8x1xf32>
    %cst_167 = arith.constant 9.99999974E-6 : f32
    %351 = vector.broadcast %cst_167 : f32 to vector<8x1xf32>
    %352 = arith.addf %350, %351 : vector<8x1xf32>
    %353 = math.rsqrt %352 : vector<8x1xf32>
    %354 = arith.mulf %353, %338 : vector<8x1xf32>
    %355 = vector.broadcast %354 : vector<8x1xf32> to vector<8x256xf32>
    %356 = arith.mulf %345, %355 : vector<8x256xf32>
    %357 = vector.broadcast %339 : vector<8x1xf32> to vector<8x256xf32>
    %358 = arith.addf %356, %357 : vector<8x256xf32>
    %359 = arith.addf %358, %276 : vector<8x256xf32>
    %cst_168 = arith.constant 0.000000e+00 : f32
    %360 = vector.broadcast %cst_168 : f32 to vector<8x256xf32>
    %361 = arith.maximumf %359, %360 : vector<8x256xf32>
    %c2_i32_169 = arith.constant 2 : i32
    %362 = tpu.memref_slice %arg31[%c2_i32_169] : memref<3x!tpu.dma_semaphore, #tpu.memory_space<semaphore_mem>> -> memref<1x!tpu.dma_semaphore, #tpu.memory_space<semaphore_mem>>
    %363 = tpu.memref_squeeze %362 : memref<1x!tpu.dma_semaphore, #tpu.memory_space<semaphore_mem>> -> memref<!tpu.dma_semaphore, #tpu.memory_space<semaphore_mem>>
    tpu.wait_dma2 semaphore(%363 : memref<!tpu.dma_semaphore, #tpu.memory_space<semaphore_mem>>) src(%arg4 : memref<8x256xbf16, #tpu.memory_space<any>>) dst(%arg30 : memref<8x256xbf16, #tpu.memory_space<vmem>>)
    %c0_170 = arith.constant 0 : index
    %c0_171 = arith.constant 0 : index
    %364 = vector.load %arg30[%c0_170, %c0_171] : memref<8x256xbf16, #tpu.memory_space<vmem>>, vector<8x256xbf16>
    %365 = arith.extf %364 : vector<8x256xbf16> to vector<8x256xf32>
    %366 = arith.addf %361, %365 : vector<8x256xf32>
    %367 = arith.truncf %366 : vector<8x256xf32> to vector<8x256xbf16>
    %c0_172 = arith.constant 0 : index
    %c0_173 = arith.constant 0 : index
    %c0_174 = arith.constant 0 : index
    %368 = vector.load %arg21[%c0_172, %c0_173, %c0_174] : memref<3x8x8xbf16, #tpu.memory_space<vmem>>, vector<1x8x8xbf16>
    %369 = vector.shape_cast %368 : vector<1x8x8xbf16> to vector<8x8xbf16>
    %cst_175 = arith.constant dense<0.000000e+00> : vector<8x256xf32>
    %370 = tpu.matmul %369, %367, %cst_175 {dimension_numbers = #tpu.dot_dimension_numbers<[1], [0], [0], [1], [0, 0, 1, 1], [], []>} : vector<8x8xbf16>, vector<8x256xbf16>, vector<8x256xf32> -> vector<8x256xf32>
    %c255_i32_176 = arith.constant 255 : i32
    %371 = tpu.dynamic_rotate %370 by %c255_i32_176 dim 1 : vector<8x256xf32>, i32 -> vector<8x256xf32>
    %372 = vector.broadcast %33 : vector<1x256xf32> to vector<8x256xf32>
    %373 = arith.mulf %371, %372 : vector<8x256xf32>
    %c1_177 = arith.constant 1 : index
    %c0_178 = arith.constant 0 : index
    %c0_179 = arith.constant 0 : index
    %374 = vector.load %arg21[%c1_177, %c0_178, %c0_179] : memref<3x8x8xbf16, #tpu.memory_space<vmem>>, vector<1x8x8xbf16>
    %375 = vector.shape_cast %374 : vector<1x8x8xbf16> to vector<8x8xbf16>
    %cst_180 = arith.constant dense<0.000000e+00> : vector<8x256xf32>
    %376 = tpu.matmul %375, %367, %cst_180 {dimension_numbers = #tpu.dot_dimension_numbers<[1], [0], [0], [1], [0, 0, 1, 1], [], []>} : vector<8x8xbf16>, vector<8x256xbf16>, vector<8x256xf32> -> vector<8x256xf32>
    %377 = arith.addf %373, %376 : vector<8x256xf32>
    %c2_181 = arith.constant 2 : index
    %c0_182 = arith.constant 0 : index
    %c0_183 = arith.constant 0 : index
    %378 = vector.load %arg21[%c2_181, %c0_182, %c0_183] : memref<3x8x8xbf16, #tpu.memory_space<vmem>>, vector<1x8x8xbf16>
    %379 = vector.shape_cast %378 : vector<1x8x8xbf16> to vector<8x8xbf16>
    %cst_184 = arith.constant dense<0.000000e+00> : vector<8x256xf32>
    %380 = tpu.matmul %379, %367, %cst_184 {dimension_numbers = #tpu.dot_dimension_numbers<[1], [0], [0], [1], [0, 0, 1, 1], [], []>} : vector<8x8xbf16>, vector<8x256xbf16>, vector<8x256xf32> -> vector<8x256xf32>
    %c1_i32_185 = arith.constant 1 : i32
    %381 = tpu.dynamic_rotate %380 by %c1_i32_185 dim 1 : vector<8x256xf32>, i32 -> vector<8x256xf32>
    %382 = vector.broadcast %44 : vector<1x256xf32> to vector<8x256xf32>
    %383 = arith.mulf %381, %382 : vector<8x256xf32>
    %384 = arith.addf %377, %383 : vector<8x256xf32>
    %c0_186 = arith.constant 0 : index
    %c0_187 = arith.constant 0 : index
    %385 = vector.load %arg22[%c0_186, %c0_187] : memref<8x2xf32, #tpu.memory_space<vmem>>, vector<8x2xf32>
    %386 = vector.extract_strided_slice %385 {offsets = [0, 0], sizes = [8, 1], strides = [1, 1]} : vector<8x2xf32> to vector<8x1xf32>
    %387 = vector.extract_strided_slice %385 {offsets = [0, 1], sizes = [8, 1], strides = [1, 1]} : vector<8x2xf32> to vector<8x1xf32>
    %cst_188 = arith.constant dense<0.000000e+00> : vector<8xf32>
    %388 = vector.multi_reduction <add>, %384, %cst_188 [1] : vector<8x256xf32> to vector<8xf32>
    %389 = vector.shape_cast %388 : vector<8xf32> to vector<8x1xf32>
    %cst_189 = arith.constant 3.906250e-03 : f32
    %390 = vector.broadcast %cst_189 : f32 to vector<8x1xf32>
    %391 = arith.mulf %389, %390 : vector<8x1xf32>
    %392 = vector.broadcast %391 : vector<8x1xf32> to vector<8x256xf32>
    %393 = arith.subf %384, %392 : vector<8x256xf32>
    %394 = arith.mulf %393, %393 : vector<8x256xf32>
    %cst_190 = arith.constant dense<0.000000e+00> : vector<8xf32>
    %395 = vector.multi_reduction <add>, %394, %cst_190 [1] : vector<8x256xf32> to vector<8xf32>
    %396 = vector.shape_cast %395 : vector<8xf32> to vector<8x1xf32>
    %cst_191 = arith.constant 3.906250e-03 : f32
    %397 = vector.broadcast %cst_191 : f32 to vector<8x1xf32>
    %398 = arith.mulf %396, %397 : vector<8x1xf32>
    %cst_192 = arith.constant 9.99999974E-6 : f32
    %399 = vector.broadcast %cst_192 : f32 to vector<8x1xf32>
    %400 = arith.addf %398, %399 : vector<8x1xf32>
    %401 = math.rsqrt %400 : vector<8x1xf32>
    %402 = arith.mulf %401, %386 : vector<8x1xf32>
    %403 = vector.broadcast %402 : vector<8x1xf32> to vector<8x256xf32>
    %404 = arith.mulf %393, %403 : vector<8x256xf32>
    %405 = vector.broadcast %387 : vector<8x1xf32> to vector<8x256xf32>
    %406 = arith.addf %404, %405 : vector<8x256xf32>
    %cst_193 = arith.constant 0.000000e+00 : f32
    %407 = vector.broadcast %cst_193 : f32 to vector<8x256xf32>
    %408 = arith.maximumf %406, %407 : vector<8x256xf32>
    %409 = arith.truncf %408 : vector<8x256xf32> to vector<8x256xbf16>
    %c0_194 = arith.constant 0 : index
    %c0_195 = arith.constant 0 : index
    %c0_196 = arith.constant 0 : index
    %410 = vector.load %arg23[%c0_194, %c0_195, %c0_196] : memref<3x4x8xbf16, #tpu.memory_space<vmem>>, vector<1x4x8xbf16>
    %411 = vector.shape_cast %410 : vector<1x4x8xbf16> to vector<4x8xbf16>
    %cst_197 = arith.constant dense<0.000000e+00> : vector<4x256xf32>
    %412 = tpu.matmul %411, %409, %cst_197 {dimension_numbers = #tpu.dot_dimension_numbers<[1], [0], [0], [1], [0, 0, 1, 1], [], []>} : vector<4x8xbf16>, vector<8x256xbf16>, vector<4x256xf32> -> vector<4x256xf32>
    %c255_i32_198 = arith.constant 255 : i32
    %413 = tpu.dynamic_rotate %412 by %c255_i32_198 dim 1 : vector<4x256xf32>, i32 -> vector<4x256xf32>
    %414 = vector.broadcast %33 : vector<1x256xf32> to vector<4x256xf32>
    %415 = arith.mulf %413, %414 : vector<4x256xf32>
    %c1_199 = arith.constant 1 : index
    %c0_200 = arith.constant 0 : index
    %c0_201 = arith.constant 0 : index
    %416 = vector.load %arg23[%c1_199, %c0_200, %c0_201] : memref<3x4x8xbf16, #tpu.memory_space<vmem>>, vector<1x4x8xbf16>
    %417 = vector.shape_cast %416 : vector<1x4x8xbf16> to vector<4x8xbf16>
    %cst_202 = arith.constant dense<0.000000e+00> : vector<4x256xf32>
    %418 = tpu.matmul %417, %409, %cst_202 {dimension_numbers = #tpu.dot_dimension_numbers<[1], [0], [0], [1], [0, 0, 1, 1], [], []>} : vector<4x8xbf16>, vector<8x256xbf16>, vector<4x256xf32> -> vector<4x256xf32>
    %419 = arith.addf %415, %418 : vector<4x256xf32>
    %c2_203 = arith.constant 2 : index
    %c0_204 = arith.constant 0 : index
    %c0_205 = arith.constant 0 : index
    %420 = vector.load %arg23[%c2_203, %c0_204, %c0_205] : memref<3x4x8xbf16, #tpu.memory_space<vmem>>, vector<1x4x8xbf16>
    %421 = vector.shape_cast %420 : vector<1x4x8xbf16> to vector<4x8xbf16>
    %cst_206 = arith.constant dense<0.000000e+00> : vector<4x256xf32>
    %422 = tpu.matmul %421, %409, %cst_206 {dimension_numbers = #tpu.dot_dimension_numbers<[1], [0], [0], [1], [0, 0, 1, 1], [], []>} : vector<4x8xbf16>, vector<8x256xbf16>, vector<4x256xf32> -> vector<4x256xf32>
    %c1_i32_207 = arith.constant 1 : i32
    %423 = tpu.dynamic_rotate %422 by %c1_i32_207 dim 1 : vector<4x256xf32>, i32 -> vector<4x256xf32>
    %424 = vector.broadcast %44 : vector<1x256xf32> to vector<4x256xf32>
    %425 = arith.mulf %423, %424 : vector<4x256xf32>
    %426 = arith.addf %419, %425 : vector<4x256xf32>
    %c0_208 = arith.constant 0 : index
    %c0_209 = arith.constant 0 : index
    %427 = vector.load %arg24[%c0_208, %c0_209] : memref<4x2xf32, #tpu.memory_space<vmem>>, vector<4x2xf32>
    %428 = vector.extract_strided_slice %427 {offsets = [0, 0], sizes = [4, 1], strides = [1, 1]} : vector<4x2xf32> to vector<4x1xf32>
    %429 = vector.extract_strided_slice %427 {offsets = [0, 1], sizes = [4, 1], strides = [1, 1]} : vector<4x2xf32> to vector<4x1xf32>
    %cst_210 = arith.constant dense<0.000000e+00> : vector<4xf32>
    %430 = vector.multi_reduction <add>, %426, %cst_210 [1] : vector<4x256xf32> to vector<4xf32>
    %431 = vector.shape_cast %430 : vector<4xf32> to vector<4x1xf32>
    %cst_211 = arith.constant 3.906250e-03 : f32
    %432 = vector.broadcast %cst_211 : f32 to vector<4x1xf32>
    %433 = arith.mulf %431, %432 : vector<4x1xf32>
    %434 = vector.broadcast %433 : vector<4x1xf32> to vector<4x256xf32>
    %435 = arith.subf %426, %434 : vector<4x256xf32>
    %436 = arith.mulf %435, %435 : vector<4x256xf32>
    %cst_212 = arith.constant dense<0.000000e+00> : vector<4xf32>
    %437 = vector.multi_reduction <add>, %436, %cst_212 [1] : vector<4x256xf32> to vector<4xf32>
    %438 = vector.shape_cast %437 : vector<4xf32> to vector<4x1xf32>
    %cst_213 = arith.constant 3.906250e-03 : f32
    %439 = vector.broadcast %cst_213 : f32 to vector<4x1xf32>
    %440 = arith.mulf %438, %439 : vector<4x1xf32>
    %cst_214 = arith.constant 9.99999974E-6 : f32
    %441 = vector.broadcast %cst_214 : f32 to vector<4x1xf32>
    %442 = arith.addf %440, %441 : vector<4x1xf32>
    %443 = math.rsqrt %442 : vector<4x1xf32>
    %444 = arith.mulf %443, %428 : vector<4x1xf32>
    %445 = vector.broadcast %444 : vector<4x1xf32> to vector<4x256xf32>
    %446 = arith.mulf %435, %445 : vector<4x256xf32>
    %447 = vector.broadcast %429 : vector<4x1xf32> to vector<4x256xf32>
    %448 = arith.addf %446, %447 : vector<4x256xf32>
    %c0_215 = arith.constant 0 : index
    %c0_216 = arith.constant 0 : index
    %449 = vector.load %arg25[%c0_215, %c0_216] : memref<4x8xbf16, #tpu.memory_space<vmem>>, vector<4x8xbf16>
    %cst_217 = arith.constant dense<0.000000e+00> : vector<4x256xf32>
    %450 = tpu.matmul %449, %367, %cst_217 {dimension_numbers = #tpu.dot_dimension_numbers<[1], [0], [0], [1], [0, 0, 1, 1], [], []>} : vector<4x8xbf16>, vector<8x256xbf16>, vector<4x256xf32> -> vector<4x256xf32>
    %c0_218 = arith.constant 0 : index
    %c0_219 = arith.constant 0 : index
    %451 = vector.load %arg26[%c0_218, %c0_219] : memref<4x2xf32, #tpu.memory_space<vmem>>, vector<4x2xf32>
    %452 = vector.extract_strided_slice %451 {offsets = [0, 0], sizes = [4, 1], strides = [1, 1]} : vector<4x2xf32> to vector<4x1xf32>
    %453 = vector.extract_strided_slice %451 {offsets = [0, 1], sizes = [4, 1], strides = [1, 1]} : vector<4x2xf32> to vector<4x1xf32>
    %cst_220 = arith.constant dense<0.000000e+00> : vector<4xf32>
    %454 = vector.multi_reduction <add>, %450, %cst_220 [1] : vector<4x256xf32> to vector<4xf32>
    %455 = vector.shape_cast %454 : vector<4xf32> to vector<4x1xf32>
    %cst_221 = arith.constant 3.906250e-03 : f32
    %456 = vector.broadcast %cst_221 : f32 to vector<4x1xf32>
    %457 = arith.mulf %455, %456 : vector<4x1xf32>
    %458 = vector.broadcast %457 : vector<4x1xf32> to vector<4x256xf32>
    %459 = arith.subf %450, %458 : vector<4x256xf32>
    %460 = arith.mulf %459, %459 : vector<4x256xf32>
    %cst_222 = arith.constant dense<0.000000e+00> : vector<4xf32>
    %461 = vector.multi_reduction <add>, %460, %cst_222 [1] : vector<4x256xf32> to vector<4xf32>
    %462 = vector.shape_cast %461 : vector<4xf32> to vector<4x1xf32>
    %cst_223 = arith.constant 3.906250e-03 : f32
    %463 = vector.broadcast %cst_223 : f32 to vector<4x1xf32>
    %464 = arith.mulf %462, %463 : vector<4x1xf32>
    %cst_224 = arith.constant 9.99999974E-6 : f32
    %465 = vector.broadcast %cst_224 : f32 to vector<4x1xf32>
    %466 = arith.addf %464, %465 : vector<4x1xf32>
    %467 = math.rsqrt %466 : vector<4x1xf32>
    %468 = arith.mulf %467, %452 : vector<4x1xf32>
    %469 = vector.broadcast %468 : vector<4x1xf32> to vector<4x256xf32>
    %470 = arith.mulf %459, %469 : vector<4x256xf32>
    %471 = vector.broadcast %453 : vector<4x1xf32> to vector<4x256xf32>
    %472 = arith.addf %470, %471 : vector<4x256xf32>
    %473 = arith.addf %448, %472 : vector<4x256xf32>
    %cst_225 = arith.constant 0.000000e+00 : f32
    %474 = vector.broadcast %cst_225 : f32 to vector<4x256xf32>
    %475 = arith.maximumf %473, %474 : vector<4x256xf32>
    %c0_226 = arith.constant 0 : index
    %c0_227 = arith.constant 0 : index
    %476 = vector.load %arg27[%c0_226, %c0_227] : memref<4x256xf32, #tpu.memory_space<vmem>>, vector<4x256xf32>
    tpu.vector_store %arg27[%c0_226, %c0_227], %475 {strides = array<i32>} : memref<4x256xf32, #tpu.memory_space<vmem>>, vector<4x256xf32>,
    return
  }
}

</mosaic_0001>

<llo_original>
// kernel: _lambda_.1
$region0: #{_lambda_.1}
  #allocation0 [shape = 'u32[]', space=smem, size = 0x4, offset = 0x4, fixed_abs, tag = 'smem constant byte address 0x4 - core index']
  #allocation1 [shape = 'u32[144,128]{1,0:T(1,128)}', space=vmem, size = 0x12000, scoped, tag = 'internal scratch']
  #allocation2 [shape = 'bf16[16,256]{1,0:T(16,128)(2,1)}', space=vmem, size = 0x2000, scoped, tag = 'scratch operand']
  #allocation3 [shape = 'bf16[8,256]{1,0:T(8,128)(2,1)}', space=vmem, size = 0x1000, scoped, tag = 'scratch operand']
  #allocation4 [shape = 'bf16[8,256]{1,0:T(8,128)(2,1)}', space=vmem, size = 0x1000, scoped, tag = 'scratch operand']
  #allocation5 [shape = 's32[3]{0}', space=sflag, size = 0xc, scoped, tag = 'scratch operand']
  #allocation8 [shape = 's32[]', space=sflag, size = 0x4, offset = 0, fixed_abs, tag = 'sflag constant byte address 0x0 - dummy sync flag']
  #allocation9 [shape = 's32[]', space=sflag, size = 0x4, offset = 0, fixed_abs, tag = 'sflag constant byte address 0x0 - dummy sync flag']
  #allocation10 [shape = 's32[]', space=sflag, size = 0x4, offset = 0, fixed_abs, tag = 'sflag constant byte address 0x0 - dummy sync flag']
  %s0 = inlined_call_operand.vmem [shape: f32[32,256], index: 0, kind: input, shape index: {}]
  %s1 = inlined_call_operand.vmem [shape: bf16[32,256], index: 1, kind: input, shape index: {}]
  %s2 = inlined_call_operand.vmem [shape: bf16[16,256], index: 2, kind: input, shape index: {}]
  %s3 = inlined_call_operand.vmem [shape: bf16[8,256], index: 3, kind: input, shape index: {}]
  %s4 = inlined_call_operand.vmem [shape: bf16[8,256], index: 4, kind: input, shape index: {}]
  %s5 = inlined_call_operand.vmem [shape: bf16[3,32,32], index: 5, kind: input, shape index: {}]
  %s6 = inlined_call_operand.vmem [shape: f32[32,2], index: 6, kind: input, shape index: {}]
  %s7 = inlined_call_operand.vmem [shape: bf16[3,16,32], index: 7, kind: input, shape index: {}]
  %s8 = inlined_call_operand.vmem [shape: f32[16,2], index: 8, kind: input, shape index: {}]
  %s9 = inlined_call_operand.vmem [shape: bf16[16,32], index: 9, kind: input, shape index: {}]
  %s10 = inlined_call_operand.vmem [shape: f32[16,2], index: 10, kind: input, shape index: {}]
  %s11 = inlined_call_operand.vmem [shape: bf16[3,16,16], index: 11, kind: input, shape index: {}]
  %s12 = inlined_call_operand.vmem [shape: f32[16,2], index: 12, kind: input, shape index: {}]
  %s13 = inlined_call_operand.vmem [shape: bf16[3,8,16], index: 13, kind: input, shape index: {}]
  %s14 = inlined_call_operand.vmem [shape: f32[8,2], index: 14, kind: input, shape index: {}]
  %s15 = inlined_call_operand.vmem [shape: bf16[8,16], index: 15, kind: input, shape index: {}]
  %s16 = inlined_call_operand.vmem [shape: f32[8,2], index: 16, kind: input, shape index: {}]
  %s17 = inlined_call_operand.vmem [shape: bf16[3,8,8], index: 17, kind: input, shape index: {}]
  %s18 = inlined_call_operand.vmem [shape: f32[8,2], index: 18, kind: input, shape index: {}]
  %s19 = inlined_call_operand.vmem [shape: bf16[3,8,8], index: 19, kind: input, shape index: {}]
  %s20 = inlined_call_operand.vmem [shape: f32[8,2], index: 20, kind: input, shape index: {}]
  %s21 = inlined_call_operand.vmem [shape: bf16[3,8,8], index: 21, kind: input, shape index: {}]
  %s22 = inlined_call_operand.vmem [shape: f32[8,2], index: 22, kind: input, shape index: {}]
  %s23 = inlined_call_operand.vmem [shape: bf16[3,4,8], index: 23, kind: input, shape index: {}]
  %s24 = inlined_call_operand.vmem [shape: f32[4,2], index: 24, kind: input, shape index: {}]
  %s25 = inlined_call_operand.vmem [shape: bf16[4,8], index: 25, kind: input, shape index: {}]
  %s26 = inlined_call_operand.vmem [shape: f32[4,2], index: 26, kind: input, shape index: {}]
  %s27 = inlined_call_operand.hbm [shape: f32[4,256], index: 27, kind: output, shape index: {}]
  %s28 = sld [smem:[#allocation0]]
  $region211: #{_lambda_.1} parent=0
    _
  %s30 = ssub.s32 1, %s28
  %s31 = scalar_select 0, %s30, %s28
  $region1: #{_lambda_.1} parent=0
    #allocation6 [shape = 'u8[4096]{0}', space=vmem, size = 0x1000, scoped, tag = 'output window, operand 0, single buffered']
    #allocation7 [shape = 's32[1]{0}', space=sflag, size = 0x4, scoped, tag = 'scoped memory for _lambda_.1']
    %32 = vsyncpa [#allocation7], 0
    // Predicated region
    $region2: #{_lambda_.1} parent=1 // pred_check
      _
    $region3: #{_lambda_.1} parent=1 // pred_check_branch
      %34 = sbr.rel (0) target = $region5
    $region4: #{_lambda_.1} parent=1 // pred_region
      _
    $region5: #{_lambda_.1} parent=1 // pred_fallthru
      _
    // Predicated region
    $region6: #{_lambda_.1} parent=1 // pred_check
      _
    $region7: #{_lambda_.1} parent=1 // pred_check_branch
      %36 = sbr.rel (0) target = $region9
    $region8: #{_lambda_.1} parent=1 // pred_region
      _
    $region9: #{_lambda_.1} parent=1 // pred_fallthru
      _
    // Predicated region
    $region10: #{_lambda_.1} parent=1 // pred_check
      _
    $region11: #{_lambda_.1} parent=1 // pred_check_branch
      %38 = sbr.rel (0) target = $region13
    $region12: #{_lambda_.1} parent=1 // pred_region
      _
    $region13: #{_lambda_.1} parent=1 // pred_fallthru
      _
    // Predicated region
    $region14: #{_lambda_.1} parent=1 // pred_check
      _
    $region15: #{_lambda_.1} parent=1 // pred_check_branch
      %40 = sbr.rel (0) target = $region17
    $region16: #{_lambda_.1} parent=1 // pred_region
      _
    $region17: #{_lambda_.1} parent=1 // pred_fallthru
      _
    // Predicated region
    $region18: #{_lambda_.1} parent=1 // pred_check
      _
    $region19: #{_lambda_.1} parent=1 // pred_check_branch
      %42 = sbr.rel (0) target = $region21
    $region20: #{_lambda_.1} parent=1 // pred_region
      _
    $region21: #{_lambda_.1} parent=1 // pred_fallthru
      _
    // Predicated region
    $region22: #{_lambda_.1} parent=1 // pred_check
      _
    $region23: #{_lambda_.1} parent=1 // pred_check_branch
      %44 = sbr.rel (0) target = $region25
    $region24: #{_lambda_.1} parent=1 // pred_region
      _
    $region25: #{_lambda_.1} parent=1 // pred_fallthru
      _
    // Predicated region
    $region26: #{_lambda_.1} parent=1 // pred_check
      _
    $region27: #{_lambda_.1} parent=1 // pred_check_branch
      %46 = sbr.rel (0) target = $region29
    $region28: #{_lambda_.1} parent=1 // pred_region
      _
    $region29: #{_lambda_.1} parent=1 // pred_fallthru
      _
    // Predicated region
    $region30: #{_lambda_.1} parent=1 // pred_check
      _
    $region31: #{_lambda_.1} parent=1 // pred_check_branch
      %48 = sbr.rel (0) target = $region33
    $region32: #{_lambda_.1} parent=1 // pred_region
      _
    $region33: #{_lambda_.1} parent=1 // pred_fallthru
      _
    // Predicated region
    $region34: #{_lambda_.1} parent=1 // pred_check
      _
    $region35: #{_lambda_.1} parent=1 // pred_check_branch
      %50 = sbr.rel (0) target = $region37
    $region36: #{_lambda_.1} parent=1 // pred_region
      _
    $region37: #{_lambda_.1} parent=1 // pred_fallthru
      _
    // Predicated region
    $region38: #{_lambda_.1} parent=1 // pred_check
      _
    $region39: #{_lambda_.1} parent=1 // pred_check_branch
      %52 = sbr.rel (0) target = $region41
    $region40: #{_lambda_.1} parent=1 // pred_region
      _
    $region41: #{_lambda_.1} parent=1 // pred_fallthru
      _
    // Predicated region
    $region42: #{_lambda_.1} parent=1 // pred_check
      _
    $region43: #{_lambda_.1} parent=1 // pred_check_branch
      %54 = sbr.rel (0) target = $region45
    $region44: #{_lambda_.1} parent=1 // pred_region
      _
    $region45: #{_lambda_.1} parent=1 // pred_fallthru
      _
    // Predicated region
    $region46: #{_lambda_.1} parent=1 // pred_check
      _
    $region47: #{_lambda_.1} parent=1 // pred_check_branch
      %56 = sbr.rel (0) target = $region49
    $region48: #{_lambda_.1} parent=1 // pred_region
      _
    $region49: #{_lambda_.1} parent=1 // pred_fallthru
      _
    // Predicated region
    $region50: #{_lambda_.1} parent=1 // pred_check
      _
    $region51: #{_lambda_.1} parent=1 // pred_check_branch
      %58 = sbr.rel (0) target = $region53
    $region52: #{_lambda_.1} parent=1 // pred_region
      _
    $region53: #{_lambda_.1} parent=1 // pred_fallthru
      _
    // Predicated region
    $region54: #{_lambda_.1} parent=1 // pred_check
      _
    $region55: #{_lambda_.1} parent=1 // pred_check_branch
      %60 = sbr.rel (0) target = $region57
    $region56: #{_lambda_.1} parent=1 // pred_region
      _
    $region57: #{_lambda_.1} parent=1 // pred_fallthru
      _
    // Predicated region
    $region58: #{_lambda_.1} parent=1 // pred_check
      _
    $region59: #{_lambda_.1} parent=1 // pred_check_branch
      %62 = sbr.rel (0) target = $region61
    $region60: #{_lambda_.1} parent=1 // pred_region
      _
    $region61: #{_lambda_.1} parent=1 // pred_fallthru
      _
    // Predicated region
    $region62: #{_lambda_.1} parent=1 // pred_check
      _
    $region63: #{_lambda_.1} parent=1 // pred_check_branch
      %64 = sbr.rel (0) target = $region65
    $region64: #{_lambda_.1} parent=1 // pred_region
      _
    $region65: #{_lambda_.1} parent=1 // pred_fallthru
      _
    // Predicated region
    $region66: #{_lambda_.1} parent=1 // pred_check
      _
    $region67: #{_lambda_.1} parent=1 // pred_check_branch
      %66 = sbr.rel (0) target = $region69
    $region68: #{_lambda_.1} parent=1 // pred_region
      _
    $region69: #{_lambda_.1} parent=1 // pred_fallthru
      _
    // Predicated region
    $region70: #{_lambda_.1} parent=1 // pred_check
      _
    $region71: #{_lambda_.1} parent=1 // pred_check_branch
      %68 = sbr.rel (0) target = $region73
    $region72: #{_lambda_.1} parent=1 // pred_region
      _
    $region73: #{_lambda_.1} parent=1 // pred_fallthru
      _
    // Predicated region
    $region74: #{_lambda_.1} parent=1 // pred_check
      _
    $region75: #{_lambda_.1} parent=1 // pred_check_branch
      %70 = sbr.rel (0) target = $region77
    $region76: #{_lambda_.1} parent=1 // pred_region
      _
    $region77: #{_lambda_.1} parent=1 // pred_fallthru
      _
    // Predicated region
    $region78: #{_lambda_.1} parent=1 // pred_check
      _
    $region79: #{_lambda_.1} parent=1 // pred_check_branch
      %72 = sbr.rel (0) target = $region81
    $region80: #{_lambda_.1} parent=1 // pred_region
      _
    $region81: #{_lambda_.1} parent=1 // pred_fallthru
      _
    // Predicated region
    $region82: #{_lambda_.1} parent=1 // pred_check
      _
    $region83: #{_lambda_.1} parent=1 // pred_check_branch
      %74 = sbr.rel (0) target = $region85
    $region84: #{_lambda_.1} parent=1 // pred_region
      _
    $region85: #{_lambda_.1} parent=1 // pred_fallthru
      _
    // Predicated region
    $region86: #{_lambda_.1} parent=1 // pred_check
      _
    $region87: #{_lambda_.1} parent=1 // pred_check_branch
      %76 = sbr.rel (0) target = $region89
    $region88: #{_lambda_.1} parent=1 // pred_region
      _
    $region89: #{_lambda_.1} parent=1 // pred_fallthru
      _
    // Predicated region
    $region90: #{_lambda_.1} parent=1 // pred_check
      _
    $region91: #{_lambda_.1} parent=1 // pred_check_branch
      %78 = sbr.rel (0) target = $region93
    $region92: #{_lambda_.1} parent=1 // pred_region
      _
    $region93: #{_lambda_.1} parent=1 // pred_fallthru
      _
    // Predicated region
    $region94: #{_lambda_.1} parent=1 // pred_check
      _
    $region95: #{_lambda_.1} parent=1 // pred_check_branch
      %80 = sbr.rel (0) target = $region97
    $region96: #{_lambda_.1} parent=1 // pred_region
      _
    $region97: #{_lambda_.1} parent=1 // pred_fallthru
      _
    %p83 = scmp.lt.u32.totalorder 4, 8
    %p84 = pneg %p83
    // Predicated region
    $region98: #{_lambda_.1} parent=1 // pred_check
      _
    $region99: #{_lambda_.1} parent=1 // pred_check_branch
      %86 = sbr.rel (%p83) target = $region101
    $region100: #{_lambda_.1} parent=1 // pred_region
      %s107 = sand.u32 4, 7
      %p108 = scmp.eq.s32.totalorder %s107, 0
      %p109 = pneg %p108
      // Predicated region
      $region113: #{_lambda_.1} parent=100 // pred_check
        _
      $region114: #{_lambda_.1} parent=100 // pred_check_branch
        %111 = sbr.rel (%p108) target = $region116
      $region115: #{_lambda_.1} parent=100 // pred_region
        %s112 = sand.u32 4, 7
        %s113 = ssub.s32 4, %s112
        %s114 = scalar_lea.vmem %s2, %s113
        %s115 = ssub.s32 4, %s112
        %s116 = scalar_lea.vmem [#allocation2], %s115
        loop: start=0, step=1, limit=1
        $region117: #{_lambda_.1} parent=115 // loop_pre_header
          _
        $region118: #{_lambda_.1} parent=115 // loop_header
          %s118 = sphi 0, %s122
          %p119 = scmp.ge.s32.totalorder %s118, 1
          %s123 = sphi %s2, %s2
          %s124 = sphi [#allocation2], [#allocation2]
        $region119: #{_lambda_.1} parent=115 // loop_header_branch
          %121 = sbr.rel (%p119) target = $region123
        $region120: #{_lambda_.1} parent=115 // loop_body
          _
        $region121: #{_lambda_.1} parent=115 // loop_footer
          %s122 = sadd.s32 1, %s118
        $region122: #{_lambda_.1} parent=115 // loop_footer_branch
          %117 = sbr.rel target = $region118
        $region123: #{_lambda_.1} parent=115 // loop_exit
          _
        %s125 = sshllo.u32 0, %s112
        loop: start=0, step=1, limit=1
        $region124: #{_lambda_.1} parent=115 // loop_pre_header
          _
        $region125: #{_lambda_.1} parent=115 // loop_header
          %s127 = sphi 0, %s131
          %p128 = scmp.ge.s32.totalorder %s127, 1
          %s132 = sphi %s114, %s114
          %s133 = sphi %s116, %s116
        $region126: #{_lambda_.1} parent=115 // loop_header_branch
          %130 = sbr.rel (%p128) target = $region130
        $region127: #{_lambda_.1} parent=115 // loop_body
          %v134 = vld [vmem:[%s132] sm:%s125]
          %135 = vst [vmem:[%s133] sm:%s125] %v134
          %v136 = vld [vmem:[%s132 + $0x8] sm:%s125]
          %137 = vst [vmem:[%s133 + $0x4] sm:%s125] %v136
          %v138 = vld [vmem:[%s132 + $0x4] sm:%s125]
          %139 = vst [vmem:[%s133 + $0x8] sm:%s125] %v138
          %v140 = vld [vmem:[%s132 + $0xc] sm:%s125]
          %141 = vst [vmem:[%s133 + $0xc] sm:%s125] %v140
        $region128: #{_lambda_.1} parent=115 // loop_footer
          %s131 = sadd.s32 1, %s127
        $region129: #{_lambda_.1} parent=115 // loop_footer_branch
          %126 = sbr.rel target = $region125
        $region130: #{_lambda_.1} parent=115 // loop_exit
          _
      $region116: #{_lambda_.1} parent=100 // pred_fallthru
        _
    $region101: #{_lambda_.1} parent=1 // pred_fallthru
      _
    // Predicated region
    $region102: #{_lambda_.1} parent=1 // pred_check
      %p87 = pneg %p83
    $region103: #{_lambda_.1} parent=1 // pred_check_branch
      %89 = sbr.rel (%p87) target = $region105
    $region104: #{_lambda_.1} parent=1 // pred_region
      %s90 = sshllo.u32 0, 4
      loop: start=0, step=1, limit=1
      $region106: #{_lambda_.1} parent=104 // loop_pre_header
        _
      $region107: #{_lambda_.1} parent=104 // loop_header
        %s92 = sphi 0, %s96
        %p93 = scmp.ge.s32.totalorder %s92, 1
        %s97 = sphi %s2, %s2
        %s98 = sphi [#allocation2], [#allocation2]
      $region108: #{_lambda_.1} parent=104 // loop_header_branch
        %95 = sbr.rel (%p93) target = $region112
      $region109: #{_lambda_.1} parent=104 // loop_body
        %v99 = vld [vmem:[%s97] sm:%s90]
        %100 = vst [vmem:[%s98] sm:%s90] %v99
        %v101 = vld [vmem:[%s97 + $0x8] sm:%s90]
        %102 = vst [vmem:[%s98 + $0x4] sm:%s90] %v101
        %v103 = vld [vmem:[%s97 + $0x4] sm:%s90]
        %104 = vst [vmem:[%s98 + $0x8] sm:%s90] %v103
        %v105 = vld [vmem:[%s97 + $0xc] sm:%s90]
        %106 = vst [vmem:[%s98 + $0xc] sm:%s90] %v105
      $region110: #{_lambda_.1} parent=104 // loop_footer
        %s96 = sadd.s32 1, %s92
      $region111: #{_lambda_.1} parent=104 // loop_footer_branch
        %91 = sbr.rel target = $region107
      $region112: #{_lambda_.1} parent=104 // loop_exit
        _
    $region105: #{_lambda_.1} parent=1 // pred_fallthru
      _
    // Predicated region
    $region131: #{_lambda_.1} parent=1 // pred_check
      _
    $region132: #{_lambda_.1} parent=1 // pred_check_branch
      %144 = sbr.rel (0) target = $region134
    $region133: #{_lambda_.1} parent=1 // pred_region
      %145 = vsyncadd [#allocation5], 256
    $region134: #{_lambda_.1} parent=1 // pred_fallthru
      _
    %s146 = scalar_lea.sflag [#allocation5], 1
    %p148 = scmp.lt.u32.totalorder 8, 8
    %p149 = pneg %p148
    // Predicated region
    $region135: #{_lambda_.1} parent=1 // pred_check
      _
    $region136: #{_lambda_.1} parent=1 // pred_check_branch
      %151 = sbr.rel (%p148) target = $region138
    $region137: #{_lambda_.1} parent=1 // pred_region
      %s166 = sand.u32 8, 7
      %p167 = scmp.eq.s32.totalorder %s166, 0
      // Predicated region
      $region150: #{_lambda_.1} parent=137 // pred_check
        %p168 = pneg %p167
      $region151: #{_lambda_.1} parent=137 // pred_check_branch
        %170 = sbr.rel (%p168) target = $region153
      $region152: #{_lambda_.1} parent=137 // pred_region
        loop: start=0, step=1, limit=1
        $region154: #{_lambda_.1} parent=152 // loop_pre_header
          _
        $region155: #{_lambda_.1} parent=152 // loop_header
          %s172 = sphi 0, %s176
          %p173 = scmp.ge.s32.totalorder %s172, 1
          %s177 = sphi %s3, %s3
          %s178 = sphi [#allocation3], [#allocation3]
        $region156: #{_lambda_.1} parent=152 // loop_header_branch
          %175 = sbr.rel (%p173) target = $region160
        $region157: #{_lambda_.1} parent=152 // loop_body
          %v179 = vld [vmem:[%s177] sm:$0xff]
          %180 = vst [vmem:[%s178] sm:$0xff] %v179
        $region158: #{_lambda_.1} parent=152 // loop_footer
          %s176 = sadd.s32 1, %s172
        $region159: #{_lambda_.1} parent=152 // loop_footer_branch
          %171 = sbr.rel target = $region155
        $region160: #{_lambda_.1} parent=152 // loop_exit
          _
      $region153: #{_lambda_.1} parent=137 // pred_fallthru
        _
      %p181 = pneg %p167
      // Predicated region
      $region161: #{_lambda_.1} parent=137 // pred_check
        _
      $region162: #{_lambda_.1} parent=137 // pred_check_branch
        %183 = sbr.rel (%p167) target = $region164
      $region163: #{_lambda_.1} parent=137 // pred_region
        %s184 = sand.u32 8, 7
      $region164: #{_lambda_.1} parent=137 // pred_fallthru
        _
    $region138: #{_lambda_.1} parent=1 // pred_fallthru
      _
    // Predicated region
    $region139: #{_lambda_.1} parent=1 // pred_check
      %p152 = pneg %p148
    $region140: #{_lambda_.1} parent=1 // pred_check_branch
      %154 = sbr.rel (%p152) target = $region142
    $region141: #{_lambda_.1} parent=1 // pred_region
      %s155 = sshllo.u32 0, 8
      loop: start=0, step=1, limit=1
      $region143: #{_lambda_.1} parent=141 // loop_pre_header
        _
      $region144: #{_lambda_.1} parent=141 // loop_header
        %s157 = sphi 0, %s161
        %p158 = scmp.ge.s32.totalorder %s157, 1
        %s162 = sphi %s3, %s3
        %s163 = sphi [#allocation3], [#allocation3]
      $region145: #{_lambda_.1} parent=141 // loop_header_branch
        %160 = sbr.rel (%p158) target = $region149
      $region146: #{_lambda_.1} parent=141 // loop_body
        %v164 = vld [vmem:[%s162] sm:%s155]
        %165 = vst [vmem:[%s163] sm:%s155] %v164
      $region147: #{_lambda_.1} parent=141 // loop_footer
        %s161 = sadd.s32 1, %s157
      $region148: #{_lambda_.1} parent=141 // loop_footer_branch
        %156 = sbr.rel target = $region144
      $region149: #{_lambda_.1} parent=141 // loop_exit
        _
    $region142: #{_lambda_.1} parent=1 // pred_fallthru
      _
    // Predicated region
    $region165: #{_lambda_.1} parent=1 // pred_check
      _
    $region166: #{_lambda_.1} parent=1 // pred_check_branch
      %187 = sbr.rel (0) target = $region168
    $region167: #{_lambda_.1} parent=1 // pred_region
      %188 = vsyncadd %s146, 128
    $region168: #{_lambda_.1} parent=1 // pred_fallthru
      _
    %s189 = scalar_lea.sflag [#allocation5], 2
    %p191 = scmp.lt.u32.totalorder 8, 8
    %p192 = pneg %p191
    // Predicated region
    $region169: #{_lambda_.1} parent=1 // pred_check
      _
    $region170: #{_lambda_.1} parent=1 // pred_check_branch
      %194 = sbr.rel (%p191) target = $region172
    $region171: #{_lambda_.1} parent=1 // pred_region
      %s209 = sand.u32 8, 7
      %p210 = scmp.eq.s32.totalorder %s209, 0
      // Predicated region
      $region184: #{_lambda_.1} parent=171 // pred_check
        %p211 = pneg %p210
      $region185: #{_lambda_.1} parent=171 // pred_check_branch
        %213 = sbr.rel (%p211) target = $region187
      $region186: #{_lambda_.1} parent=171 // pred_region
        loop: start=0, step=1, limit=1
        $region188: #{_lambda_.1} parent=186 // loop_pre_header
          _
        $region189: #{_lambda_.1} parent=186 // loop_header
          %s215 = sphi 0, %s219
          %p216 = scmp.ge.s32.totalorder %s215, 1
          %s220 = sphi %s4, %s4
          %s221 = sphi [#allocation4], [#allocation4]
        $region190: #{_lambda_.1} parent=186 // loop_header_branch
          %218 = sbr.rel (%p216) target = $region194
        $region191: #{_lambda_.1} parent=186 // loop_body
          %v222 = vld [vmem:[%s220] sm:$0xff]
          %223 = vst [vmem:[%s221] sm:$0xff] %v222
        $region192: #{_lambda_.1} parent=186 // loop_footer
          %s219 = sadd.s32 1, %s215
        $region193: #{_lambda_.1} parent=186 // loop_footer_branch
          %214 = sbr.rel target = $region189
        $region194: #{_lambda_.1} parent=186 // loop_exit
          _
      $region187: #{_lambda_.1} parent=171 // pred_fallthru
        _
      %p224 = pneg %p210
      // Predicated region
      $region195: #{_lambda_.1} parent=171 // pred_check
        _
      $region196: #{_lambda_.1} parent=171 // pred_check_branch
        %226 = sbr.rel (%p210) target = $region198
      $region197: #{_lambda_.1} parent=171 // pred_region
        %s227 = sand.u32 8, 7
      $region198: #{_lambda_.1} parent=171 // pred_fallthru
        _
    $region172: #{_lambda_.1} parent=1 // pred_fallthru
      _
    // Predicated region
    $region173: #{_lambda_.1} parent=1 // pred_check
      %p195 = pneg %p191
    $region174: #{_lambda_.1} parent=1 // pred_check_branch
      %197 = sbr.rel (%p195) target = $region176
    $region175: #{_lambda_.1} parent=1 // pred_region
      %s198 = sshllo.u32 0, 8
      loop: start=0, step=1, limit=1
      $region177: #{_lambda_.1} parent=175 // loop_pre_header
        _
      $region178: #{_lambda_.1} parent=175 // loop_header
        %s200 = sphi 0, %s204
        %p201 = scmp.ge.s32.totalorder %s200, 1
        %s205 = sphi %s4, %s4
        %s206 = sphi [#allocation4], [#allocation4]
      $region179: #{_lambda_.1} parent=175 // loop_header_branch
        %203 = sbr.rel (%p201) target = $region183
      $region180: #{_lambda_.1} parent=175 // loop_body
        %v207 = vld [vmem:[%s205] sm:%s198]
        %208 = vst [vmem:[%s206] sm:%s198] %v207
      $region181: #{_lambda_.1} parent=175 // loop_footer
        %s204 = sadd.s32 1, %s200
      $region182: #{_lambda_.1} parent=175 // loop_footer_branch
        %199 = sbr.rel target = $region178
      $region183: #{_lambda_.1} parent=175 // loop_exit
        _
    $region176: #{_lambda_.1} parent=1 // pred_fallthru
      _
    // Predicated region
    $region199: #{_lambda_.1} parent=1 // pred_check
      _
    $region200: #{_lambda_.1} parent=1 // pred_check_branch
      %230 = sbr.rel (0) target = $region202
    $region201: #{_lambda_.1} parent=1 // pred_region
      %231 = vsyncadd %s189, 128
    $region202: #{_lambda_.1} parent=1 // pred_fallthru
      _
    %v232 = vlaneseq
    %v233 = vand.u32 %v232, 127
    %v234 = vadd.s32 %v233, 128
    %vm235 = vcmp.lt.s32.totalorder %v233, 0
    %v236 = vsub.s32 0, %v233
    %v237 = vsel %vm235, %v236, %v233
    %v238 = vshrl.u32 %v237, 7
    %v239 = vand.u32 %v237, 127
    %v240 = vsub.s32 0, %v239
    %v241 = vsel %vm235, %v240, %v239
    %vm242 = vcmp.lt.s32.totalorder %v234, 0
    %v243 = vsub.s32 0, %v234
    %v244 = vsel %vm242, %v243, %v234
    %v245 = vshrl.u32 %v244, 7
    %v246 = vand.u32 %v244, 127
    %v247 = vsub.s32 0, %v246
    %v248 = vsel %vm242, %v247, %v246
    %vm249 = vcmp.ne.s32.totalorder %v241, 0
    %vm250 = vcmp.ne.s32.totalorder %v248, 0
    %vm251 = vcmp.lt.s32.totalorder %v241, 0
    %vm252 = vcmp.lt.s32.totalorder %v248, 0
    %vm253 = vmand %vm251, %vm249
    %vm254 = vmand %vm252, %vm250
    %v255 = vadd.s32 %v241, 128
    %v256 = vadd.s32 %v248, 128
    %v257 = vsel %vm253, %v255, %v241
    %v258 = vsel %vm254, %v256, %v248
    %v259 = vadd.s32 %v257, 1
    %v260 = vadd.s32 %v258, 1
    %vm261 = vcmp.ge.s32.totalorder %v259, 0
    %vm262 = vcmp.ge.s32.totalorder %v260, 0
    %vm263 = vcmp.lt.s32.totalorder %v259, 128
    %vm264 = vcmp.lt.s32.totalorder %v260, 128
    %vm265 = vmand %vm261, %vm263
    %vm266 = vmand %vm262, %vm264
    %v267 = vsel %vm265, 1, 0
    %v268 = vsel %vm266, 1, 0
    %v269 = vcvt.s32.f32 %v267
    %v270 = vcvt.s32.f32 %v268
    %v271 = vadd.s32 %v257, 4294967295
    %v272 = vadd.s32 %v258, 4294967295
    %vm273 = vcmp.ge.s32.totalorder %v271, 0
    %vm274 = vcmp.ge.s32.totalorder %v272, 0
    %vm275 = vcmp.lt.s32.totalorder %v271, 128
    %vm276 = vcmp.lt.s32.totalorder %v272, 128
    %vm277 = vmand %vm273, %vm275
    %vm278 = vmand %vm274, %vm276
    %v279 = vsel %vm277, 1, 0
    %v280 = vsel %vm278, 1, 0
    %v281 = vcvt.s32.f32 %v279
    %v282 = vcvt.s32.f32 %v280
    %v283 = vld [vmem:[%s0] sm:$0xff]
    %v284 = vld [vmem:[%s0 + $0x8] sm:$0xff]
    %v285 = vld [vmem:[%s0 + $0x10] sm:$0xff]
    %v286 = vld [vmem:[%s0 + $0x18] sm:$0xff]
    %v287 = vld [vmem:[%s0 + $0x20] sm:$0xff]
    %v288 = vld [vmem:[%s0 + $0x28] sm:$0xff]
    %v289 = vld [vmem:[%s0 + $0x30] sm:$0xff]
    %v290 = vld [vmem:[%s0 + $0x38] sm:$0xff]
    %v291 = vld [vmem:[%s1] sm:$0xff]
    %v292 = vld [vmem:[%s1 + $0x8] sm:$0xff]
    %v293 = vld [vmem:[%s1 + $0x10] sm:$0xff]
    %v294 = vld [vmem:[%s1 + $0x18] sm:$0xff]
    %v295 = vunpack.c.l.bf16 %v291
    %v296 = vunpack.c.h.bf16 %v291
    %v297 = vunpack.c.l.bf16 %v292
    %v298 = vunpack.c.h.bf16 %v292
    %v299 = vunpack.c.l.bf16 %v293
    %v300 = vunpack.c.h.bf16 %v293
    %v301 = vunpack.c.l.bf16 %v294
    %v302 = vunpack.c.h.bf16 %v294
    %v303 = vadd.f32 %v283, %v295
    %v304 = vadd.f32 %v284, %v296
    %v305 = vadd.f32 %v285, %v297
    %v306 = vadd.f32 %v286, %v298
    %v307 = vadd.f32 %v287, %v299
    %v308 = vadd.f32 %v288, %v300
    %v309 = vadd.f32 %v289, %v301
    %v310 = vadd.f32 %v290, %v302
    %v311 = vpack.c.bf16 %v305, %v303
    %v312 = vpack.c.bf16 %v306, %v304
    %v313 = vpack.c.bf16 %v309, %v307
    %v314 = vpack.c.bf16 %v310, %v308
    %v315 = vld [vmem:[%s5] sm:$0xf]
    %v316 = vld [vmem:[%s5 + $0x4] sm:$0xf]
    %v317 = vld [vmem:[%s5 + $0x8] sm:$0xf]
    %v318 = vld [vmem:[%s5 + $0xc] sm:$0xf]
    %v323 = vunpack.c.l.b16 %v315
    %v324 = vunpack.c.l.b16 %v316
    %v325 = vunpack.c.l.b16 %v317
    %v326 = vunpack.c.l.b16 %v318
    %v327 = vpack.c.b16 %v324, %v323
    %v328 = vpack.c.b16 %v326, %v325
    %vm329 = vcmask 261120
    %v331 = vsel %vm329, %v327, 0
    %v334 = vsel %vm329, %v328, 0
    %336 = vmatprep.subr.bf16.mxu0 %v312
    %337 = vmatpush1.bf16.msra.mxu0 %v311
    %338 = vmatprep.subr.bf16.mxu0 %v314
    %339 = vmatpush1.bf16.msra.mxu0 %v313
    %340 = vmatprep.subr.bf16.mxu0 0
    %341 = vmatpush1.bf16.msra.mxu0 0
    %342 = vmatprep.subr.bf16.mxu0 0
    %343 = vmatpush1.bf16.msra.mxu0 0
    %344 = vmatprep.subr.bf16.mxu0 0
    %345 = vmatpush1.bf16.msra.mxu0 0
    %346 = vmatprep.subr.bf16.mxu0 0
    %347 = vmatpush1.bf16.msra.mxu0 0
    %348 = vmatprep.subr.bf16.mxu0 0
    %349 = vmatpush1.bf16.msra.mxu0 0
    %350 = vmatprep.subr.bf16.mxu0 0
    %351 = vmatpush1.bf16.msra.mxu0 0
    %352 = vmatprep.subr.bf16.mxu0 0
    %353 = vmatpush1.bf16.msra.mxu0 0
    %354 = vmatprep.subr.bf16.mxu0 0
    %355 = vmatpush1.bf16.msra.mxu0 0
    %356 = vmatprep.subr.bf16.mxu0 0
    %357 = vmatpush1.bf16.msra.mxu0 0
    %358 = vmatprep.subr.bf16.mxu0 0
    %359 = vmatpush1.bf16.msra.mxu0 0
    %360 = vmatprep.subr.bf16.mxu0 0
    %361 = vmatpush1.bf16.msra.mxu0 0
    %362 = vmatprep.subr.bf16.mxu0 0
    %363 = vmatpush1.bf16.msra.mxu0 0
    %364 = vmatprep.subr.bf16.mxu0 0
    %365 = vmatpush1.bf16.msra.mxu0 0
    %366 = vmatprep.subr.bf16.mxu0 0
    %367 = vmatpush1.bf16.msra.mxu0 0
    %368 = vmatprep.mubr.bf16.mxu0 0
    %369 = vmatmul.mubr.bf16.gmra.mrb[0].mxu0 %v331
    %v370 = vpop.f32.mrb[0].mxu0
    %v371 = vadd.f32 0.0, %v370
    %v372 = vpop.f32.mrb[0].mxu0
    %v373 = vadd.f32 0.0, %v372
    %v374 = vpop.f32.mrb[0].mxu0
    %v375 = vadd.f32 0.0, %v374
    %v376 = vpop.f32.mrb[0].mxu0
    %v377 = vadd.f32 0.0, %v376
    %378 = vmatprep.mubr.bf16.mxu0 0
    %379 = vmatmul.mubr.bf16.gmra.mrb[0].mxu0 %v334
    %v380 = vpop.f32.mrb[0].mxu0
    %v381 = vadd.f32 0.0, %v380
    %v382 = vpop.f32.mrb[0].mxu0
    %v383 = vadd.f32 0.0, %v382
    %v384 = vpop.f32.mrb[0].mxu0
    %v385 = vadd.f32 0.0, %v384
    %v386 = vpop.f32.mrb[0].mxu0
    %v387 = vadd.f32 0.0, %v386
    %388 = vdwg.mxu0
    %389 = vrot.lane.b32.xlu0 %v371, 127
    %v390 = vpop.permute.xlu0 %389
    %391 = vrot.lane.b32.xlu0 %v375, 127
    %v392 = vpop.permute.xlu0 %391
    %393 = vrot.lane.b32.xlu0 %v381, 127
    %v394 = vpop.permute.xlu0 %393
    %395 = vrot.lane.b32.xlu0 %v385, 127
    %v396 = vpop.permute.xlu0 %395
    %397 = vrot.lane.b32.xlu0 %v373, 127
    %v398 = vpop.permute.xlu0 %397
    %399 = vrot.lane.b32.xlu0 %v377, 127
    %v400 = vpop.permute.xlu0 %399
    %401 = vrot.lane.b32.xlu0 %v383, 127
    %v402 = vpop.permute.xlu0 %401
    %403 = vrot.lane.b32.xlu0 %v387, 127
    %v404 = vpop.permute.xlu0 %403
    %vm405 = vcmp.lt.s32.totalorder %v233, 127
    %v406 = vsel %vm405, %v390, %v398
    %v407 = vsel %vm405, %v392, %v400
    %v408 = vsel %vm405, %v394, %v402
    %v409 = vsel %vm405, %v396, %v404
    %v410 = vsel %vm405, %v398, %v390
    %v411 = vsel %vm405, %v400, %v392
    %v412 = vsel %vm405, %v402, %v394
    %v413 = vsel %vm405, %v404, %v396
    %v414 = vmul.f32 %v406, %v269
    %v415 = vmul.f32 %v410, %v270
    %v416 = vmul.f32 %v407, %v269
    %v417 = vmul.f32 %v411, %v270
    %v418 = vmul.f32 %v408, %v269
    %v419 = vmul.f32 %v412, %v270
    %v420 = vmul.f32 %v409, %v269
    %v421 = vmul.f32 %v413, %v270
    %s422 = scalar_lea.vmem %s5, 16
    %v423 = vld [vmem:[%s422] sm:$0xf]
    %v424 = vld [vmem:[%s422 + $0x4] sm:$0xf]
    %v425 = vld [vmem:[%s422 + $0x8] sm:$0xf]
    %v426 = vld [vmem:[%s422 + $0xc] sm:$0xf]
    %v431 = vunpack.c.l.b16 %v423
    %v432 = vunpack.c.l.b16 %v424
    %v433 = vunpack.c.l.b16 %v425
    %v434 = vunpack.c.l.b16 %v426
    %v435 = vpack.c.b16 %v432, %v431
    %v436 = vpack.c.b16 %v434, %v433
    %v438 = vsel %vm329, %v435, 0
    %v441 = vsel %vm329, %v436, 0
    %443 = vmatprep.subr.bf16.mxu0 %v312
    %444 = vmatpush1.bf16.msra.mxu0 %v311
    %445 = vmatprep.subr.bf16.mxu0 %v314
    %446 = vmatpush1.bf16.msra.mxu0 %v313
    %447 = vmatprep.subr.bf16.mxu0 0
    %448 = vmatpush1.bf16.msra.mxu0 0
    %449 = vmatprep.subr.bf16.mxu0 0
    %450 = vmatpush1.bf16.msra.mxu0 0
    %451 = vmatprep.subr.bf16.mxu0 0
    %452 = vmatpush1.bf16.msra.mxu0 0
    %453 = vmatprep.subr.bf16.mxu0 0
    %454 = vmatpush1.bf16.msra.mxu0 0
    %455 = vmatprep.subr.bf16.mxu0 0
    %456 = vmatpush1.bf16.msra.mxu0 0
    %457 = vmatprep.subr.bf16.mxu0 0
    %458 = vmatpush1.bf16.msra.mxu0 0
    %459 = vmatprep.subr.bf16.mxu0 0
    %460 = vmatpush1.bf16.msra.mxu0 0
    %461 = vmatprep.subr.bf16.mxu0 0
    %462 = vmatpush1.bf16.msra.mxu0 0
    %463 = vmatprep.subr.bf16.mxu0 0
    %464 = vmatpush1.bf16.msra.mxu0 0
    %465 = vmatprep.subr.bf16.mxu0 0
    %466 = vmatpush1.bf16.msra.mxu0 0
    %467 = vmatprep.subr.bf16.mxu0 0
    %468 = vmatpush1.bf16.msra.mxu0 0
    %469 = vmatprep.subr.bf16.mxu0 0
    %470 = vmatpush1.bf16.msra.mxu0 0
    %471 = vmatprep.subr.bf16.mxu0 0
    %472 = vmatpush1.bf16.msra.mxu0 0
    %473 = vmatprep.subr.bf16.mxu0 0
    %474 = vmatpush1.bf16.msra.mxu0 0
    %475 = vmatprep.mubr.bf16.mxu0 0
    %476 = vmatmul.mubr.bf16.gmra.mrb[0].mxu0 %v438
    %v477 = vpop.f32.mrb[0].mxu0
    %v478 = vadd.f32 0.0, %v477
    %v479 = vpop.f32.mrb[0].mxu0
    %v480 = vadd.f32 0.0, %v479
    %v481 = vpop.f32.mrb[0].mxu0
    %v482 = vadd.f32 0.0, %v481
    %v483 = vpop.f32.mrb[0].mxu0
    %v484 = vadd.f32 0.0, %v483
    %485 = vmatprep.mubr.bf16.mxu0 0
    %486 = vmatmul.mubr.bf16.gmra.mrb[0].mxu0 %v441
    %v487 = vpop.f32.mrb[0].mxu0
    %v488 = vadd.f32 0.0, %v487
    %v489 = vpop.f32.mrb[0].mxu0
    %v490 = vadd.f32 0.0, %v489
    %v491 = vpop.f32.mrb[0].mxu0
    %v492 = vadd.f32 0.0, %v491
    %v493 = vpop.f32.mrb[0].mxu0
    %v494 = vadd.f32 0.0, %v493
    %495 = vdwg.mxu0
    %v496 = vadd.f32 %v414, %v478
    %v497 = vadd.f32 %v415, %v480
    %v498 = vadd.f32 %v416, %v482
    %v499 = vadd.f32 %v417, %v484
    %v500 = vadd.f32 %v418, %v488
    %v501 = vadd.f32 %v419, %v490
    %v502 = vadd.f32 %v420, %v492
    %v503 = vadd.f32 %v421, %v494
    %s504 = scalar_lea.vmem %s5, 32
    %v505 = vld [vmem:[%s504] sm:$0xf]
    %v506 = vld [vmem:[%s504 + $0x4] sm:$0xf]
    %v507 = vld [vmem:[%s504 + $0x8] sm:$0xf]
    %v508 = vld [vmem:[%s504 + $0xc] sm:$0xf]
    %v513 = vunpack.c.l.b16 %v505
    %v514 = vunpack.c.l.b16 %v506
    %v515 = vunpack.c.l.b16 %v507
    %v516 = vunpack.c.l.b16 %v508
    %v517 = vpack.c.b16 %v514, %v513
    %v518 = vpack.c.b16 %v516, %v515
    %v520 = vsel %vm329, %v517, 0
    %v523 = vsel %vm329, %v518, 0
    %525 = vmatprep.subr.bf16.mxu0 %v312
    %526 = vmatpush1.bf16.msra.mxu0 %v311
    %527 = vmatprep.subr.bf16.mxu0 %v314
    %528 = vmatpush1.bf16.msra.mxu0 %v313
    %529 = vmatprep.subr.bf16.mxu0 0
    %530 = vmatpush1.bf16.msra.mxu0 0
    %531 = vmatprep.subr.bf16.mxu0 0
    %532 = vmatpush1.bf16.msra.mxu0 0
    %533 = vmatprep.subr.bf16.mxu0 0
    %534 = vmatpush1.bf16.msra.mxu0 0
    %535 = vmatprep.subr.bf16.mxu0 0
    %536 = vmatpush1.bf16.msra.mxu0 0
    %537 = vmatprep.subr.bf16.mxu0 0
    %538 = vmatpush1.bf16.msra.mxu0 0
    %539 = vmatprep.subr.bf16.mxu0 0
    %540 = vmatpush1.bf16.msra.mxu0 0
    %541 = vmatprep.subr.bf16.mxu0 0
    %542 = vmatpush1.bf16.msra.mxu0 0
    %543 = vmatprep.subr.bf16.mxu0 0
    %544 = vmatpush1.bf16.msra.mxu0 0
    %545 = vmatprep.subr.bf16.mxu0 0
    %546 = vmatpush1.bf16.msra.mxu0 0
    %547 = vmatprep.subr.bf16.mxu0 0
    %548 = vmatpush1.bf16.msra.mxu0 0
    %549 = vmatprep.subr.bf16.mxu0 0
    %550 = vmatpush1.bf16.msra.mxu0 0
    %551 = vmatprep.subr.bf16.mxu0 0
    %552 = vmatpush1.bf16.msra.mxu0 0
    %553 = vmatprep.subr.bf16.mxu0 0
    %554 = vmatpush1.bf16.msra.mxu0 0
    %555 = vmatprep.subr.bf16.mxu0 0
    %556 = vmatpush1.bf16.msra.mxu0 0
    %557 = vmatprep.mubr.bf16.mxu0 0
    %558 = vmatmul.mubr.bf16.gmra.mrb[0].mxu0 %v520
    %v559 = vpop.f32.mrb[0].mxu0
    %v560 = vadd.f32 0.0, %v559
    %v561 = vpop.f32.mrb[0].mxu0
    %v562 = vadd.f32 0.0, %v561
    %v563 = vpop.f32.mrb[0].mxu0
    %v564 = vadd.f32 0.0, %v563
    %v565 = vpop.f32.mrb[0].mxu0
    %v566 = vadd.f32 0.0, %v565
    %567 = vmatprep.mubr.bf16.mxu0 0
    %568 = vmatmul.mubr.bf16.gmra.mrb[0].mxu0 %v523
    %v569 = vpop.f32.mrb[0].mxu0
    %v570 = vadd.f32 0.0, %v569
    %v571 = vpop.f32.mrb[0].mxu0
    %v572 = vadd.f32 0.0, %v571
    %v573 = vpop.f32.mrb[0].mxu0
    %v574 = vadd.f32 0.0, %v573
    %v575 = vpop.f32.mrb[0].mxu0
    %v576 = vadd.f32 0.0, %v575
    %577 = vdwg.mxu0
    %578 = vrot.lane.b32.xlu0 %v560, 1
    %v579 = vpop.permute.xlu0 %578
    %580 = vrot.lane.b32.xlu0 %v564, 1
    %v581 = vpop.permute.xlu0 %580
    %582 = vrot.lane.b32.xlu0 %v570, 1
    %v583 = vpop.permute.xlu0 %582
    %584 = vrot.lane.b32.xlu0 %v574, 1
    %v585 = vpop.permute.xlu0 %584
    %586 = vrot.lane.b32.xlu0 %v562, 1
    %v587 = vpop.permute.xlu0 %586
    %588 = vrot.lane.b32.xlu0 %v566, 1
    %v589 = vpop.permute.xlu0 %588
    %590 = vrot.lane.b32.xlu0 %v572, 1
    %v591 = vpop.permute.xlu0 %590
    %592 = vrot.lane.b32.xlu0 %v576, 1
    %v593 = vpop.permute.xlu0 %592
    %vm594 = vcmp.lt.s32.totalorder %v233, 1
    %v595 = vsel %vm594, %v579, %v587
    %v596 = vsel %vm594, %v581, %v589
    %v597 = vsel %vm594, %v583, %v591
    %v598 = vsel %vm594, %v585, %v593
    %v599 = vsel %vm594, %v587, %v579
    %v600 = vsel %vm594, %v589, %v581
    %v601 = vsel %vm594, %v591, %v583
    %v602 = vsel %vm594, %v593, %v585
    %v603 = vmul.f32 %v599, %v281
    %v604 = vmul.f32 %v595, %v282
    %v605 = vmul.f32 %v600, %v281
    %v606 = vmul.f32 %v596, %v282
    %v607 = vmul.f32 %v601, %v281
    %v608 = vmul.f32 %v597, %v282
    %v609 = vmul.f32 %v602, %v281
    %v610 = vmul.f32 %v598, %v282
    %v611 = vadd.f32 %v496, %v603
    %v612 = vadd.f32 %v497, %v604
    %v613 = vadd.f32 %v498, %v605
    %v614 = vadd.f32 %v499, %v606
    %v615 = vadd.f32 %v500, %v607
    %v616 = vadd.f32 %v501, %v608
    %v617 = vadd.f32 %v502, %v609
    %v618 = vadd.f32 %v503, %v610
    %v619 = vld [vmem:[%s6] sm:$0xff]
    %v620 = vld [vmem:[%s6 + $0x8] sm:$0xff]
    %v621 = vld [vmem:[%s6 + $0x10] sm:$0xff]
    %v622 = vld [vmem:[%s6 + $0x18] sm:$0xff]
    %v623 = vadd.f32 %v611, %v612
    %624 = vadd.xlane.f32.xlu0 %v623
    %v625 = vpop.xlane.xlu0 %624
    %v626 = vadd.f32 %v613, %v614
    %627 = vadd.xlane.f32.xlu0 %v626
    %v628 = vpop.xlane.xlu0 %627
    %v629 = vadd.f32 %v615, %v616
    %630 = vadd.xlane.f32.xlu0 %v629
    %v631 = vpop.xlane.xlu0 %630
    %v632 = vadd.f32 %v617, %v618
    %633 = vadd.xlane.f32.xlu0 %v632
    %v634 = vpop.xlane.xlu0 %633
    %v635 = vmul.f32 %v625, 0.00390625
    %v636 = vmul.f32 %v628, 0.00390625
    %v637 = vmul.f32 %v631, 0.00390625
    %v638 = vmul.f32 %v634, 0.00390625
    %v639 = vsub.f32 %v611, %v635
    %v640 = vsub.f32 %v612, %v635
    %v641 = vsub.f32 %v613, %v636
    %v642 = vsub.f32 %v614, %v636
    %v643 = vsub.f32 %v615, %v637
    %v644 = vsub.f32 %v616, %v637
    %v645 = vsub.f32 %v617, %v638
    %v646 = vsub.f32 %v618, %v638
    %v647 = vmul.f32 %v639, %v639
    %v648 = vmul.f32 %v640, %v640
    %v649 = vmul.f32 %v641, %v641
    %v650 = vmul.f32 %v642, %v642
    %v651 = vmul.f32 %v643, %v643
    %v652 = vmul.f32 %v644, %v644
    %v653 = vmul.f32 %v645, %v645
    %v654 = vmul.f32 %v646, %v646
    %v655 = vadd.f32 %v647, %v648
    %656 = vadd.xlane.f32.xlu0 %v655
    %v657 = vpop.xlane.xlu0 %656
    %v658 = vadd.f32 %v649, %v650
    %659 = vadd.xlane.f32.xlu0 %v658
    %v660 = vpop.xlane.xlu0 %659
    %v661 = vadd.f32 %v651, %v652
    %662 = vadd.xlane.f32.xlu0 %v661
    %v663 = vpop.xlane.xlu0 %662
    %v664 = vadd.f32 %v653, %v654
    %665 = vadd.xlane.f32.xlu0 %v664
    %v666 = vpop.xlane.xlu0 %665
    %v667 = vmul.f32 %v657, 0.00390625
    %v668 = vmul.f32 %v660, 0.00390625
    %v669 = vmul.f32 %v663, 0.00390625
    %v670 = vmul.f32 %v666, 0.00390625
    %v671 = vadd.f32 %v667, 1e-05
    %v672 = vadd.f32 %v668, 1e-05
    %v673 = vadd.f32 %v669, 1e-05
    %v674 = vadd.f32 %v670, 1e-05
    %v675 = vrsqrt.pop %v671
    %v676 = vrsqrt.pop %v672
    %v677 = vrsqrt.pop %v673
    %v678 = vrsqrt.pop %v674
    %v679 = vmul.f32 %v675, %v619
    %v680 = vmul.f32 %v676, %v620
    %v681 = vmul.f32 %v677, %v621
    %v682 = vmul.f32 %v678, %v622
    %684 = vset.pattern.permute.xlu0 0
    %685 = vperm.xlu0 %684, %v679
    %v686 = vpop.permute.xlu0 %685
    %689 = vset.pattern.permute.xlu0 0
    %690 = vperm.xlu0 %689, %v680
    %v691 = vpop.permute.xlu0 %690
    %694 = vset.pattern.permute.xlu0 0
    %695 = vperm.xlu0 %694, %v681
    %v696 = vpop.permute.xlu0 %695
    %699 = vset.pattern.permute.xlu0 0
    %700 = vperm.xlu0 %699, %v682
    %v701 = vpop.permute.xlu0 %700
    %v703 = vmul.f32 %v639, %v686
    %v704 = vmul.f32 %v640, %v686
    %v705 = vmul.f32 %v641, %v691
    %v706 = vmul.f32 %v642, %v691
    %v707 = vmul.f32 %v643, %v696
    %v708 = vmul.f32 %v644, %v696
    %v709 = vmul.f32 %v645, %v701
    %v710 = vmul.f32 %v646, %v701
    %712 = vset.pattern.permute.xlu0 1
    %713 = vperm.xlu0 %712, %v619
    %v714 = vpop.permute.xlu0 %713
    %717 = vset.pattern.permute.xlu0 1
    %718 = vperm.xlu0 %717, %v620
    %v719 = vpop.permute.xlu0 %718
    %722 = vset.pattern.permute.xlu0 1
    %723 = vperm.xlu0 %722, %v621
    %v724 = vpop.permute.xlu0 %723
    %727 = vset.pattern.permute.xlu0 1
    %728 = vperm.xlu0 %727, %v622
    %v729 = vpop.permute.xlu0 %728
    %v731 = vadd.f32 %v703, %v714
    %v732 = vadd.f32 %v704, %v714
    %v733 = vadd.f32 %v705, %v719
    %v734 = vadd.f32 %v706, %v719
    %v735 = vadd.f32 %v707, %v724
    %v736 = vadd.f32 %v708, %v724
    %v737 = vadd.f32 %v709, %v729
    %v738 = vadd.f32 %v710, %v729
    %v739 = vmax.f32 %v731, 0.0
    %v740 = vmax.f32 %v732, 0.0
    %v741 = vmax.f32 %v733, 0.0
    %v742 = vmax.f32 %v734, 0.0
    %v743 = vmax.f32 %v735, 0.0
    %v744 = vmax.f32 %v736, 0.0
    %v745 = vmax.f32 %v737, 0.0
    %v746 = vmax.f32 %v738, 0.0
    %v747 = vpack.c.bf16 %v741, %v739
    %v748 = vpack.c.bf16 %v742, %v740
    %v749 = vpack.c.bf16 %v745, %v743
    %v750 = vpack.c.bf16 %v746, %v744
    %v751 = vld [vmem:[%s7] sm:$0xf]
    %v752 = vld [vmem:[%s7 + $0x4] sm:$0xf]
    %v755 = vunpack.c.l.b16 %v751
    %v756 = vunpack.c.l.b16 %v752
    %v757 = vpack.c.b16 %v756, %v755
    %v759 = vsel %vm329, %v757, 0
    %761 = vmatprep.subr.bf16.mxu0 %v748
    %762 = vmatpush1.bf16.msra.mxu0 %v747
    %763 = vmatprep.subr.bf16.mxu0 %v750
    %764 = vmatpush1.bf16.msra.mxu0 %v749
    %765 = vmatprep.subr.bf16.mxu0 0
    %766 = vmatpush1.bf16.msra.mxu0 0
    %767 = vmatprep.subr.bf16.mxu0 0
    %768 = vmatpush1.bf16.msra.mxu0 0
    %769 = vmatprep.subr.bf16.mxu0 0
    %770 = vmatpush1.bf16.msra.mxu0 0
    %771 = vmatprep.subr.bf16.mxu0 0
    %772 = vmatpush1.bf16.msra.mxu0 0
    %773 = vmatprep.subr.bf16.mxu0 0
    %774 = vmatpush1.bf16.msra.mxu0 0
    %775 = vmatprep.subr.bf16.mxu0 0
    %776 = vmatpush1.bf16.msra.mxu0 0
    %777 = vmatprep.subr.bf16.mxu0 0
    %778 = vmatpush1.bf16.msra.mxu0 0
    %779 = vmatprep.subr.bf16.mxu0 0
    %780 = vmatpush1.bf16.msra.mxu0 0
    %781 = vmatprep.subr.bf16.mxu0 0
    %782 = vmatpush1.bf16.msra.mxu0 0
    %783 = vmatprep.subr.bf16.mxu0 0
    %784 = vmatpush1.bf16.msra.mxu0 0
    %785 = vmatprep.subr.bf16.mxu0 0
    %786 = vmatpush1.bf16.msra.mxu0 0
    %787 = vmatprep.subr.bf16.mxu0 0
    %788 = vmatpush1.bf16.msra.mxu0 0
    %789 = vmatprep.subr.bf16.mxu0 0
    %790 = vmatpush1.bf16.msra.mxu0 0
    %791 = vmatprep.subr.bf16.mxu0 0
    %792 = vmatpush1.bf16.msra.mxu0 0
    %793 = vmatprep.mubr.bf16.mxu0 0
    %794 = vmatmul.mubr.bf16.gmra.mrb[0].mxu0 %v759
    %v795 = vpop.f32.mrb[0].mxu0
    %v796 = vadd.f32 0.0, %v795
    %v797 = vpop.f32.mrb[0].mxu0
    %v798 = vadd.f32 0.0, %v797
    %v799 = vpop.f32.mrb[0].mxu0
    %v800 = vadd.f32 0.0, %v799
    %v801 = vpop.f32.mrb[0].mxu0
    %v802 = vadd.f32 0.0, %v801
    %803 = vdwg.mxu0
    %804 = vrot.lane.b32.xlu0 %v796, 127
    %v805 = vpop.permute.xlu0 %804
    %806 = vrot.lane.b32.xlu0 %v800, 127
    %v807 = vpop.permute.xlu0 %806
    %808 = vrot.lane.b32.xlu0 %v798, 127
    %v809 = vpop.permute.xlu0 %808
    %810 = vrot.lane.b32.xlu0 %v802, 127
    %v811 = vpop.permute.xlu0 %810
    %v812 = vsel %vm405, %v805, %v809
    %v813 = vsel %vm405, %v807, %v811
    %v814 = vsel %vm405, %v809, %v805
    %v815 = vsel %vm405, %v811, %v807
    %v816 = vmul.f32 %v812, %v269
    %v817 = vmul.f32 %v814, %v270
    %v818 = vmul.f32 %v813, %v269
    %v819 = vmul.f32 %v815, %v270
    %s820 = scalar_lea.vmem %s7, 8
    %v821 = vld [vmem:[%s820] sm:$0xf]
    %v822 = vld [vmem:[%s820 + $0x4] sm:$0xf]
    %v825 = vunpack.c.l.b16 %v821
    %v826 = vunpack.c.l.b16 %v822
    %v827 = vpack.c.b16 %v826, %v825
    %v829 = vsel %vm329, %v827, 0
    %831 = vmatprep.subr.bf16.mxu0 %v748
    %832 = vmatpush1.bf16.msra.mxu0 %v747
    %833 = vmatprep.subr.bf16.mxu0 %v750
    %834 = vmatpush1.bf16.msra.mxu0 %v749
    %835 = vmatprep.subr.bf16.mxu0 0
    %836 = vmatpush1.bf16.msra.mxu0 0
    %837 = vmatprep.subr.bf16.mxu0 0
    %838 = vmatpush1.bf16.msra.mxu0 0
    %839 = vmatprep.subr.bf16.mxu0 0
    %840 = vmatpush1.bf16.msra.mxu0 0
    %841 = vmatprep.subr.bf16.mxu0 0
    %842 = vmatpush1.bf16.msra.mxu0 0
    %843 = vmatprep.subr.bf16.mxu0 0
    %844 = vmatpush1.bf16.msra.mxu0 0
    %845 = vmatprep.subr.bf16.mxu0 0
    %846 = vmatpush1.bf16.msra.mxu0 0
    %847 = vmatprep.subr.bf16.mxu0 0
    %848 = vmatpush1.bf16.msra.mxu0 0
    %849 = vmatprep.subr.bf16.mxu0 0
    %850 = vmatpush1.bf16.msra.mxu0 0
    %851 = vmatprep.subr.bf16.mxu0 0
    %852 = vmatpush1.bf16.msra.mxu0 0
    %853 = vmatprep.subr.bf16.mxu0 0
    %854 = vmatpush1.bf16.msra.mxu0 0
    %855 = vmatprep.subr.bf16.mxu0 0
    %856 = vmatpush1.bf16.msra.mxu0 0
    %857 = vmatprep.subr.bf16.mxu0 0
    %858 = vmatpush1.bf16.msra.mxu0 0
    %859 = vmatprep.subr.bf16.mxu0 0
    %860 = vmatpush1.bf16.msra.mxu0 0
    %861 = vmatprep.subr.bf16.mxu0 0
    %862 = vmatpush1.bf16.msra.mxu0 0
    %863 = vmatprep.mubr.bf16.mxu0 0
    %864 = vmatmul.mubr.bf16.gmra.mrb[0].mxu0 %v829
    %v865 = vpop.f32.mrb[0].mxu0
    %v866 = vadd.f32 0.0, %v865
    %v867 = vpop.f32.mrb[0].mxu0
    %v868 = vadd.f32 0.0, %v867
    %v869 = vpop.f32.mrb[0].mxu0
    %v870 = vadd.f32 0.0, %v869
    %v871 = vpop.f32.mrb[0].mxu0
    %v872 = vadd.f32 0.0, %v871
    %873 = vdwg.mxu0
    %v874 = vadd.f32 %v816, %v866
    %v875 = vadd.f32 %v817, %v868
    %v876 = vadd.f32 %v818, %v870
    %v877 = vadd.f32 %v819, %v872
    %s878 = scalar_lea.vmem %s7, 16
    %v879 = vld [vmem:[%s878] sm:$0xf]
    %v880 = vld [vmem:[%s878 + $0x4] sm:$0xf]
    %v883 = vunpack.c.l.b16 %v879
    %v884 = vunpack.c.l.b16 %v880
    %v885 = vpack.c.b16 %v884, %v883
    %v887 = vsel %vm329, %v885, 0
    %889 = vmatprep.subr.bf16.mxu0 %v748
    %890 = vmatpush1.bf16.msra.mxu0 %v747
    %891 = vmatprep.subr.bf16.mxu0 %v750
    %892 = vmatpush1.bf16.msra.mxu0 %v749
    %893 = vmatprep.subr.bf16.mxu0 0
    %894 = vmatpush1.bf16.msra.mxu0 0
    %895 = vmatprep.subr.bf16.mxu0 0
    %896 = vmatpush1.bf16.msra.mxu0 0
    %897 = vmatprep.subr.bf16.mxu0 0
    %898 = vmatpush1.bf16.msra.mxu0 0
    %899 = vmatprep.subr.bf16.mxu0 0
    %900 = vmatpush1.bf16.msra.mxu0 0
    %901 = vmatprep.subr.bf16.mxu0 0
    %902 = vmatpush1.bf16.msra.mxu0 0
    %903 = vmatprep.subr.bf16.mxu0 0
    %904 = vmatpush1.bf16.msra.mxu0 0
    %905 = vmatprep.subr.bf16.mxu0 0
    %906 = vmatpush1.bf16.msra.mxu0 0
    %907 = vmatprep.subr.bf16.mxu0 0
    %908 = vmatpush1.bf16.msra.mxu0 0
    %909 = vmatprep.subr.bf16.mxu0 0
    %910 = vmatpush1.bf16.msra.mxu0 0
    %911 = vmatprep.subr.bf16.mxu0 0
    %912 = vmatpush1.bf16.msra.mxu0 0
    %913 = vmatprep.subr.bf16.mxu0 0
    %914 = vmatpush1.bf16.msra.mxu0 0
    %915 = vmatprep.subr.bf16.mxu0 0
    %916 = vmatpush1.bf16.msra.mxu0 0
    %917 = vmatprep.subr.bf16.mxu0 0
    %918 = vmatpush1.bf16.msra.mxu0 0
    %919 = vmatprep.subr.bf16.mxu0 0
    %920 = vmatpush1.bf16.msra.mxu0 0
    %921 = vmatprep.mubr.bf16.mxu0 0
    %922 = vmatmul.mubr.bf16.gmra.mrb[0].mxu0 %v887
    %v923 = vpop.f32.mrb[0].mxu0
    %v924 = vadd.f32 0.0, %v923
    %v925 = vpop.f32.mrb[0].mxu0
    %v926 = vadd.f32 0.0, %v925
    %v927 = vpop.f32.mrb[0].mxu0
    %v928 = vadd.f32 0.0, %v927
    %v929 = vpop.f32.mrb[0].mxu0
    %v930 = vadd.f32 0.0, %v929
    %931 = vdwg.mxu0
    %932 = vrot.lane.b32.xlu0 %v924, 1
    %v933 = vpop.permute.xlu0 %932
    %934 = vrot.lane.b32.xlu0 %v928, 1
    %v935 = vpop.permute.xlu0 %934
    %936 = vrot.lane.b32.xlu0 %v926, 1
    %v937 = vpop.permute.xlu0 %936
    %938 = vrot.lane.b32.xlu0 %v930, 1
    %v939 = vpop.permute.xlu0 %938
    %v940 = vsel %vm594, %v933, %v937
    %v941 = vsel %vm594, %v935, %v939
    %v942 = vsel %vm594, %v937, %v933
    %v943 = vsel %vm594, %v939, %v935
    %v944 = vmul.f32 %v942, %v281
    %v945 = vmul.f32 %v940, %v282
    %v946 = vmul.f32 %v943, %v281
    %v947 = vmul.f32 %v941, %v282
    %v948 = vadd.f32 %v874, %v944
    %v949 = vadd.f32 %v875, %v945
    %v950 = vadd.f32 %v876, %v946
    %v951 = vadd.f32 %v877, %v947
    %v952 = vld [vmem:[%s8] sm:$0xff]
    %v953 = vld [vmem:[%s8 + $0x8] sm:$0xff]
    %v954 = vadd.f32 %v948, %v949
    %955 = vadd.xlane.f32.xlu0 %v954
    %v956 = vpop.xlane.xlu0 %955
    %v957 = vadd.f32 %v950, %v951
    %958 = vadd.xlane.f32.xlu0 %v957
    %v959 = vpop.xlane.xlu0 %958
    %v960 = vmul.f32 %v956, 0.00390625
    %v961 = vmul.f32 %v959, 0.00390625
    %v962 = vsub.f32 %v948, %v960
    %v963 = vsub.f32 %v949, %v960
    %v964 = vsub.f32 %v950, %v961
    %v965 = vsub.f32 %v951, %v961
    %v966 = vmul.f32 %v962, %v962
    %v967 = vmul.f32 %v963, %v963
    %v968 = vmul.f32 %v964, %v964
    %v969 = vmul.f32 %v965, %v965
    %v970 = vadd.f32 %v966, %v967
    %971 = vadd.xlane.f32.xlu0 %v970
    %v972 = vpop.xlane.xlu0 %971
    %v973 = vadd.f32 %v968, %v969
    %974 = vadd.xlane.f32.xlu0 %v973
    %v975 = vpop.xlane.xlu0 %974
    %v976 = vmul.f32 %v972, 0.00390625
    %v977 = vmul.f32 %v975, 0.00390625
    %v978 = vadd.f32 %v976, 1e-05
    %v979 = vadd.f32 %v977, 1e-05
    %v980 = vrsqrt.pop %v978
    %v981 = vrsqrt.pop %v979
    %v982 = vmul.f32 %v980, %v952
    %v983 = vmul.f32 %v981, %v953
    %985 = vset.pattern.permute.xlu0 0
    %986 = vperm.xlu0 %985, %v982
    %v987 = vpop.permute.xlu0 %986
    %990 = vset.pattern.permute.xlu0 0
    %991 = vperm.xlu0 %990, %v983
    %v992 = vpop.permute.xlu0 %991
    %v994 = vmul.f32 %v962, %v987
    %v995 = vmul.f32 %v963, %v987
    %v996 = vmul.f32 %v964, %v992
    %v997 = vmul.f32 %v965, %v992
    %999 = vset.pattern.permute.xlu0 1
    %1000 = vperm.xlu0 %999, %v952
    %v1001 = vpop.permute.xlu0 %1000
    %1004 = vset.pattern.permute.xlu0 1
    %1005 = vperm.xlu0 %1004, %v953
    %v1006 = vpop.permute.xlu0 %1005
    %v1008 = vadd.f32 %v994, %v1001
    %v1009 = vadd.f32 %v995, %v1001
    %v1010 = vadd.f32 %v996, %v1006
    %v1011 = vadd.f32 %v997, %v1006
    %v1012 = vld [vmem:[%s9] sm:$0xf]
    %v1013 = vld [vmem:[%s9 + $0x4] sm:$0xf]
    %v1016 = vunpack.c.l.b16 %v1012
    %v1017 = vunpack.c.l.b16 %v1013
    %v1018 = vpack.c.b16 %v1017, %v1016
    %v1020 = vsel %vm329, %v1018, 0
    %1022 = vmatprep.subr.bf16.mxu0 %v312
    %1023 = vmatpush1.bf16.msra.mxu0 %v311
    %1024 = vmatprep.subr.bf16.mxu0 %v314
    %1025 = vmatpush1.bf16.msra.mxu0 %v313
    %1026 = vmatprep.subr.bf16.mxu0 0
    %1027 = vmatpush1.bf16.msra.mxu0 0
    %1028 = vmatprep.subr.bf16.mxu0 0
    %1029 = vmatpush1.bf16.msra.mxu0 0
    %1030 = vmatprep.subr.bf16.mxu0 0
    %1031 = vmatpush1.bf16.msra.mxu0 0
    %1032 = vmatprep.subr.bf16.mxu0 0
    %1033 = vmatpush1.bf16.msra.mxu0 0
    %1034 = vmatprep.subr.bf16.mxu0 0
    %1035 = vmatpush1.bf16.msra.mxu0 0
    %1036 = vmatprep.subr.bf16.mxu0 0
    %1037 = vmatpush1.bf16.msra.mxu0 0
    %1038 = vmatprep.subr.bf16.mxu0 0
    %1039 = vmatpush1.bf16.msra.mxu0 0
    %1040 = vmatprep.subr.bf16.mxu0 0
    %1041 = vmatpush1.bf16.msra.mxu0 0
    %1042 = vmatprep.subr.bf16.mxu0 0
    %1043 = vmatpush1.bf16.msra.mxu0 0
    %1044 = vmatprep.subr.bf16.mxu0 0
    %1045 = vmatpush1.bf16.msra.mxu0 0
    %1046 = vmatprep.subr.bf16.mxu0 0
    %1047 = vmatpush1.bf16.msra.mxu0 0
    %1048 = vmatprep.subr.bf16.mxu0 0
    %1049 = vmatpush1.bf16.msra.mxu0 0
    %1050 = vmatprep.subr.bf16.mxu0 0
    %1051 = vmatpush1.bf16.msra.mxu0 0
    %1052 = vmatprep.subr.bf16.mxu0 0
    %1053 = vmatpush1.bf16.msra.mxu0 0
    %1054 = vmatprep.mubr.bf16.mxu0 0
    %1055 = vmatmul.mubr.bf16.gmra.mrb[0].mxu0 %v1020
    %v1056 = vpop.f32.mrb[0].mxu0
    %v1057 = vadd.f32 0.0, %v1056
    %v1058 = vpop.f32.mrb[0].mxu0
    %v1059 = vadd.f32 0.0, %v1058
    %v1060 = vpop.f32.mrb[0].mxu0
    %v1061 = vadd.f32 0.0, %v1060
    %v1062 = vpop.f32.mrb[0].mxu0
    %v1063 = vadd.f32 0.0, %v1062
    %1064 = vdwg.mxu0
    %v1065 = vld [vmem:[%s10] sm:$0xff]
    %v1066 = vld [vmem:[%s10 + $0x8] sm:$0xff]
    %v1067 = vadd.f32 %v1057, %v1059
    %1068 = vadd.xlane.f32.xlu0 %v1067
    %v1069 = vpop.xlane.xlu0 %1068
    %v1070 = vadd.f32 %v1061, %v1063
    %1071 = vadd.xlane.f32.xlu0 %v1070
    %v1072 = vpop.xlane.xlu0 %1071
    %v1073 = vmul.f32 %v1069, 0.00390625
    %v1074 = vmul.f32 %v1072, 0.00390625
    %v1075 = vsub.f32 %v1057, %v1073
    %v1076 = vsub.f32 %v1059, %v1073
    %v1077 = vsub.f32 %v1061, %v1074
    %v1078 = vsub.f32 %v1063, %v1074
    %v1079 = vmul.f32 %v1075, %v1075
    %v1080 = vmul.f32 %v1076, %v1076
    %v1081 = vmul.f32 %v1077, %v1077
    %v1082 = vmul.f32 %v1078, %v1078
    %v1083 = vadd.f32 %v1079, %v1080
    %1084 = vadd.xlane.f32.xlu0 %v1083
    %v1085 = vpop.xlane.xlu0 %1084
    %v1086 = vadd.f32 %v1081, %v1082
    %1087 = vadd.xlane.f32.xlu0 %v1086
    %v1088 = vpop.xlane.xlu0 %1087
    %v1089 = vmul.f32 %v1085, 0.00390625
    %v1090 = vmul.f32 %v1088, 0.00390625
    %v1091 = vadd.f32 %v1089, 1e-05
    %v1092 = vadd.f32 %v1090, 1e-05
    %v1093 = vrsqrt.pop %v1091
    %v1094 = vrsqrt.pop %v1092
    %v1095 = vmul.f32 %v1093, %v1065
    %v1096 = vmul.f32 %v1094, %v1066
    %1098 = vset.pattern.permute.xlu0 0
    %1099 = vperm.xlu0 %1098, %v1095
    %v1100 = vpop.permute.xlu0 %1099
    %1103 = vset.pattern.permute.xlu0 0
    %1104 = vperm.xlu0 %1103, %v1096
    %v1105 = vpop.permute.xlu0 %1104
    %v1107 = vmul.f32 %v1075, %v1100
    %v1108 = vmul.f32 %v1076, %v1100
    %v1109 = vmul.f32 %v1077, %v1105
    %v1110 = vmul.f32 %v1078, %v1105
    %1112 = vset.pattern.permute.xlu0 1
    %1113 = vperm.xlu0 %1112, %v1065
    %v1114 = vpop.permute.xlu0 %1113
    %1117 = vset.pattern.permute.xlu0 1
    %1118 = vperm.xlu0 %1117, %v1066
    %v1119 = vpop.permute.xlu0 %1118
    %v1121 = vadd.f32 %v1107, %v1114
    %v1122 = vadd.f32 %v1108, %v1114
    %v1123 = vadd.f32 %v1109, %v1119
    %v1124 = vadd.f32 %v1110, %v1119
    %v1125 = vadd.f32 %v1008, %v1121
    %v1126 = vadd.f32 %v1009, %v1122
    %v1127 = vadd.f32 %v1010, %v1123
    %v1128 = vadd.f32 %v1011, %v1124
    %v1129 = vmax.f32 %v1125, 0.0
    %v1130 = vmax.f32 %v1126, 0.0
    %v1131 = vmax.f32 %v1127, 0.0
    %v1132 = vmax.f32 %v1128, 0.0
    %s1133 = smul.u32 4, 2
    %s1134 = smul.u32 %s1133, 2
    %s1135 = sshll.u32 %s1134, 4
    %1136 = dma.done [#allocation5], %s1135
    %v1137 = vld [vmem:[#allocation2] sm:$0xff]
    %v1138 = vld [vmem:[#allocation2 + $0x8] sm:$0xff]
    %v1139 = vunpack.c.l.bf16 %v1137
    %v1140 = vunpack.c.l.bf16 %v1138
    %v1141 = vunpack.c.h.bf16 %v1137
    %v1142 = vunpack.c.h.bf16 %v1138
    %v1143 = vadd.f32 %v1129, %v1139
    %v1144 = vadd.f32 %v1130, %v1140
    %v1145 = vadd.f32 %v1131, %v1141
    %v1146 = vadd.f32 %v1132, %v1142
    %v1147 = vpack.c.bf16 %v1145, %v1143
    %v1148 = vpack.c.bf16 %v1146, %v1144
    %v1149 = vld [vmem:[%s11] sm:$0xf]
    %v1150 = vld [vmem:[%s11 + $0x4] sm:$0xf]
    %v1153 = vunpack.c.l.b16 %v1149
    %v1154 = vunpack.c.l.b16 %v1150
    %v1155 = vpack.c.b16 %v1154, %v1153
    %vm1156 = vcmask 130048
    %v1158 = vsel %vm1156, %v1155, 0
    %1160 = vmatprep.subr.bf16.mxu0 %v1148
    %1161 = vmatpush1.bf16.msra.mxu0 %v1147
    %1162 = vmatprep.subr.bf16.mxu0 0
    %1163 = vmatpush1.bf16.msra.mxu0 0
    %1164 = vmatprep.subr.bf16.mxu0 0
    %1165 = vmatpush1.bf16.msra.mxu0 0
    %1166 = vmatprep.subr.bf16.mxu0 0
    %1167 = vmatpush1.bf16.msra.mxu0 0
    %1168 = vmatprep.subr.bf16.mxu0 0
    %1169 = vmatpush1.bf16.msra.mxu0 0
    %1170 = vmatprep.subr.bf16.mxu0 0
    %1171 = vmatpush1.bf16.msra.mxu0 0
    %1172 = vmatprep.subr.bf16.mxu0 0
    %1173 = vmatpush1.bf16.msra.mxu0 0
    %1174 = vmatprep.subr.bf16.mxu0 0
    %1175 = vmatpush1.bf16.msra.mxu0 0
    %1176 = vmatprep.subr.bf16.mxu0 0
    %1177 = vmatpush1.bf16.msra.mxu0 0
    %1178 = vmatprep.subr.bf16.mxu0 0
    %1179 = vmatpush1.bf16.msra.mxu0 0
    %1180 = vmatprep.subr.bf16.mxu0 0
    %1181 = vmatpush1.bf16.msra.mxu0 0
    %1182 = vmatprep.subr.bf16.mxu0 0
    %1183 = vmatpush1.bf16.msra.mxu0 0
    %1184 = vmatprep.subr.bf16.mxu0 0
    %1185 = vmatpush1.bf16.msra.mxu0 0
    %1186 = vmatprep.subr.bf16.mxu0 0
    %1187 = vmatpush1.bf16.msra.mxu0 0
    %1188 = vmatprep.subr.bf16.mxu0 0
    %1189 = vmatpush1.bf16.msra.mxu0 0
    %1190 = vmatprep.subr.bf16.mxu0 0
    %1191 = vmatpush1.bf16.msra.mxu0 0
    %1192 = vmatprep.mubr.bf16.mxu0 0
    %1193 = vmatmul.mubr.bf16.gmra.mrb[0].mxu0 %v1158
    %v1194 = vpop.f32.mrb[0].mxu0
    %v1195 = vadd.f32 0.0, %v1194
    %v1196 = vpop.f32.mrb[0].mxu0
    %v1197 = vadd.f32 0.0, %v1196
    %v1198 = vpop.f32.mrb[0].mxu0
    %v1199 = vadd.f32 0.0, %v1198
    %v1200 = vpop.f32.mrb[0].mxu0
    %v1201 = vadd.f32 0.0, %v1200
    %1202 = vdwg.mxu0
    %1203 = vrot.lane.b32.xlu0 %v1195, 127
    %v1204 = vpop.permute.xlu0 %1203
    %1205 = vrot.lane.b32.xlu0 %v1199, 127
    %v1206 = vpop.permute.xlu0 %1205
    %1207 = vrot.lane.b32.xlu0 %v1197, 127
    %v1208 = vpop.permute.xlu0 %1207
    %1209 = vrot.lane.b32.xlu0 %v1201, 127
    %v1210 = vpop.permute.xlu0 %1209
    %v1211 = vsel %vm405, %v1204, %v1208
    %v1212 = vsel %vm405, %v1206, %v1210
    %v1213 = vsel %vm405, %v1208, %v1204
    %v1214 = vsel %vm405, %v1210, %v1206
    %v1215 = vmul.f32 %v1211, %v269
    %v1216 = vmul.f32 %v1213, %v270
    %v1217 = vmul.f32 %v1212, %v269
    %v1218 = vmul.f32 %v1214, %v270
    %s1219 = scalar_lea.vmem %s11, 8
    %v1220 = vld [vmem:[%s1219] sm:$0xf]
    %v1221 = vld [vmem:[%s1219 + $0x4] sm:$0xf]
    %v1224 = vunpack.c.l.b16 %v1220
    %v1225 = vunpack.c.l.b16 %v1221
    %v1226 = vpack.c.b16 %v1225, %v1224
    %v1228 = vsel %vm1156, %v1226, 0
    %1230 = vmatprep.subr.bf16.mxu0 %v1148
    %1231 = vmatpush1.bf16.msra.mxu0 %v1147
    %1232 = vmatprep.subr.bf16.mxu0 0
    %1233 = vmatpush1.bf16.msra.mxu0 0
    %1234 = vmatprep.subr.bf16.mxu0 0
    %1235 = vmatpush1.bf16.msra.mxu0 0
    %1236 = vmatprep.subr.bf16.mxu0 0
    %1237 = vmatpush1.bf16.msra.mxu0 0
    %1238 = vmatprep.subr.bf16.mxu0 0
    %1239 = vmatpush1.bf16.msra.mxu0 0
    %1240 = vmatprep.subr.bf16.mxu0 0
    %1241 = vmatpush1.bf16.msra.mxu0 0
    %1242 = vmatprep.subr.bf16.mxu0 0
    %1243 = vmatpush1.bf16.msra.mxu0 0
    %1244 = vmatprep.subr.bf16.mxu0 0
    %1245 = vmatpush1.bf16.msra.mxu0 0
    %1246 = vmatprep.subr.bf16.mxu0 0
    %1247 = vmatpush1.bf16.msra.mxu0 0
    %1248 = vmatprep.subr.bf16.mxu0 0
    %1249 = vmatpush1.bf16.msra.mxu0 0
    %1250 = vmatprep.subr.bf16.mxu0 0
    %1251 = vmatpush1.bf16.msra.mxu0 0
    %1252 = vmatprep.subr.bf16.mxu0 0
    %1253 = vmatpush1.bf16.msra.mxu0 0
    %1254 = vmatprep.subr.bf16.mxu0 0
    %1255 = vmatpush1.bf16.msra.mxu0 0
    %1256 = vmatprep.subr.bf16.mxu0 0
    %1257 = vmatpush1.bf16.msra.mxu0 0
    %1258 = vmatprep.subr.bf16.mxu0 0
    %1259 = vmatpush1.bf16.msra.mxu0 0
    %1260 = vmatprep.subr.bf16.mxu0 0
    %1261 = vmatpush1.bf16.msra.mxu0 0
    %1262 = vmatprep.mubr.bf16.mxu0 0
    %1263 = vmatmul.mubr.bf16.gmra.mrb[0].mxu0 %v1228
    %v1264 = vpop.f32.mrb[0].mxu0
    %v1265 = vadd.f32 0.0, %v1264
    %v1266 = vpop.f32.mrb[0].mxu0
    %v1267 = vadd.f32 0.0, %v1266
    %v1268 = vpop.f32.mrb[0].mxu0
    %v1269 = vadd.f32 0.0, %v1268
    %v1270 = vpop.f32.mrb[0].mxu0
    %v1271 = vadd.f32 0.0, %v1270
    %1272 = vdwg.mxu0
    %v1273 = vadd.f32 %v1215, %v1265
    %v1274 = vadd.f32 %v1216, %v1267
    %v1275 = vadd.f32 %v1217, %v1269
    %v1276 = vadd.f32 %v1218, %v1271
    %s1277 = scalar_lea.vmem %s11, 16
    %v1278 = vld [vmem:[%s1277] sm:$0xf]
    %v1279 = vld [vmem:[%s1277 + $0x4] sm:$0xf]
    %v1282 = vunpack.c.l.b16 %v1278
    %v1283 = vunpack.c.l.b16 %v1279
    %v1284 = vpack.c.b16 %v1283, %v1282
    %v1286 = vsel %vm1156, %v1284, 0
    %1288 = vmatprep.subr.bf16.mxu0 %v1148
    %1289 = vmatpush1.bf16.msra.mxu0 %v1147
    %1290 = vmatprep.subr.bf16.mxu0 0
    %1291 = vmatpush1.bf16.msra.mxu0 0
    %1292 = vmatprep.subr.bf16.mxu0 0
    %1293 = vmatpush1.bf16.msra.mxu0 0
    %1294 = vmatprep.subr.bf16.mxu0 0
    %1295 = vmatpush1.bf16.msra.mxu0 0
    %1296 = vmatprep.subr.bf16.mxu0 0
    %1297 = vmatpush1.bf16.msra.mxu0 0
    %1298 = vmatprep.subr.bf16.mxu0 0
    %1299 = vmatpush1.bf16.msra.mxu0 0
    %1300 = vmatprep.subr.bf16.mxu0 0
    %1301 = vmatpush1.bf16.msra.mxu0 0
    %1302 = vmatprep.subr.bf16.mxu0 0
    %1303 = vmatpush1.bf16.msra.mxu0 0
    %1304 = vmatprep.subr.bf16.mxu0 0
    %1305 = vmatpush1.bf16.msra.mxu0 0
    %1306 = vmatprep.subr.bf16.mxu0 0
    %1307 = vmatpush1.bf16.msra.mxu0 0
    %1308 = vmatprep.subr.bf16.mxu0 0
    %1309 = vmatpush1.bf16.msra.mxu0 0
    %1310 = vmatprep.subr.bf16.mxu0 0
    %1311 = vmatpush1.bf16.msra.mxu0 0
    %1312 = vmatprep.subr.bf16.mxu0 0
    %1313 = vmatpush1.bf16.msra.mxu0 0
    %1314 = vmatprep.subr.bf16.mxu0 0
    %1315 = vmatpush1.bf16.msra.mxu0 0
    %1316 = vmatprep.subr.bf16.mxu0 0
    %1317 = vmatpush1.bf16.msra.mxu0 0
    %1318 = vmatprep.subr.bf16.mxu0 0
    %1319 = vmatpush1.bf16.msra.mxu0 0
    %1320 = vmatprep.mubr.bf16.mxu0 0
    %1321 = vmatmul.mubr.bf16.gmra.mrb[0].mxu0 %v1286
    %v1322 = vpop.f32.mrb[0].mxu0
    %v1323 = vadd.f32 0.0, %v1322
    %v1324 = vpop.f32.mrb[0].mxu0
    %v1325 = vadd.f32 0.0, %v1324
    %v1326 = vpop.f32.mrb[0].mxu0
    %v1327 = vadd.f32 0.0, %v1326
    %v1328 = vpop.f32.mrb[0].mxu0
    %v1329 = vadd.f32 0.0, %v1328
    %1330 = vdwg.mxu0
    %1331 = vrot.lane.b32.xlu0 %v1323, 1
    %v1332 = vpop.permute.xlu0 %1331
    %1333 = vrot.lane.b32.xlu0 %v1327, 1
    %v1334 = vpop.permute.xlu0 %1333
    %1335 = vrot.lane.b32.xlu0 %v1325, 1
    %v1336 = vpop.permute.xlu0 %1335
    %1337 = vrot.lane.b32.xlu0 %v1329, 1
    %v1338 = vpop.permute.xlu0 %1337
    %v1339 = vsel %vm594, %v1332, %v1336
    %v1340 = vsel %vm594, %v1334, %v1338
    %v1341 = vsel %vm594, %v1336, %v1332
    %v1342 = vsel %vm594, %v1338, %v1334
    %v1343 = vmul.f32 %v1341, %v281
    %v1344 = vmul.f32 %v1339, %v282
    %v1345 = vmul.f32 %v1342, %v281
    %v1346 = vmul.f32 %v1340, %v282
    %v1347 = vadd.f32 %v1273, %v1343
    %v1348 = vadd.f32 %v1274, %v1344
    %v1349 = vadd.f32 %v1275, %v1345
    %v1350 = vadd.f32 %v1276, %v1346
    %v1351 = vld [vmem:[%s12] sm:$0xff]
    %v1352 = vld [vmem:[%s12 + $0x8] sm:$0xff]
    %v1353 = vadd.f32 %v1347, %v1348
    %1354 = vadd.xlane.f32.xlu0 %v1353
    %v1355 = vpop.xlane.xlu0 %1354
    %v1356 = vadd.f32 %v1349, %v1350
    %1357 = vadd.xlane.f32.xlu0 %v1356
    %v1358 = vpop.xlane.xlu0 %1357
    %v1359 = vmul.f32 %v1355, 0.00390625
    %v1360 = vmul.f32 %v1358, 0.00390625
    %v1361 = vsub.f32 %v1347, %v1359
    %v1362 = vsub.f32 %v1348, %v1359
    %v1363 = vsub.f32 %v1349, %v1360
    %v1364 = vsub.f32 %v1350, %v1360
    %v1365 = vmul.f32 %v1361, %v1361
    %v1366 = vmul.f32 %v1362, %v1362
    %v1367 = vmul.f32 %v1363, %v1363
    %v1368 = vmul.f32 %v1364, %v1364
    %v1369 = vadd.f32 %v1365, %v1366
    %1370 = vadd.xlane.f32.xlu0 %v1369
    %v1371 = vpop.xlane.xlu0 %1370
    %v1372 = vadd.f32 %v1367, %v1368
    %1373 = vadd.xlane.f32.xlu0 %v1372
    %v1374 = vpop.xlane.xlu0 %1373
    %v1375 = vmul.f32 %v1371, 0.00390625
    %v1376 = vmul.f32 %v1374, 0.00390625
    %v1377 = vadd.f32 %v1375, 1e-05
    %v1378 = vadd.f32 %v1376, 1e-05
    %v1379 = vrsqrt.pop %v1377
    %v1380 = vrsqrt.pop %v1378
    %v1381 = vmul.f32 %v1379, %v1351
    %v1382 = vmul.f32 %v1380, %v1352
    %1384 = vset.pattern.permute.xlu0 0
    %1385 = vperm.xlu0 %1384, %v1381
    %v1386 = vpop.permute.xlu0 %1385
    %1389 = vset.pattern.permute.xlu0 0
    %1390 = vperm.xlu0 %1389, %v1382
    %v1391 = vpop.permute.xlu0 %1390
    %v1393 = vmul.f32 %v1361, %v1386
    %v1394 = vmul.f32 %v1362, %v1386
    %v1395 = vmul.f32 %v1363, %v1391
    %v1396 = vmul.f32 %v1364, %v1391
    %1398 = vset.pattern.permute.xlu0 1
    %1399 = vperm.xlu0 %1398, %v1351
    %v1400 = vpop.permute.xlu0 %1399
    %1403 = vset.pattern.permute.xlu0 1
    %1404 = vperm.xlu0 %1403, %v1352
    %v1405 = vpop.permute.xlu0 %1404
    %v1407 = vadd.f32 %v1393, %v1400
    %v1408 = vadd.f32 %v1394, %v1400
    %v1409 = vadd.f32 %v1395, %v1405
    %v1410 = vadd.f32 %v1396, %v1405
    %v1411 = vmax.f32 %v1407, 0.0
    %v1412 = vmax.f32 %v1408, 0.0
    %v1413 = vmax.f32 %v1409, 0.0
    %v1414 = vmax.f32 %v1410, 0.0
    %v1415 = vpack.c.bf16 %v1413, %v1411
    %v1416 = vpack.c.bf16 %v1414, %v1412
    %v1417 = vld [vmem:[%s13] sm:$0xf]
    %v1419 = vsel %vm1156, %v1417, 0
    %1421 = vmatprep.subr.bf16.mxu0 %v1416
    %1422 = vmatpush1.bf16.msra.mxu0 %v1415
    %1423 = vmatprep.subr.bf16.mxu0 0
    %1424 = vmatpush1.bf16.msra.mxu0 0
    %1425 = vmatprep.subr.bf16.mxu0 0
    %1426 = vmatpush1.bf16.msra.mxu0 0
    %1427 = vmatprep.subr.bf16.mxu0 0
    %1428 = vmatpush1.bf16.msra.mxu0 0
    %1429 = vmatprep.subr.bf16.mxu0 0
    %1430 = vmatpush1.bf16.msra.mxu0 0
    %1431 = vmatprep.subr.bf16.mxu0 0
    %1432 = vmatpush1.bf16.msra.mxu0 0
    %1433 = vmatprep.subr.bf16.mxu0 0
    %1434 = vmatpush1.bf16.msra.mxu0 0
    %1435 = vmatprep.subr.bf16.mxu0 0
    %1436 = vmatpush1.bf16.msra.mxu0 0
    %1437 = vmatprep.subr.bf16.mxu0 0
    %1438 = vmatpush1.bf16.msra.mxu0 0
    %1439 = vmatprep.subr.bf16.mxu0 0
    %1440 = vmatpush1.bf16.msra.mxu0 0
    %1441 = vmatprep.subr.bf16.mxu0 0
    %1442 = vmatpush1.bf16.msra.mxu0 0
    %1443 = vmatprep.subr.bf16.mxu0 0
    %1444 = vmatpush1.bf16.msra.mxu0 0
    %1445 = vmatprep.subr.bf16.mxu0 0
    %1446 = vmatpush1.bf16.msra.mxu0 0
    %1447 = vmatprep.subr.bf16.mxu0 0
    %1448 = vmatpush1.bf16.msra.mxu0 0
    %1449 = vmatprep.subr.bf16.mxu0 0
    %1450 = vmatpush1.bf16.msra.mxu0 0
    %1451 = vmatprep.subr.bf16.mxu0 0
    %1452 = vmatpush1.bf16.msra.mxu0 0
    %1453 = vmatprep.mubr.bf16.mxu0 0
    %1454 = vmatmul.mubr.bf16.gmra.mrb[0].mxu0 %v1419
    %v1455 = vpop.f32.mrb[0].mxu0
    %v1456 = vadd.f32 0.0, %v1455
    %v1457 = vpop.f32.mrb[0].mxu0
    %v1458 = vadd.f32 0.0, %v1457
    %v1459 = vpop.f32.mrb[0].mxu0
    %v1460 = vpop.f32.mrb[0].mxu0
    %1461 = vdwg.mxu0
    %1462 = vrot.lane.b32.xlu0 %v1456, 127
    %v1463 = vpop.permute.xlu0 %1462
    %1464 = vrot.lane.b32.xlu0 %v1458, 127
    %v1465 = vpop.permute.xlu0 %1464
    %v1466 = vsel %vm405, %v1463, %v1465
    %v1467 = vsel %vm405, %v1465, %v1463
    %v1468 = vmul.f32 %v1466, %v269
    %v1469 = vmul.f32 %v1467, %v270
    %s1470 = scalar_lea.vmem %s13, 4
    %v1471 = vld [vmem:[%s1470] sm:$0xf]
    %v1473 = vsel %vm1156, %v1471, 0
    %1475 = vmatprep.subr.bf16.mxu0 %v1416
    %1476 = vmatpush1.bf16.msra.mxu0 %v1415
    %1477 = vmatprep.subr.bf16.mxu0 0
    %1478 = vmatpush1.bf16.msra.mxu0 0
    %1479 = vmatprep.subr.bf16.mxu0 0
    %1480 = vmatpush1.bf16.msra.mxu0 0
    %1481 = vmatprep.subr.bf16.mxu0 0
    %1482 = vmatpush1.bf16.msra.mxu0 0
    %1483 = vmatprep.subr.bf16.mxu0 0
    %1484 = vmatpush1.bf16.msra.mxu0 0
    %1485 = vmatprep.subr.bf16.mxu0 0
    %1486 = vmatpush1.bf16.msra.mxu0 0
    %1487 = vmatprep.subr.bf16.mxu0 0
    %1488 = vmatpush1.bf16.msra.mxu0 0
    %1489 = vmatprep.subr.bf16.mxu0 0
    %1490 = vmatpush1.bf16.msra.mxu0 0
    %1491 = vmatprep.subr.bf16.mxu0 0
    %1492 = vmatpush1.bf16.msra.mxu0 0
    %1493 = vmatprep.subr.bf16.mxu0 0
    %1494 = vmatpush1.bf16.msra.mxu0 0
    %1495 = vmatprep.subr.bf16.mxu0 0
    %1496 = vmatpush1.bf16.msra.mxu0 0
    %1497 = vmatprep.subr.bf16.mxu0 0
    %1498 = vmatpush1.bf16.msra.mxu0 0
    %1499 = vmatprep.subr.bf16.mxu0 0
    %1500 = vmatpush1.bf16.msra.mxu0 0
    %1501 = vmatprep.subr.bf16.mxu0 0
    %1502 = vmatpush1.bf16.msra.mxu0 0
    %1503 = vmatprep.subr.bf16.mxu0 0
    %1504 = vmatpush1.bf16.msra.mxu0 0
    %1505 = vmatprep.subr.bf16.mxu0 0
    %1506 = vmatpush1.bf16.msra.mxu0 0
    %1507 = vmatprep.mubr.bf16.mxu0 0
    %1508 = vmatmul.mubr.bf16.gmra.mrb[0].mxu0 %v1473
    %v1509 = vpop.f32.mrb[0].mxu0
    %v1510 = vadd.f32 0.0, %v1509
    %v1511 = vpop.f32.mrb[0].mxu0
    %v1512 = vadd.f32 0.0, %v1511
    %v1513 = vpop.f32.mrb[0].mxu0
    %v1514 = vpop.f32.mrb[0].mxu0
    %1515 = vdwg.mxu0
    %v1516 = vadd.f32 %v1468, %v1510
    %v1517 = vadd.f32 %v1469, %v1512
    %s1518 = scalar_lea.vmem %s13, 8
    %v1519 = vld [vmem:[%s1518] sm:$0xf]
    %v1521 = vsel %vm1156, %v1519, 0
    %1523 = vmatprep.subr.bf16.mxu0 %v1416
    %1524 = vmatpush1.bf16.msra.mxu0 %v1415
    %1525 = vmatprep.subr.bf16.mxu0 0
    %1526 = vmatpush1.bf16.msra.mxu0 0
    %1527 = vmatprep.subr.bf16.mxu0 0
    %1528 = vmatpush1.bf16.msra.mxu0 0
    %1529 = vmatprep.subr.bf16.mxu0 0
    %1530 = vmatpush1.bf16.msra.mxu0 0
    %1531 = vmatprep.subr.bf16.mxu0 0
    %1532 = vmatpush1.bf16.msra.mxu0 0
    %1533 = vmatprep.subr.bf16.mxu0 0
    %1534 = vmatpush1.bf16.msra.mxu0 0
    %1535 = vmatprep.subr.bf16.mxu0 0
    %1536 = vmatpush1.bf16.msra.mxu0 0
    %1537 = vmatprep.subr.bf16.mxu0 0
    %1538 = vmatpush1.bf16.msra.mxu0 0
    %1539 = vmatprep.subr.bf16.mxu0 0
    %1540 = vmatpush1.bf16.msra.mxu0 0
    %1541 = vmatprep.subr.bf16.mxu0 0
    %1542 = vmatpush1.bf16.msra.mxu0 0
    %1543 = vmatprep.subr.bf16.mxu0 0
    %1544 = vmatpush1.bf16.msra.mxu0 0
    %1545 = vmatprep.subr.bf16.mxu0 0
    %1546 = vmatpush1.bf16.msra.mxu0 0
    %1547 = vmatprep.subr.bf16.mxu0 0
    %1548 = vmatpush1.bf16.msra.mxu0 0
    %1549 = vmatprep.subr.bf16.mxu0 0
    %1550 = vmatpush1.bf16.msra.mxu0 0
    %1551 = vmatprep.subr.bf16.mxu0 0
    %1552 = vmatpush1.bf16.msra.mxu0 0
    %1553 = vmatprep.subr.bf16.mxu0 0
    %1554 = vmatpush1.bf16.msra.mxu0 0
    %1555 = vmatprep.mubr.bf16.mxu0 0
    %1556 = vmatmul.mubr.bf16.gmra.mrb[0].mxu0 %v1521
    %v1557 = vpop.f32.mrb[0].mxu0
    %v1558 = vadd.f32 0.0, %v1557
    %v1559 = vpop.f32.mrb[0].mxu0
    %v1560 = vadd.f32 0.0, %v1559
    %v1561 = vpop.f32.mrb[0].mxu0
    %v1562 = vpop.f32.mrb[0].mxu0
    %1563 = vdwg.mxu0
    %1564 = vrot.lane.b32.xlu0 %v1558, 1
    %v1565 = vpop.permute.xlu0 %1564
    %1566 = vrot.lane.b32.xlu0 %v1560, 1
    %v1567 = vpop.permute.xlu0 %1566
    %v1568 = vsel %vm594, %v1565, %v1567
    %v1569 = vsel %vm594, %v1567, %v1565
    %v1570 = vmul.f32 %v1569, %v281
    %v1571 = vmul.f32 %v1568, %v282
    %v1572 = vadd.f32 %v1516, %v1570
    %v1573 = vadd.f32 %v1517, %v1571
    %v1574 = vld [vmem:[%s14] sm:$0xff]
    %v1575 = vadd.f32 %v1572, %v1573
    %1576 = vadd.xlane.f32.xlu0 %v1575
    %v1577 = vpop.xlane.xlu0 %1576
    %v1578 = vmul.f32 %v1577, 0.00390625
    %v1579 = vsub.f32 %v1572, %v1578
    %v1580 = vsub.f32 %v1573, %v1578
    %v1581 = vmul.f32 %v1579, %v1579
    %v1582 = vmul.f32 %v1580, %v1580
    %v1583 = vadd.f32 %v1581, %v1582
    %1584 = vadd.xlane.f32.xlu0 %v1583
    %v1585 = vpop.xlane.xlu0 %1584
    %v1586 = vmul.f32 %v1585, 0.00390625
    %v1587 = vadd.f32 %v1586, 1e-05
    %v1588 = vrsqrt.pop %v1587
    %v1589 = vmul.f32 %v1588, %v1574
    %1591 = vset.pattern.permute.xlu0 0
    %1592 = vperm.xlu0 %1591, %v1589
    %v1593 = vpop.permute.xlu0 %1592
    %v1595 = vmul.f32 %v1579, %v1593
    %v1596 = vmul.f32 %v1580, %v1593
    %1598 = vset.pattern.permute.xlu0 1
    %1599 = vperm.xlu0 %1598, %v1574
    %v1600 = vpop.permute.xlu0 %1599
    %v1602 = vadd.f32 %v1595, %v1600
    %v1603 = vadd.f32 %v1596, %v1600
    %v1604 = vld [vmem:[%s15] sm:$0xf]
    %v1606 = vsel %vm1156, %v1604, 0
    %1608 = vmatprep.subr.bf16.mxu0 %v1148
    %1609 = vmatpush1.bf16.msra.mxu0 %v1147
    %1610 = vmatprep.subr.bf16.mxu0 0
    %1611 = vmatpush1.bf16.msra.mxu0 0
    %1612 = vmatprep.subr.bf16.mxu0 0
    %1613 = vmatpush1.bf16.msra.mxu0 0
    %1614 = vmatprep.subr.bf16.mxu0 0
    %1615 = vmatpush1.bf16.msra.mxu0 0
    %1616 = vmatprep.subr.bf16.mxu0 0
    %1617 = vmatpush1.bf16.msra.mxu0 0
    %1618 = vmatprep.subr.bf16.mxu0 0
    %1619 = vmatpush1.bf16.msra.mxu0 0
    %1620 = vmatprep.subr.bf16.mxu0 0
    %1621 = vmatpush1.bf16.msra.mxu0 0
    %1622 = vmatprep.subr.bf16.mxu0 0
    %1623 = vmatpush1.bf16.msra.mxu0 0
    %1624 = vmatprep.subr.bf16.mxu0 0
    %1625 = vmatpush1.bf16.msra.mxu0 0
    %1626 = vmatprep.subr.bf16.mxu0 0
    %1627 = vmatpush1.bf16.msra.mxu0 0
    %1628 = vmatprep.subr.bf16.mxu0 0
    %1629 = vmatpush1.bf16.msra.mxu0 0
    %1630 = vmatprep.subr.bf16.mxu0 0
    %1631 = vmatpush1.bf16.msra.mxu0 0
    %1632 = vmatprep.subr.bf16.mxu0 0
    %1633 = vmatpush1.bf16.msra.mxu0 0
    %1634 = vmatprep.subr.bf16.mxu0 0
    %1635 = vmatpush1.bf16.msra.mxu0 0
    %1636 = vmatprep.subr.bf16.mxu0 0
    %1637 = vmatpush1.bf16.msra.mxu0 0
    %1638 = vmatprep.subr.bf16.mxu0 0
    %1639 = vmatpush1.bf16.msra.mxu0 0
    %1640 = vmatprep.mubr.bf16.mxu0 0
    %1641 = vmatmul.mubr.bf16.gmra.mrb[0].mxu0 %v1606
    %v1642 = vpop.f32.mrb[0].mxu0
    %v1643 = vadd.f32 0.0, %v1642
    %v1644 = vpop.f32.mrb[0].mxu0
    %v1645 = vadd.f32 0.0, %v1644
    %v1646 = vpop.f32.mrb[0].mxu0
    %v1647 = vpop.f32.mrb[0].mxu0
    %1648 = vdwg.mxu0
    %v1649 = vld [vmem:[%s16] sm:$0xff]
    %v1650 = vadd.f32 %v1643, %v1645
    %1651 = vadd.xlane.f32.xlu0 %v1650
    %v1652 = vpop.xlane.xlu0 %1651
    %v1653 = vmul.f32 %v1652, 0.00390625
    %v1654 = vsub.f32 %v1643, %v1653
    %v1655 = vsub.f32 %v1645, %v1653
    %v1656 = vmul.f32 %v1654, %v1654
    %v1657 = vmul.f32 %v1655, %v1655
    %v1658 = vadd.f32 %v1656, %v1657
    %1659 = vadd.xlane.f32.xlu0 %v1658
    %v1660 = vpop.xlane.xlu0 %1659
    %v1661 = vmul.f32 %v1660, 0.00390625
    %v1662 = vadd.f32 %v1661, 1e-05
    %v1663 = vrsqrt.pop %v1662
    %v1664 = vmul.f32 %v1663, %v1649
    %1666 = vset.pattern.permute.xlu0 0
    %1667 = vperm.xlu0 %1666, %v1664
    %v1668 = vpop.permute.xlu0 %1667
    %v1670 = vmul.f32 %v1654, %v1668
    %v1671 = vmul.f32 %v1655, %v1668
    %1673 = vset.pattern.permute.xlu0 1
    %1674 = vperm.xlu0 %1673, %v1649
    %v1675 = vpop.permute.xlu0 %1674
    %v1677 = vadd.f32 %v1670, %v1675
    %v1678 = vadd.f32 %v1671, %v1675
    %v1679 = vadd.f32 %v1602, %v1677
    %v1680 = vadd.f32 %v1603, %v1678
    %v1681 = vmax.f32 %v1679, 0.0
    %v1682 = vmax.f32 %v1680, 0.0
    %s1683 = smul.u32 4, 1
    %s1684 = smul.u32 %s1683, 2
    %s1685 = sshll.u32 %s1684, 4
    %1686 = dma.done %s146, %s1685
    %v1687 = vld [vmem:[#allocation3] sm:$0xff]
    %v1688 = vunpack.c.l.bf16 %v1687
    %v1689 = vunpack.c.h.bf16 %v1687
    %v1690 = vadd.f32 %v1681, %v1688
    %v1691 = vadd.f32 %v1682, %v1689
    %v1692 = vpack.c.bf16 %v1690, %v1690
    %v1693 = vpack.c.bf16 %v1691, %v1691
    %v1694 = vld [vmem:[%s17] sm:$0xf]
    %vm1695 = vcmask 64512
    %v1697 = vsel %vm1695, %v1694, 0
    %vm1699 = vcmask 1043456
    %v1701 = vsel %vm1699, %v1692, 0
    %v1704 = vsel %vm1699, %v1693, 0
    %1706 = vmatprep.subr.bf16.mxu0 %v1704
    %1707 = vmatpush1.bf16.msra.mxu0 %v1701
    %1708 = vmatprep.subr.bf16.mxu0 0
    %1709 = vmatpush1.bf16.msra.mxu0 0
    %1710 = vmatprep.subr.bf16.mxu0 0
    %1711 = vmatpush1.bf16.msra.mxu0 0
    %1712 = vmatprep.subr.bf16.mxu0 0
    %1713 = vmatpush1.bf16.msra.mxu0 0
    %1714 = vmatprep.subr.bf16.mxu0 0
    %1715 = vmatpush1.bf16.msra.mxu0 0
    %1716 = vmatprep.subr.bf16.mxu0 0
    %1717 = vmatpush1.bf16.msra.mxu0 0
    %1718 = vmatprep.subr.bf16.mxu0 0
    %1719 = vmatpush1.bf16.msra.mxu0 0
    %1720 = vmatprep.subr.bf16.mxu0 0
    %1721 = vmatpush1.bf16.msra.mxu0 0
    %1722 = vmatprep.subr.bf16.mxu0 0
    %1723 = vmatpush1.bf16.msra.mxu0 0
    %1724 = vmatprep.subr.bf16.mxu0 0
    %1725 = vmatpush1.bf16.msra.mxu0 0
    %1726 = vmatprep.subr.bf16.mxu0 0
    %1727 = vmatpush1.bf16.msra.mxu0 0
    %1728 = vmatprep.subr.bf16.mxu0 0
    %1729 = vmatpush1.bf16.msra.mxu0 0
    %1730 = vmatprep.subr.bf16.mxu0 0
    %1731 = vmatpush1.bf16.msra.mxu0 0
    %1732 = vmatprep.subr.bf16.mxu0 0
    %1733 = vmatpush1.bf16.msra.mxu0 0
    %1734 = vmatprep.subr.bf16.mxu0 0
    %1735 = vmatpush1.bf16.msra.mxu0 0
    %1736 = vmatprep.subr.bf16.mxu0 0
    %1737 = vmatpush1.bf16.msra.mxu0 0
    %1738 = vmatprep.mubr.bf16.mxu0 0
    %1739 = vmatmul.mubr.bf16.gmra.mrb[0].mxu0 %v1697
    %v1740 = vpop.f32.mrb[0].mxu0
    %v1741 = vadd.f32 0.0, %v1740
    %v1742 = vpop.f32.mrb[0].mxu0
    %v1743 = vadd.f32 0.0, %v1742
    %v1744 = vpop.f32.mrb[0].mxu0
    %v1745 = vpop.f32.mrb[0].mxu0
    %1746 = vdwg.mxu0
    %1747 = vrot.lane.b32.xlu0 %v1741, 127
    %v1748 = vpop.permute.xlu0 %1747
    %1749 = vrot.lane.b32.xlu0 %v1743, 127
    %v1750 = vpop.permute.xlu0 %1749
    %v1751 = vsel %vm405, %v1748, %v1750
    %v1752 = vsel %vm405, %v1750, %v1748
    %v1753 = vmul.f32 %v1751, %v269
    %v1754 = vmul.f32 %v1752, %v270
    %s1755 = scalar_lea.vmem %s17, 4
    %v1756 = vld [vmem:[%s1755] sm:$0xf]
    %v1758 = vsel %vm1695, %v1756, 0
    %1760 = vmatprep.subr.bf16.mxu0 %v1704
    %1761 = vmatpush1.bf16.msra.mxu0 %v1701
    %1762 = vmatprep.subr.bf16.mxu0 0
    %1763 = vmatpush1.bf16.msra.mxu0 0
    %1764 = vmatprep.subr.bf16.mxu0 0
    %1765 = vmatpush1.bf16.msra.mxu0 0
    %1766 = vmatprep.subr.bf16.mxu0 0
    %1767 = vmatpush1.bf16.msra.mxu0 0
    %1768 = vmatprep.subr.bf16.mxu0 0
    %1769 = vmatpush1.bf16.msra.mxu0 0
    %1770 = vmatprep.subr.bf16.mxu0 0
    %1771 = vmatpush1.bf16.msra.mxu0 0
    %1772 = vmatprep.subr.bf16.mxu0 0
    %1773 = vmatpush1.bf16.msra.mxu0 0
    %1774 = vmatprep.subr.bf16.mxu0 0
    %1775 = vmatpush1.bf16.msra.mxu0 0
    %1776 = vmatprep.subr.bf16.mxu0 0
    %1777 = vmatpush1.bf16.msra.mxu0 0
    %1778 = vmatprep.subr.bf16.mxu0 0
    %1779 = vmatpush1.bf16.msra.mxu0 0
    %1780 = vmatprep.subr.bf16.mxu0 0
    %1781 = vmatpush1.bf16.msra.mxu0 0
    %1782 = vmatprep.subr.bf16.mxu0 0
    %1783 = vmatpush1.bf16.msra.mxu0 0
    %1784 = vmatprep.subr.bf16.mxu0 0
    %1785 = vmatpush1.bf16.msra.mxu0 0
    %1786 = vmatprep.subr.bf16.mxu0 0
    %1787 = vmatpush1.bf16.msra.mxu0 0
    %1788 = vmatprep.subr.bf16.mxu0 0
    %1789 = vmatpush1.bf16.msra.mxu0 0
    %1790 = vmatprep.subr.bf16.mxu0 0
    %1791 = vmatpush1.bf16.msra.mxu0 0
    %1792 = vmatprep.mubr.bf16.mxu0 0
    %1793 = vmatmul.mubr.bf16.gmra.mrb[0].mxu0 %v1758
    %v1794 = vpop.f32.mrb[0].mxu0
    %v1795 = vadd.f32 0.0, %v1794
    %v1796 = vpop.f32.mrb[0].mxu0
    %v1797 = vadd.f32 0.0, %v1796
    %v1798 = vpop.f32.mrb[0].mxu0
    %v1799 = vpop.f32.mrb[0].mxu0
    %1800 = vdwg.mxu0
    %v1801 = vadd.f32 %v1753, %v1795
    %v1802 = vadd.f32 %v1754, %v1797
    %s1803 = scalar_lea.vmem %s17, 8
    %v1804 = vld [vmem:[%s1803] sm:$0xf]
    %v1806 = vsel %vm1695, %v1804, 0
    %1808 = vmatprep.subr.bf16.mxu0 %v1704
    %1809 = vmatpush1.bf16.msra.mxu0 %v1701
    %1810 = vmatprep.subr.bf16.mxu0 0
    %1811 = vmatpush1.bf16.msra.mxu0 0
    %1812 = vmatprep.subr.bf16.mxu0 0
    %1813 = vmatpush1.bf16.msra.mxu0 0
    %1814 = vmatprep.subr.bf16.mxu0 0
    %1815 = vmatpush1.bf16.msra.mxu0 0
    %1816 = vmatprep.subr.bf16.mxu0 0
    %1817 = vmatpush1.bf16.msra.mxu0 0
    %1818 = vmatprep.subr.bf16.mxu0 0
    %1819 = vmatpush1.bf16.msra.mxu0 0
    %1820 = vmatprep.subr.bf16.mxu0 0
    %1821 = vmatpush1.bf16.msra.mxu0 0
    %1822 = vmatprep.subr.bf16.mxu0 0
    %1823 = vmatpush1.bf16.msra.mxu0 0
    %1824 = vmatprep.subr.bf16.mxu0 0
    %1825 = vmatpush1.bf16.msra.mxu0 0
    %1826 = vmatprep.subr.bf16.mxu0 0
    %1827 = vmatpush1.bf16.msra.mxu0 0
    %1828 = vmatprep.subr.bf16.mxu0 0
    %1829 = vmatpush1.bf16.msra.mxu0 0
    %1830 = vmatprep.subr.bf16.mxu0 0
    %1831 = vmatpush1.bf16.msra.mxu0 0
    %1832 = vmatprep.subr.bf16.mxu0 0
    %1833 = vmatpush1.bf16.msra.mxu0 0
    %1834 = vmatprep.subr.bf16.mxu0 0
    %1835 = vmatpush1.bf16.msra.mxu0 0
    %1836 = vmatprep.subr.bf16.mxu0 0
    %1837 = vmatpush1.bf16.msra.mxu0 0
    %1838 = vmatprep.subr.bf16.mxu0 0
    %1839 = vmatpush1.bf16.msra.mxu0 0
    %1840 = vmatprep.mubr.bf16.mxu0 0
    %1841 = vmatmul.mubr.bf16.gmra.mrb[0].mxu0 %v1806
    %v1842 = vpop.f32.mrb[0].mxu0
    %v1843 = vadd.f32 0.0, %v1842
    %v1844 = vpop.f32.mrb[0].mxu0
    %v1845 = vadd.f32 0.0, %v1844
    %v1846 = vpop.f32.mrb[0].mxu0
    %v1847 = vpop.f32.mrb[0].mxu0
    %1848 = vdwg.mxu0
    %1849 = vrot.lane.b32.xlu0 %v1843, 1
    %v1850 = vpop.permute.xlu0 %1849
    %1851 = vrot.lane.b32.xlu0 %v1845, 1
    %v1852 = vpop.permute.xlu0 %1851
    %v1853 = vsel %vm594, %v1850, %v1852
    %v1854 = vsel %vm594, %v1852, %v1850
    %v1855 = vmul.f32 %v1854, %v281
    %v1856 = vmul.f32 %v1853, %v282
    %v1857 = vadd.f32 %v1801, %v1855
    %v1858 = vadd.f32 %v1802, %v1856
    %v1859 = vld [vmem:[%s18] sm:$0xff]
    %v1860 = vadd.f32 %v1857, %v1858
    %1861 = vadd.xlane.f32.xlu0 %v1860
    %v1862 = vpop.xlane.xlu0 %1861
    %v1863 = vmul.f32 %v1862, 0.00390625
    %v1864 = vsub.f32 %v1857, %v1863
    %v1865 = vsub.f32 %v1858, %v1863
    %v1866 = vmul.f32 %v1864, %v1864
    %v1867 = vmul.f32 %v1865, %v1865
    %v1868 = vadd.f32 %v1866, %v1867
    %1869 = vadd.xlane.f32.xlu0 %v1868
    %v1870 = vpop.xlane.xlu0 %1869
    %v1871 = vmul.f32 %v1870, 0.00390625
    %v1872 = vadd.f32 %v1871, 1e-05
    %v1873 = vrsqrt.pop %v1872
    %v1874 = vmul.f32 %v1873, %v1859
    %1876 = vset.pattern.permute.xlu0 0
    %1877 = vperm.xlu0 %1876, %v1874
    %v1878 = vpop.permute.xlu0 %1877
    %v1880 = vmul.f32 %v1864, %v1878
    %v1881 = vmul.f32 %v1865, %v1878
    %1883 = vset.pattern.permute.xlu0 1
    %1884 = vperm.xlu0 %1883, %v1859
    %v1885 = vpop.permute.xlu0 %1884
    %v1887 = vadd.f32 %v1880, %v1885
    %v1888 = vadd.f32 %v1881, %v1885
    %v1889 = vmax.f32 %v1887, 0.0
    %v1890 = vmax.f32 %v1888, 0.0
    %v1891 = vpack.c.bf16 %v1889, %v1889
    %v1892 = vpack.c.bf16 %v1890, %v1890
    %v1893 = vld [vmem:[%s19] sm:$0xf]
    %v1895 = vsel %vm1695, %v1893, 0
    %v1898 = vsel %vm1699, %v1891, 0
    %v1901 = vsel %vm1699, %v1892, 0
    %1903 = vmatprep.subr.bf16.mxu0 %v1901
    %1904 = vmatpush1.bf16.msra.mxu0 %v1898
    %1905 = vmatprep.subr.bf16.mxu0 0
    %1906 = vmatpush1.bf16.msra.mxu0 0
    %1907 = vmatprep.subr.bf16.mxu0 0
    %1908 = vmatpush1.bf16.msra.mxu0 0
    %1909 = vmatprep.subr.bf16.mxu0 0
    %1910 = vmatpush1.bf16.msra.mxu0 0
    %1911 = vmatprep.subr.bf16.mxu0 0
    %1912 = vmatpush1.bf16.msra.mxu0 0
    %1913 = vmatprep.subr.bf16.mxu0 0
    %1914 = vmatpush1.bf16.msra.mxu0 0
    %1915 = vmatprep.subr.bf16.mxu0 0
    %1916 = vmatpush1.bf16.msra.mxu0 0
    %1917 = vmatprep.subr.bf16.mxu0 0
    %1918 = vmatpush1.bf16.msra.mxu0 0
    %1919 = vmatprep.subr.bf16.mxu0 0
    %1920 = vmatpush1.bf16.msra.mxu0 0
    %1921 = vmatprep.subr.bf16.mxu0 0
    %1922 = vmatpush1.bf16.msra.mxu0 0
    %1923 = vmatprep.subr.bf16.mxu0 0
    %1924 = vmatpush1.bf16.msra.mxu0 0
    %1925 = vmatprep.subr.bf16.mxu0 0
    %1926 = vmatpush1.bf16.msra.mxu0 0
    %1927 = vmatprep.subr.bf16.mxu0 0
    %1928 = vmatpush1.bf16.msra.mxu0 0
    %1929 = vmatprep.subr.bf16.mxu0 0
    %1930 = vmatpush1.bf16.msra.mxu0 0
    %1931 = vmatprep.subr.bf16.mxu0 0
    %1932 = vmatpush1.bf16.msra.mxu0 0
    %1933 = vmatprep.subr.bf16.mxu0 0
    %1934 = vmatpush1.bf16.msra.mxu0 0
    %1935 = vmatprep.mubr.bf16.mxu0 0
    %1936 = vmatmul.mubr.bf16.gmra.mrb[0].mxu0 %v1895
    %v1937 = vpop.f32.mrb[0].mxu0
    %v1938 = vadd.f32 0.0, %v1937
    %v1939 = vpop.f32.mrb[0].mxu0
    %v1940 = vadd.f32 0.0, %v1939
    %v1941 = vpop.f32.mrb[0].mxu0
    %v1942 = vpop.f32.mrb[0].mxu0
    %1943 = vdwg.mxu0
    %1944 = vrot.lane.b32.xlu0 %v1938, 127
    %v1945 = vpop.permute.xlu0 %1944
    %1946 = vrot.lane.b32.xlu0 %v1940, 127
    %v1947 = vpop.permute.xlu0 %1946
    %v1948 = vsel %vm405, %v1945, %v1947
    %v1949 = vsel %vm405, %v1947, %v1945
    %v1950 = vmul.f32 %v1948, %v269
    %v1951 = vmul.f32 %v1949, %v270
    %s1952 = scalar_lea.vmem %s19, 4
    %v1953 = vld [vmem:[%s1952] sm:$0xf]
    %v1955 = vsel %vm1695, %v1953, 0
    %1957 = vmatprep.subr.bf16.mxu0 %v1901
    %1958 = vmatpush1.bf16.msra.mxu0 %v1898
    %1959 = vmatprep.subr.bf16.mxu0 0
    %1960 = vmatpush1.bf16.msra.mxu0 0
    %1961 = vmatprep.subr.bf16.mxu0 0
    %1962 = vmatpush1.bf16.msra.mxu0 0
    %1963 = vmatprep.subr.bf16.mxu0 0
    %1964 = vmatpush1.bf16.msra.mxu0 0
    %1965 = vmatprep.subr.bf16.mxu0 0
    %1966 = vmatpush1.bf16.msra.mxu0 0
    %1967 = vmatprep.subr.bf16.mxu0 0
    %1968 = vmatpush1.bf16.msra.mxu0 0
    %1969 = vmatprep.subr.bf16.mxu0 0
    %1970 = vmatpush1.bf16.msra.mxu0 0
    %1971 = vmatprep.subr.bf16.mxu0 0
    %1972 = vmatpush1.bf16.msra.mxu0 0
    %1973 = vmatprep.subr.bf16.mxu0 0
    %1974 = vmatpush1.bf16.msra.mxu0 0
    %1975 = vmatprep.subr.bf16.mxu0 0
    %1976 = vmatpush1.bf16.msra.mxu0 0
    %1977 = vmatprep.subr.bf16.mxu0 0
    %1978 = vmatpush1.bf16.msra.mxu0 0
    %1979 = vmatprep.subr.bf16.mxu0 0
    %1980 = vmatpush1.bf16.msra.mxu0 0
    %1981 = vmatprep.subr.bf16.mxu0 0
    %1982 = vmatpush1.bf16.msra.mxu0 0
    %1983 = vmatprep.subr.bf16.mxu0 0
    %1984 = vmatpush1.bf16.msra.mxu0 0
    %1985 = vmatprep.subr.bf16.mxu0 0
    %1986 = vmatpush1.bf16.msra.mxu0 0
    %1987 = vmatprep.subr.bf16.mxu0 0
    %1988 = vmatpush1.bf16.msra.mxu0 0
    %1989 = vmatprep.mubr.bf16.mxu0 0
    %1990 = vmatmul.mubr.bf16.gmra.mrb[0].mxu0 %v1955
    %v1991 = vpop.f32.mrb[0].mxu0
    %v1992 = vadd.f32 0.0, %v1991
    %v1993 = vpop.f32.mrb[0].mxu0
    %v1994 = vadd.f32 0.0, %v1993
    %v1995 = vpop.f32.mrb[0].mxu0
    %v1996 = vpop.f32.mrb[0].mxu0
    %1997 = vdwg.mxu0
    %v1998 = vadd.f32 %v1950, %v1992
    %v1999 = vadd.f32 %v1951, %v1994
    %s2000 = scalar_lea.vmem %s19, 8
    %v2001 = vld [vmem:[%s2000] sm:$0xf]
    %v2003 = vsel %vm1695, %v2001, 0
    %2005 = vmatprep.subr.bf16.mxu0 %v1901
    %2006 = vmatpush1.bf16.msra.mxu0 %v1898
    %2007 = vmatprep.subr.bf16.mxu0 0
    %2008 = vmatpush1.bf16.msra.mxu0 0
    %2009 = vmatprep.subr.bf16.mxu0 0
    %2010 = vmatpush1.bf16.msra.mxu0 0
    %2011 = vmatprep.subr.bf16.mxu0 0
    %2012 = vmatpush1.bf16.msra.mxu0 0
    %2013 = vmatprep.subr.bf16.mxu0 0
    %2014 = vmatpush1.bf16.msra.mxu0 0
    %2015 = vmatprep.subr.bf16.mxu0 0
    %2016 = vmatpush1.bf16.msra.mxu0 0
    %2017 = vmatprep.subr.bf16.mxu0 0
    %2018 = vmatpush1.bf16.msra.mxu0 0
    %2019 = vmatprep.subr.bf16.mxu0 0
    %2020 = vmatpush1.bf16.msra.mxu0 0
    %2021 = vmatprep.subr.bf16.mxu0 0
    %2022 = vmatpush1.bf16.msra.mxu0 0
    %2023 = vmatprep.subr.bf16.mxu0 0
    %2024 = vmatpush1.bf16.msra.mxu0 0
    %2025 = vmatprep.subr.bf16.mxu0 0
    %2026 = vmatpush1.bf16.msra.mxu0 0
    %2027 = vmatprep.subr.bf16.mxu0 0
    %2028 = vmatpush1.bf16.msra.mxu0 0
    %2029 = vmatprep.subr.bf16.mxu0 0
    %2030 = vmatpush1.bf16.msra.mxu0 0
    %2031 = vmatprep.subr.bf16.mxu0 0
    %2032 = vmatpush1.bf16.msra.mxu0 0
    %2033 = vmatprep.subr.bf16.mxu0 0
    %2034 = vmatpush1.bf16.msra.mxu0 0
    %2035 = vmatprep.subr.bf16.mxu0 0
    %2036 = vmatpush1.bf16.msra.mxu0 0
    %2037 = vmatprep.mubr.bf16.mxu0 0
    %2038 = vmatmul.mubr.bf16.gmra.mrb[0].mxu0 %v2003
    %v2039 = vpop.f32.mrb[0].mxu0
    %v2040 = vadd.f32 0.0, %v2039
    %v2041 = vpop.f32.mrb[0].mxu0
    %v2042 = vadd.f32 0.0, %v2041
    %v2043 = vpop.f32.mrb[0].mxu0
    %v2044 = vpop.f32.mrb[0].mxu0
    %2045 = vdwg.mxu0
    %2046 = vrot.lane.b32.xlu0 %v2040, 1
    %v2047 = vpop.permute.xlu0 %2046
    %2048 = vrot.lane.b32.xlu0 %v2042, 1
    %v2049 = vpop.permute.xlu0 %2048
    %v2050 = vsel %vm594, %v2047, %v2049
    %v2051 = vsel %vm594, %v2049, %v2047
    %v2052 = vmul.f32 %v2051, %v281
    %v2053 = vmul.f32 %v2050, %v282
    %v2054 = vadd.f32 %v1998, %v2052
    %v2055 = vadd.f32 %v1999, %v2053
    %v2056 = vld [vmem:[%s20] sm:$0xff]
    %v2057 = vadd.f32 %v2054, %v2055
    %2058 = vadd.xlane.f32.xlu0 %v2057
    %v2059 = vpop.xlane.xlu0 %2058
    %v2060 = vmul.f32 %v2059, 0.00390625
    %v2061 = vsub.f32 %v2054, %v2060
    %v2062 = vsub.f32 %v2055, %v2060
    %v2063 = vmul.f32 %v2061, %v2061
    %v2064 = vmul.f32 %v2062, %v2062
    %v2065 = vadd.f32 %v2063, %v2064
    %2066 = vadd.xlane.f32.xlu0 %v2065
    %v2067 = vpop.xlane.xlu0 %2066
    %v2068 = vmul.f32 %v2067, 0.00390625
    %v2069 = vadd.f32 %v2068, 1e-05
    %v2070 = vrsqrt.pop %v2069
    %v2071 = vmul.f32 %v2070, %v2056
    %2073 = vset.pattern.permute.xlu0 0
    %2074 = vperm.xlu0 %2073, %v2071
    %v2075 = vpop.permute.xlu0 %2074
    %v2077 = vmul.f32 %v2061, %v2075
    %v2078 = vmul.f32 %v2062, %v2075
    %2080 = vset.pattern.permute.xlu0 1
    %2081 = vperm.xlu0 %2080, %v2056
    %v2082 = vpop.permute.xlu0 %2081
    %v2084 = vadd.f32 %v2077, %v2082
    %v2085 = vadd.f32 %v2078, %v2082
    %v2086 = vadd.f32 %v2084, %v1690
    %v2087 = vadd.f32 %v2085, %v1691
    %v2088 = vmax.f32 %v2086, 0.0
    %v2089 = vmax.f32 %v2087, 0.0
    %s2090 = sshll.u32 %s1684, 4
    %2091 = dma.done %s189, %s2090
    %v2092 = vld [vmem:[#allocation4] sm:$0xff]
    %v2093 = vunpack.c.l.bf16 %v2092
    %v2094 = vunpack.c.h.bf16 %v2092
    %v2095 = vadd.f32 %v2088, %v2093
    %v2096 = vadd.f32 %v2089, %v2094
    %v2097 = vpack.c.bf16 %v2095, %v2095
    %v2098 = vpack.c.bf16 %v2096, %v2096
    %v2099 = vld [vmem:[%s21] sm:$0xf]
    %v2101 = vsel %vm1695, %v2099, 0
    %v2104 = vsel %vm1699, %v2097, 0
    %v2107 = vsel %vm1699, %v2098, 0
    %2109 = vmatprep.subr.bf16.mxu0 %v2107
    %2110 = vmatpush1.bf16.msra.mxu0 %v2104
    %2111 = vmatprep.subr.bf16.mxu0 0
    %2112 = vmatpush1.bf16.msra.mxu0 0
    %2113 = vmatprep.subr.bf16.mxu0 0
    %2114 = vmatpush1.bf16.msra.mxu0 0
    %2115 = vmatprep.subr.bf16.mxu0 0
    %2116 = vmatpush1.bf16.msra.mxu0 0
    %2117 = vmatprep.subr.bf16.mxu0 0
    %2118 = vmatpush1.bf16.msra.mxu0 0
    %2119 = vmatprep.subr.bf16.mxu0 0
    %2120 = vmatpush1.bf16.msra.mxu0 0
    %2121 = vmatprep.subr.bf16.mxu0 0
    %2122 = vmatpush1.bf16.msra.mxu0 0
    %2123 = vmatprep.subr.bf16.mxu0 0
    %2124 = vmatpush1.bf16.msra.mxu0 0
    %2125 = vmatprep.subr.bf16.mxu0 0
    %2126 = vmatpush1.bf16.msra.mxu0 0
    %2127 = vmatprep.subr.bf16.mxu0 0
    %2128 = vmatpush1.bf16.msra.mxu0 0
    %2129 = vmatprep.subr.bf16.mxu0 0
    %2130 = vmatpush1.bf16.msra.mxu0 0
    %2131 = vmatprep.subr.bf16.mxu0 0
    %2132 = vmatpush1.bf16.msra.mxu0 0
    %2133 = vmatprep.subr.bf16.mxu0 0
    %2134 = vmatpush1.bf16.msra.mxu0 0
    %2135 = vmatprep.subr.bf16.mxu0 0
    %2136 = vmatpush1.bf16.msra.mxu0 0
    %2137 = vmatprep.subr.bf16.mxu0 0
    %2138 = vmatpush1.bf16.msra.mxu0 0
    %2139 = vmatprep.subr.bf16.mxu0 0
    %2140 = vmatpush1.bf16.msra.mxu0 0
    %2141 = vmatprep.mubr.bf16.mxu0 0
    %2142 = vmatmul.mubr.bf16.gmra.mrb[0].mxu0 %v2101
    %v2143 = vpop.f32.mrb[0].mxu0
    %v2144 = vadd.f32 0.0, %v2143
    %v2145 = vpop.f32.mrb[0].mxu0
    %v2146 = vadd.f32 0.0, %v2145
    %v2147 = vpop.f32.mrb[0].mxu0
    %v2148 = vpop.f32.mrb[0].mxu0
    %2149 = vdwg.mxu0
    %2150 = vrot.lane.b32.xlu0 %v2144, 127
    %v2151 = vpop.permute.xlu0 %2150
    %2152 = vrot.lane.b32.xlu0 %v2146, 127
    %v2153 = vpop.permute.xlu0 %2152
    %v2154 = vsel %vm405, %v2151, %v2153
    %v2155 = vsel %vm405, %v2153, %v2151
    %v2156 = vmul.f32 %v2154, %v269
    %v2157 = vmul.f32 %v2155, %v270
    %s2158 = scalar_lea.vmem %s21, 4
    %v2159 = vld [vmem:[%s2158] sm:$0xf]
    %v2161 = vsel %vm1695, %v2159, 0
    %2163 = vmatprep.subr.bf16.mxu0 %v2107
    %2164 = vmatpush1.bf16.msra.mxu0 %v2104
    %2165 = vmatprep.subr.bf16.mxu0 0
    %2166 = vmatpush1.bf16.msra.mxu0 0
    %2167 = vmatprep.subr.bf16.mxu0 0
    %2168 = vmatpush1.bf16.msra.mxu0 0
    %2169 = vmatprep.subr.bf16.mxu0 0
    %2170 = vmatpush1.bf16.msra.mxu0 0
    %2171 = vmatprep.subr.bf16.mxu0 0
    %2172 = vmatpush1.bf16.msra.mxu0 0
    %2173 = vmatprep.subr.bf16.mxu0 0
    %2174 = vmatpush1.bf16.msra.mxu0 0
    %2175 = vmatprep.subr.bf16.mxu0 0
    %2176 = vmatpush1.bf16.msra.mxu0 0
    %2177 = vmatprep.subr.bf16.mxu0 0
    %2178 = vmatpush1.bf16.msra.mxu0 0
    %2179 = vmatprep.subr.bf16.mxu0 0
    %2180 = vmatpush1.bf16.msra.mxu0 0
    %2181 = vmatprep.subr.bf16.mxu0 0
    %2182 = vmatpush1.bf16.msra.mxu0 0
    %2183 = vmatprep.subr.bf16.mxu0 0
    %2184 = vmatpush1.bf16.msra.mxu0 0
    %2185 = vmatprep.subr.bf16.mxu0 0
    %2186 = vmatpush1.bf16.msra.mxu0 0
    %2187 = vmatprep.subr.bf16.mxu0 0
    %2188 = vmatpush1.bf16.msra.mxu0 0
    %2189 = vmatprep.subr.bf16.mxu0 0
    %2190 = vmatpush1.bf16.msra.mxu0 0
    %2191 = vmatprep.subr.bf16.mxu0 0
    %2192 = vmatpush1.bf16.msra.mxu0 0
    %2193 = vmatprep.subr.bf16.mxu0 0
    %2194 = vmatpush1.bf16.msra.mxu0 0
    %2195 = vmatprep.mubr.bf16.mxu0 0
    %2196 = vmatmul.mubr.bf16.gmra.mrb[0].mxu0 %v2161
    %v2197 = vpop.f32.mrb[0].mxu0
    %v2198 = vadd.f32 0.0, %v2197
    %v2199 = vpop.f32.mrb[0].mxu0
    %v2200 = vadd.f32 0.0, %v2199
    %v2201 = vpop.f32.mrb[0].mxu0
    %v2202 = vpop.f32.mrb[0].mxu0
    %2203 = vdwg.mxu0
    %v2204 = vadd.f32 %v2156, %v2198
    %v2205 = vadd.f32 %v2157, %v2200
    %s2206 = scalar_lea.vmem %s21, 8
    %v2207 = vld [vmem:[%s2206] sm:$0xf]
    %v2209 = vsel %vm1695, %v2207, 0
    %2211 = vmatprep.subr.bf16.mxu0 %v2107
    %2212 = vmatpush1.bf16.msra.mxu0 %v2104
    %2213 = vmatprep.subr.bf16.mxu0 0
    %2214 = vmatpush1.bf16.msra.mxu0 0
    %2215 = vmatprep.subr.bf16.mxu0 0
    %2216 = vmatpush1.bf16.msra.mxu0 0
    %2217 = vmatprep.subr.bf16.mxu0 0
    %2218 = vmatpush1.bf16.msra.mxu0 0
    %2219 = vmatprep.subr.bf16.mxu0 0
    %2220 = vmatpush1.bf16.msra.mxu0 0
    %2221 = vmatprep.subr.bf16.mxu0 0
    %2222 = vmatpush1.bf16.msra.mxu0 0
    %2223 = vmatprep.subr.bf16.mxu0 0
    %2224 = vmatpush1.bf16.msra.mxu0 0
    %2225 = vmatprep.subr.bf16.mxu0 0
    %2226 = vmatpush1.bf16.msra.mxu0 0
    %2227 = vmatprep.subr.bf16.mxu0 0
    %2228 = vmatpush1.bf16.msra.mxu0 0
    %2229 = vmatprep.subr.bf16.mxu0 0
    %2230 = vmatpush1.bf16.msra.mxu0 0
    %2231 = vmatprep.subr.bf16.mxu0 0
    %2232 = vmatpush1.bf16.msra.mxu0 0
    %2233 = vmatprep.subr.bf16.mxu0 0
    %2234 = vmatpush1.bf16.msra.mxu0 0
    %2235 = vmatprep.subr.bf16.mxu0 0
    %2236 = vmatpush1.bf16.msra.mxu0 0
    %2237 = vmatprep.subr.bf16.mxu0 0
    %2238 = vmatpush1.bf16.msra.mxu0 0
    %2239 = vmatprep.subr.bf16.mxu0 0
    %2240 = vmatpush1.bf16.msra.mxu0 0
    %2241 = vmatprep.subr.bf16.mxu0 0
    %2242 = vmatpush1.bf16.msra.mxu0 0
    %2243 = vmatprep.mubr.bf16.mxu0 0
    %2244 = vmatmul.mubr.bf16.gmra.mrb[0].mxu0 %v2209
    %v2245 = vpop.f32.mrb[0].mxu0
    %v2246 = vadd.f32 0.0, %v2245
    %v2247 = vpop.f32.mrb[0].mxu0
    %v2248 = vadd.f32 0.0, %v2247
    %v2249 = vpop.f32.mrb[0].mxu0
    %v2250 = vpop.f32.mrb[0].mxu0
    %2251 = vdwg.mxu0
    %2252 = vrot.lane.b32.xlu0 %v2246, 1
    %v2253 = vpop.permute.xlu0 %2252
    %2254 = vrot.lane.b32.xlu0 %v2248, 1
    %v2255 = vpop.permute.xlu0 %2254
    %v2256 = vsel %vm594, %v2253, %v2255
    %v2257 = vsel %vm594, %v2255, %v2253
    %v2258 = vmul.f32 %v2257, %v281
    %v2259 = vmul.f32 %v2256, %v282
    %v2260 = vadd.f32 %v2204, %v2258
    %v2261 = vadd.f32 %v2205, %v2259
    %v2262 = vld [vmem:[%s22] sm:$0xff]
    %v2263 = vadd.f32 %v2260, %v2261
    %2264 = vadd.xlane.f32.xlu0 %v2263
    %v2265 = vpop.xlane.xlu0 %2264
    %v2266 = vmul.f32 %v2265, 0.00390625
    %v2267 = vsub.f32 %v2260, %v2266
    %v2268 = vsub.f32 %v2261, %v2266
    %v2269 = vmul.f32 %v2267, %v2267
    %v2270 = vmul.f32 %v2268, %v2268
    %v2271 = vadd.f32 %v2269, %v2270
    %2272 = vadd.xlane.f32.xlu0 %v2271
    %v2273 = vpop.xlane.xlu0 %2272
    %v2274 = vmul.f32 %v2273, 0.00390625
    %v2275 = vadd.f32 %v2274, 1e-05
    %v2276 = vrsqrt.pop %v2275
    %v2277 = vmul.f32 %v2276, %v2262
    %2279 = vset.pattern.permute.xlu0 0
    %2280 = vperm.xlu0 %2279, %v2277
    %v2281 = vpop.permute.xlu0 %2280
    %v2283 = vmul.f32 %v2267, %v2281
    %v2284 = vmul.f32 %v2268, %v2281
    %2286 = vset.pattern.permute.xlu0 1
    %2287 = vperm.xlu0 %2286, %v2262
    %v2288 = vpop.permute.xlu0 %2287
    %v2290 = vadd.f32 %v2283, %v2288
    %v2291 = vadd.f32 %v2284, %v2288
    %v2292 = vmax.f32 %v2290, 0.0
    %v2293 = vmax.f32 %v2291, 0.0
    %v2294 = vpack.c.bf16 %v2292, %v2292
    %v2295 = vpack.c.bf16 %v2293, %v2293
    %v2296 = vld [vmem:[%s23] sm:$0x3]
    %v2298 = vsel %vm1695, %v2296, 0
    %v2301 = vsel %vm1699, %v2294, 0
    %v2304 = vsel %vm1699, %v2295, 0
    %2306 = vmatprep.subr.bf16.mxu0 %v2304
    %2307 = vmatpush1.bf16.msra.mxu0 %v2301
    %2308 = vmatprep.subr.bf16.mxu0 0
    %2309 = vmatpush1.bf16.msra.mxu0 0
    %2310 = vmatprep.subr.bf16.mxu0 0
    %2311 = vmatpush1.bf16.msra.mxu0 0
    %2312 = vmatprep.subr.bf16.mxu0 0
    %2313 = vmatpush1.bf16.msra.mxu0 0
    %2314 = vmatprep.subr.bf16.mxu0 0
    %2315 = vmatpush1.bf16.msra.mxu0 0
    %2316 = vmatprep.subr.bf16.mxu0 0
    %2317 = vmatpush1.bf16.msra.mxu0 0
    %2318 = vmatprep.subr.bf16.mxu0 0
    %2319 = vmatpush1.bf16.msra.mxu0 0
    %2320 = vmatprep.subr.bf16.mxu0 0
    %2321 = vmatpush1.bf16.msra.mxu0 0
    %2322 = vmatprep.subr.bf16.mxu0 0
    %2323 = vmatpush1.bf16.msra.mxu0 0
    %2324 = vmatprep.subr.bf16.mxu0 0
    %2325 = vmatpush1.bf16.msra.mxu0 0
    %2326 = vmatprep.subr.bf16.mxu0 0
    %2327 = vmatpush1.bf16.msra.mxu0 0
    %2328 = vmatprep.subr.bf16.mxu0 0
    %2329 = vmatpush1.bf16.msra.mxu0 0
    %2330 = vmatprep.subr.bf16.mxu0 0
    %2331 = vmatpush1.bf16.msra.mxu0 0
    %2332 = vmatprep.subr.bf16.mxu0 0
    %2333 = vmatpush1.bf16.msra.mxu0 0
    %2334 = vmatprep.subr.bf16.mxu0 0
    %2335 = vmatpush1.bf16.msra.mxu0 0
    %2336 = vmatprep.subr.bf16.mxu0 0
    %2337 = vmatpush1.bf16.msra.mxu0 0
    %2338 = vmatprep.mubr.bf16.mxu0 0
    %2339 = vmatmul.mubr.bf16.gmra.mrb[0].mxu0 %v2298
    %v2340 = vpop.f32.mrb[0].mxu0
    %v2341 = vadd.f32 0.0, %v2340
    %v2342 = vpop.f32.mrb[0].mxu0
    %v2343 = vadd.f32 0.0, %v2342
    %v2344 = vpop.f32.mrb[0].mxu0
    %v2345 = vpop.f32.mrb[0].mxu0
    %2346 = vdwg.mxu0
    %2347 = vrot.lane.b32.xlu0 %v2341, 127
    %v2348 = vpop.permute.xlu0 %2347
    %2349 = vrot.lane.b32.xlu0 %v2343, 127
    %v2350 = vpop.permute.xlu0 %2349
    %v2351 = vsel %vm405, %v2348, %v2350
    %v2352 = vsel %vm405, %v2350, %v2348
    %v2353 = vmul.f32 %v2351, %v269
    %v2354 = vmul.f32 %v2352, %v270
    %s2355 = scalar_lea.vmem %s23, 2
    %v2356 = vld [vmem:[%s2355] sm:$0x3]
    %v2358 = vsel %vm1695, %v2356, 0
    %2360 = vmatprep.subr.bf16.mxu0 %v2304
    %2361 = vmatpush1.bf16.msra.mxu0 %v2301
    %2362 = vmatprep.subr.bf16.mxu0 0
    %2363 = vmatpush1.bf16.msra.mxu0 0
    %2364 = vmatprep.subr.bf16.mxu0 0
    %2365 = vmatpush1.bf16.msra.mxu0 0
    %2366 = vmatprep.subr.bf16.mxu0 0
    %2367 = vmatpush1.bf16.msra.mxu0 0
    %2368 = vmatprep.subr.bf16.mxu0 0
    %2369 = vmatpush1.bf16.msra.mxu0 0
    %2370 = vmatprep.subr.bf16.mxu0 0
    %2371 = vmatpush1.bf16.msra.mxu0 0
    %2372 = vmatprep.subr.bf16.mxu0 0
    %2373 = vmatpush1.bf16.msra.mxu0 0
    %2374 = vmatprep.subr.bf16.mxu0 0
    %2375 = vmatpush1.bf16.msra.mxu0 0
    %2376 = vmatprep.subr.bf16.mxu0 0
    %2377 = vmatpush1.bf16.msra.mxu0 0
    %2378 = vmatprep.subr.bf16.mxu0 0
    %2379 = vmatpush1.bf16.msra.mxu0 0
    %2380 = vmatprep.subr.bf16.mxu0 0
    %2381 = vmatpush1.bf16.msra.mxu0 0
    %2382 = vmatprep.subr.bf16.mxu0 0
    %2383 = vmatpush1.bf16.msra.mxu0 0
    %2384 = vmatprep.subr.bf16.mxu0 0
    %2385 = vmatpush1.bf16.msra.mxu0 0
    %2386 = vmatprep.subr.bf16.mxu0 0
    %2387 = vmatpush1.bf16.msra.mxu0 0
    %2388 = vmatprep.subr.bf16.mxu0 0
    %2389 = vmatpush1.bf16.msra.mxu0 0
    %2390 = vmatprep.subr.bf16.mxu0 0
    %2391 = vmatpush1.bf16.msra.mxu0 0
    %2392 = vmatprep.mubr.bf16.mxu0 0
    %2393 = vmatmul.mubr.bf16.gmra.mrb[0].mxu0 %v2358
    %v2394 = vpop.f32.mrb[0].mxu0
    %v2395 = vadd.f32 0.0, %v2394
    %v2396 = vpop.f32.mrb[0].mxu0
    %v2397 = vadd.f32 0.0, %v2396
    %v2398 = vpop.f32.mrb[0].mxu0
    %v2399 = vpop.f32.mrb[0].mxu0
    %2400 = vdwg.mxu0
    %v2401 = vadd.f32 %v2353, %v2395
    %v2402 = vadd.f32 %v2354, %v2397
    %s2403 = scalar_lea.vmem %s23, 4
    %v2404 = vld [vmem:[%s2403] sm:$0x3]
    %v2406 = vsel %vm1695, %v2404, 0
    %2408 = vmatprep.subr.bf16.mxu0 %v2304
    %2409 = vmatpush1.bf16.msra.mxu0 %v2301
    %2410 = vmatprep.subr.bf16.mxu0 0
    %2411 = vmatpush1.bf16.msra.mxu0 0
    %2412 = vmatprep.subr.bf16.mxu0 0
    %2413 = vmatpush1.bf16.msra.mxu0 0
    %2414 = vmatprep.subr.bf16.mxu0 0
    %2415 = vmatpush1.bf16.msra.mxu0 0
    %2416 = vmatprep.subr.bf16.mxu0 0
    %2417 = vmatpush1.bf16.msra.mxu0 0
    %2418 = vmatprep.subr.bf16.mxu0 0
    %2419 = vmatpush1.bf16.msra.mxu0 0
    %2420 = vmatprep.subr.bf16.mxu0 0
    %2421 = vmatpush1.bf16.msra.mxu0 0
    %2422 = vmatprep.subr.bf16.mxu0 0
    %2423 = vmatpush1.bf16.msra.mxu0 0
    %2424 = vmatprep.subr.bf16.mxu0 0
    %2425 = vmatpush1.bf16.msra.mxu0 0
    %2426 = vmatprep.subr.bf16.mxu0 0
    %2427 = vmatpush1.bf16.msra.mxu0 0
    %2428 = vmatprep.subr.bf16.mxu0 0
    %2429 = vmatpush1.bf16.msra.mxu0 0
    %2430 = vmatprep.subr.bf16.mxu0 0
    %2431 = vmatpush1.bf16.msra.mxu0 0
    %2432 = vmatprep.subr.bf16.mxu0 0
    %2433 = vmatpush1.bf16.msra.mxu0 0
    %2434 = vmatprep.subr.bf16.mxu0 0
    %2435 = vmatpush1.bf16.msra.mxu0 0
    %2436 = vmatprep.subr.bf16.mxu0 0
    %2437 = vmatpush1.bf16.msra.mxu0 0
    %2438 = vmatprep.subr.bf16.mxu0 0
    %2439 = vmatpush1.bf16.msra.mxu0 0
    %2440 = vmatprep.mubr.bf16.mxu0 0
    %2441 = vmatmul.mubr.bf16.gmra.mrb[0].mxu0 %v2406
    %v2442 = vpop.f32.mrb[0].mxu0
    %v2443 = vadd.f32 0.0, %v2442
    %v2444 = vpop.f32.mrb[0].mxu0
    %v2445 = vadd.f32 0.0, %v2444
    %v2446 = vpop.f32.mrb[0].mxu0
    %v2447 = vpop.f32.mrb[0].mxu0
    %2448 = vdwg.mxu0
    %2449 = vrot.lane.b32.xlu0 %v2443, 1
    %v2450 = vpop.permute.xlu0 %2449
    %2451 = vrot.lane.b32.xlu0 %v2445, 1
    %v2452 = vpop.permute.xlu0 %2451
    %v2453 = vsel %vm594, %v2450, %v2452
    %v2454 = vsel %vm594, %v2452, %v2450
    %v2455 = vmul.f32 %v2454, %v281
    %v2456 = vmul.f32 %v2453, %v282
    %v2457 = vadd.f32 %v2401, %v2455
    %v2458 = vadd.f32 %v2402, %v2456
    %v2459 = vld [vmem:[%s24] sm:$0xf]
    %v2460 = vsel %vm1699, %v2457, 0.0
    %v2461 = vsel %vm1699, %v2458, 0.0
    %v2462 = vadd.f32 %v2460, %v2461
    %2463 = vadd.xlane.f32.xlu0 %v2462
    %v2464 = vpop.xlane.xlu0 %2463
    %v2465 = vmul.f32 %v2464, 0.00390625
    %v2466 = vsub.f32 %v2457, %v2465
    %v2467 = vsub.f32 %v2458, %v2465
    %v2468 = vmul.f32 %v2466, %v2466
    %v2469 = vmul.f32 %v2467, %v2467
    %v2470 = vsel %vm1699, %v2468, 0.0
    %v2471 = vsel %vm1699, %v2469, 0.0
    %v2472 = vadd.f32 %v2470, %v2471
    %2473 = vadd.xlane.f32.xlu0 %v2472
    %v2474 = vpop.xlane.xlu0 %2473
    %v2475 = vmul.f32 %v2474, 0.00390625
    %v2476 = vadd.f32 %v2475, 1e-05
    %v2477 = vrsqrt.pop %v2476
    %v2478 = vmul.f32 %v2477, %v2459
    %2480 = vset.pattern.permute.xlu0 0
    %2481 = vperm.xlu0 %2480, %v2478
    %v2482 = vpop.permute.xlu0 %2481
    %v2484 = vmul.f32 %v2466, %v2482
    %v2485 = vmul.f32 %v2467, %v2482
    %2487 = vset.pattern.permute.xlu0 1
    %2488 = vperm.xlu0 %2487, %v2459
    %v2489 = vpop.permute.xlu0 %2488
    %v2491 = vadd.f32 %v2484, %v2489
    %v2492 = vadd.f32 %v2485, %v2489
    %v2493 = vld [vmem:[%s25] sm:$0x3]
    %v2495 = vsel %vm1695, %v2493, 0
    %2497 = vmatprep.subr.bf16.mxu0 %v2107
    %2498 = vmatpush1.bf16.msra.mxu0 %v2104
    %2499 = vmatprep.subr.bf16.mxu0 0
    %2500 = vmatpush1.bf16.msra.mxu0 0
    %2501 = vmatprep.subr.bf16.mxu0 0
    %2502 = vmatpush1.bf16.msra.mxu0 0
    %2503 = vmatprep.subr.bf16.mxu0 0
    %2504 = vmatpush1.bf16.msra.mxu0 0
    %2505 = vmatprep.subr.bf16.mxu0 0
    %2506 = vmatpush1.bf16.msra.mxu0 0
    %2507 = vmatprep.subr.bf16.mxu0 0
    %2508 = vmatpush1.bf16.msra.mxu0 0
    %2509 = vmatprep.subr.bf16.mxu0 0
    %2510 = vmatpush1.bf16.msra.mxu0 0
    %2511 = vmatprep.subr.bf16.mxu0 0
    %2512 = vmatpush1.bf16.msra.mxu0 0
    %2513 = vmatprep.subr.bf16.mxu0 0
    %2514 = vmatpush1.bf16.msra.mxu0 0
    %2515 = vmatprep.subr.bf16.mxu0 0
    %2516 = vmatpush1.bf16.msra.mxu0 0
    %2517 = vmatprep.subr.bf16.mxu0 0
    %2518 = vmatpush1.bf16.msra.mxu0 0
    %2519 = vmatprep.subr.bf16.mxu0 0
    %2520 = vmatpush1.bf16.msra.mxu0 0
    %2521 = vmatprep.subr.bf16.mxu0 0
    %2522 = vmatpush1.bf16.msra.mxu0 0
    %2523 = vmatprep.subr.bf16.mxu0 0
    %2524 = vmatpush1.bf16.msra.mxu0 0
    %2525 = vmatprep.subr.bf16.mxu0 0
    %2526 = vmatpush1.bf16.msra.mxu0 0
    %2527 = vmatprep.subr.bf16.mxu0 0
    %2528 = vmatpush1.bf16.msra.mxu0 0
    %2529 = vmatprep.mubr.bf16.mxu0 0
    %2530 = vmatmul.mubr.bf16.gmra.mrb[0].mxu0 %v2495
    %v2531 = vpop.f32.mrb[0].mxu0
    %v2532 = vadd.f32 0.0, %v2531
    %v2533 = vpop.f32.mrb[0].mxu0
    %v2534 = vadd.f32 0.0, %v2533
    %v2535 = vpop.f32.mrb[0].mxu0
    %v2536 = vpop.f32.mrb[0].mxu0
    %2537 = vdwg.mxu0
    %v2538 = vld [vmem:[%s26] sm:$0xf]
    %v2539 = vsel %vm1699, %v2532, 0.0
    %v2540 = vsel %vm1699, %v2534, 0.0
    %v2541 = vadd.f32 %v2539, %v2540
    %2542 = vadd.xlane.f32.xlu0 %v2541
    %v2543 = vpop.xlane.xlu0 %2542
    %v2544 = vmul.f32 %v2543, 0.00390625
    %v2545 = vsub.f32 %v2532, %v2544
    %v2546 = vsub.f32 %v2534, %v2544
    %v2547 = vmul.f32 %v2545, %v2545
    %v2548 = vmul.f32 %v2546, %v2546
    %v2549 = vsel %vm1699, %v2547, 0.0
    %v2550 = vsel %vm1699, %v2548, 0.0
    %v2551 = vadd.f32 %v2549, %v2550
    %2552 = vadd.xlane.f32.xlu0 %v2551
    %v2553 = vpop.xlane.xlu0 %2552
    %v2554 = vmul.f32 %v2553, 0.00390625
    %v2555 = vadd.f32 %v2554, 1e-05
    %v2556 = vrsqrt.pop %v2555
    %v2557 = vmul.f32 %v2556, %v2538
    %2559 = vset.pattern.permute.xlu0 0
    %2560 = vperm.xlu0 %2559, %v2557
    %v2561 = vpop.permute.xlu0 %2560
    %v2563 = vmul.f32 %v2545, %v2561
    %v2564 = vmul.f32 %v2546, %v2561
    %2566 = vset.pattern.permute.xlu0 1
    %2567 = vperm.xlu0 %2566, %v2538
    %v2568 = vpop.permute.xlu0 %2567
    %v2570 = vadd.f32 %v2563, %v2568
    %v2571 = vadd.f32 %v2564, %v2568
    %v2572 = vadd.f32 %v2491, %v2570
    %v2573 = vadd.f32 %v2492, %v2571
    %v2574 = vmax.f32 %v2572, 0.0
    %v2575 = vmax.f32 %v2573, 0.0
    %v2578 = vcombine.low %v2574, %v2575
    %2580 = vst [vmem:[#allocation6] sm:$0xff] %v2578
    // Predicated region
    $region203: #{_lambda_.1} parent=1 // pred_check
      _
    $region204: #{_lambda_.1} parent=1 // pred_check_branch
      %2582 = sbr.rel (0) target = $region206
    $region205: #{_lambda_.1} parent=1 // pred_region
      %s2584 = ssub.s32 128, 128
      %2585 = vsyncadd [#allocation7], %s2584
      %s2587 = sshll.u32 [#allocation6], 4
      %s2588 = int_to_ptr.vmem [resolvable:$true] %s2587
      %2590 = dma.vmem_to_hbm [thread:$0]  %s2588, 128, %s27, [#allocation7]
    $region206: #{_lambda_.1} parent=1 // pred_fallthru
      _
    // Predicated region
    $region207: #{_lambda_.1} parent=1 // pred_check
      _
    $region208: #{_lambda_.1} parent=1 // pred_check_branch
      %2592 = sbr.rel (0) target = $region210
    $region209: #{_lambda_.1} parent=1 // pred_region
      %2593 = dma.done [#allocation7], 128
    $region210: #{_lambda_.1} parent=1 // pred_fallthru
      _
    %2594 = vsyncpa [#allocation7], 1
  %2595 = vsyncmov [#allocation5]
  %s2596 = vpop.sfrf %2595
  %p2597 = scmp.eq.s32.totalorder %s2596, 0
  %p2598 = pneg %p2597
  %2600 = shalt.err (%p2598)
  %s2601 = scalar_lea.sflag [#allocation5], 1
  %2602 = vsyncmov %s2601
  %s2603 = vpop.sfrf %2602
  %p2604 = scmp.eq.s32.totalorder %s2603, 0
  %p2605 = pneg %p2604
  %2607 = shalt.err (%p2605)
  %s2608 = scalar_lea.sflag [#allocation5], 2
  %2609 = vsyncmov %s2608
  %s2610 = vpop.sfrf %2609
  %p2611 = scmp.eq.s32.totalorder %s2610, 0
  %p2612 = pneg %p2611
  %2614 = shalt.err (%p2612)

</llo_original>
